<compile_context>
chip_gen: v6e
topology: v6e:2x2x1
jax: 0.10.0
libtpu: 0.0.40
codegen_flags: <defaults>
</compile_context>

<pallas_src>
import functools

import jax
import jax.numpy as jnp
from jax.experimental import pallas as pl
from jax.experimental.pallas import tpu as pltpu


NEG_SLOPE = 0.1
VMEM_LIMIT = 64 * 1024 * 1024


def _lrelu(v, ns):
    return jnp.where(v >= 0, v, v * ns)


# ---------------------------------------------------------------------------
# Kernel 1: fused ConvTranspose2d(4, s=2, p=1) [polyphase] + GroupNorm + LeakyReLU
#   grid = (N,); one sample per grid step.
#   x_ref : (1, H+2, W+2, Cin)  zero-padded input (f32)
#   w_ref : (4, 4*Cin, Cout)    per-phase polyphase weights (bf16)
#   output: (1, 4, H*W, Cout)   phase-major, bf16 (interleaved to 2Hx2W in glue)
# ---------------------------------------------------------------------------
def _convt_gn_lrelu_kernel(x_ref, w_ref, bt_ref, g_ref, b_ref, o_ref, *,
                           H, W, C_in, C_out, num_groups, eps, negative_slope):
    accs = []
    for ry in (0, 1):
        for rx in (0, 1):
            taps = []
            for dy in (0, 1):
                for dx in (0, 1):
                    taps.append(x_ref[0, ry + dy:ry + dy + H,
                                      rx + dx:rx + dx + W, :])
            xph = jnp.concatenate(taps, axis=-1)              # (H, W, 4*Cin) f32
            xph = xph.reshape(H * W, 4 * C_in).astype(jnp.bfloat16)
            p = 2 * ry + rx
            acc = jnp.dot(xph, w_ref[p], preferred_element_type=jnp.float32)
            acc = acc + bt_ref[...]                           # (H*W, Cout) f32
            accs.append(acc)

    # GroupNorm statistics over the full 2H x 2W output (all four phases).
    s = accs[0].sum(axis=0, keepdims=True)
    ss = (accs[0] * accs[0]).sum(axis=0, keepdims=True)
    for a in accs[1:]:
        s = s + a.sum(axis=0, keepdims=True)
        ss = ss + (a * a).sum(axis=0, keepdims=True)

    cpg = C_out // num_groups
    if cpg == 1:
        n = float(4 * H * W)
        mean_c = s / n
        var_c = jnp.maximum(ss / n - mean_c * mean_c, 0.0)
        inv_c = jax.lax.rsqrt(var_c + eps)
    else:
        n = float(4 * H * W * cpg)
        sg = jnp.sum(s.reshape(num_groups, cpg), axis=1, keepdims=True)
        ssg = jnp.sum(ss.reshape(num_groups, cpg), axis=1, keepdims=True)
        mean = sg / n
        var = jnp.maximum(ssg / n - mean * mean, 0.0)
        inv = jax.lax.rsqrt(var + eps)
        mean_c = jnp.broadcast_to(mean, (num_groups, cpg)).reshape(1, C_out)
        inv_c = jnp.broadcast_to(inv, (num_groups, cpg)).reshape(1, C_out)

    scale = inv_c * g_ref[...]
    shift = b_ref[...] - mean_c * scale
    for p in range(4):
        y = accs[p] * scale + shift
        y = _lrelu(y, negative_slope)
        o_ref[0, p] = y.astype(o_ref.dtype)


def convt_gn_lrelu(x_nhwc, wt, bt, gamma, beta, *, num_groups=32, eps=1e-5,
                   negative_slope=NEG_SLOPE):
    N, H, W, C_in = x_nhwc.shape
    C_out = wt.shape[1]
    # Polyphase weights: output pixel (2*qy+ry, 2*qx+rx) reads padded-input taps
    # (qy+ry+dy, qx+rx+dx) with kernel indices (3-2*dy-ry, 3-2*dx-rx).
    w_ph = jnp.stack([
        jnp.concatenate([wt[:, :, 3 - 2 * dy - ry, 3 - 2 * dx - rx]
                         for dy in (0, 1) for dx in (0, 1)], axis=0)
        for ry in (0, 1) for rx in (0, 1)], axis=0).astype(jnp.bfloat16)

    xp = jnp.pad(x_nhwc, ((0, 0), (1, 1), (1, 1), (0, 0)))

    kern = functools.partial(_convt_gn_lrelu_kernel, H=H, W=W, C_in=C_in,
                             C_out=C_out, num_groups=num_groups, eps=eps,
                             negative_slope=negative_slope)
    out = pl.pallas_call(
        kern,
        out_shape=jax.ShapeDtypeStruct((N, 4, H * W, C_out), jnp.bfloat16),
        grid=(N,),
        in_specs=[
            pl.BlockSpec((1, H + 2, W + 2, C_in), lambda n: (n, 0, 0, 0)),
            pl.BlockSpec((4, 4 * C_in, C_out), lambda n: (0, 0, 0)),
            pl.BlockSpec((1, C_out), lambda n: (0, 0)),
            pl.BlockSpec((1, C_out), lambda n: (0, 0)),
            pl.BlockSpec((1, C_out), lambda n: (0, 0)),
        ],
        out_specs=pl.BlockSpec((1, 4, H * W, C_out), lambda n: (n, 0, 0, 0)),
        compiler_params=pltpu.CompilerParams(
            dimension_semantics=("parallel",),
            vmem_limit_bytes=VMEM_LIMIT),
    )(xp, w_ph,
      bt.reshape(1, C_out).astype(jnp.float32),
      gamma.reshape(1, C_out).astype(jnp.float32),
      beta.reshape(1, C_out).astype(jnp.float32))

    # Pixel-shuffle the four phases back into (N, 2H, 2W, Cout) — XLA glue.
    y = out.reshape(N, 2, 2, H, W, C_out)
    y = jnp.transpose(y, (0, 3, 1, 4, 2, 5)).reshape(N, 2 * H, 2 * W, C_out)
    return y


# ---------------------------------------------------------------------------
# Kernel 2: fused concat + conv1(1x1) + LReLU + conv2(1x1) + LReLU
#   `cat` and the (M, m_ch) intermediate never touch HBM.
# ---------------------------------------------------------------------------
def _cat_1x1_1x1_kernel(y_ref, s_ref, w1a_ref, w1b_ref, b1_ref, w2_ref, b2_ref,
                        o_ref, *, negative_slope):
    h = jnp.dot(y_ref[...], w1a_ref[...], preferred_element_type=jnp.float32)
    h = h + jnp.dot(s_ref[...].astype(jnp.bfloat16), w1b_ref[...],
                    preferred_element_type=jnp.float32)
    h = _lrelu(h + b1_ref[...], negative_slope)
    r = jnp.dot(h.astype(jnp.bfloat16), w2_ref[...],
                preferred_element_type=jnp.float32)
    r = _lrelu(r + b2_ref[...], negative_slope)
    o_ref[...] = r.astype(o_ref.dtype)


def cat_conv1x1_chain(y_flat, skip_flat, w1a, w1b, b1, w2, b2, *,
                      negative_slope=NEG_SLOPE, tm=512):
    M, C = y_flat.shape
    m_ch = w1a.shape[1]
    Mp = pl.cdiv(M, tm) * tm
    if Mp != M:
        y_flat = jnp.pad(y_flat, ((0, Mp - M), (0, 0)))
        skip_flat = jnp.pad(skip_flat, ((0, Mp - M), (0, 0)))
    kern = functools.partial(_cat_1x1_1x1_kernel, negative_slope=negative_slope)
    out = pl.pallas_call(
        kern,
        out_shape=jax.ShapeDtypeStruct((Mp, m_ch), jnp.float32),
        grid=(Mp // tm,),
        in_specs=[
            pl.BlockSpec((tm, C), lambda i: (i, 0)),
            pl.BlockSpec((tm, C), lambda i: (i, 0)),
            pl.BlockSpec((C, m_ch), lambda i: (0, 0)),
            pl.BlockSpec((C, m_ch), lambda i: (0, 0)),
            pl.BlockSpec((1, m_ch), lambda i: (0, 0)),
            pl.BlockSpec((m_ch, m_ch), lambda i: (0, 0)),
            pl.BlockSpec((1, m_ch), lambda i: (0, 0)),
        ],
        out_specs=pl.BlockSpec((tm, m_ch), lambda i: (i, 0)),
        compiler_params=pltpu.CompilerParams(
            dimension_semantics=("parallel",),
            vmem_limit_bytes=VMEM_LIMIT),
    )(y_flat, skip_flat, w1a, w1b, b1.reshape(1, m_ch).astype(jnp.float32),
      w2, b2.reshape(1, m_ch).astype(jnp.float32))
    return out[:M]


# ---------------------------------------------------------------------------
# Kernel 3: fused 3x3 conv (pad=1) + LeakyReLU — im2col done in-kernel from a
#           padded per-sample VMEM block (no 9x patch tensor in HBM).
# ---------------------------------------------------------------------------
def _conv3x3_lrelu_kernel(x_ref, w_ref, b_ref, o_ref, *, H, W, C_in, C_out,
                          negative_slope):
    taps = []
    for dy in range(3):
        for dx in range(3):
            taps.append(x_ref[0, dy:dy + H, dx:dx + W, :])
    patch = jnp.concatenate(taps, axis=-1)                    # (H, W, 9*Cin)
    patch = patch.reshape(H * W, 9 * C_in).astype(jnp.bfloat16)
    acc = jnp.dot(patch, w_ref[...], preferred_element_type=jnp.float32)
    acc = _lrelu(acc + b_ref[...], negative_slope)
    o_ref[0] = acc.astype(o_ref.dtype)


def conv3x3_lrelu(x_nhwc, w3, b3, *, negative_slope=NEG_SLOPE):
    N, H, W, C_in = x_nhwc.shape
    C_out = w3.shape[0]
    # row index of w3_mat = (ky*3 + kx)*C_in + ci  (matches in-kernel tap order)
    w3_mat = jnp.transpose(w3, (2, 3, 1, 0)).reshape(9 * C_in, C_out)
    w3_mat = w3_mat.astype(jnp.bfloat16)
    xp = jnp.pad(x_nhwc, ((0, 0), (1, 1), (1, 1), (0, 0)))
    kern = functools.partial(_conv3x3_lrelu_kernel, H=H, W=W, C_in=C_in,
                             C_out=C_out, negative_slope=negative_slope)
    out = pl.pallas_call(
        kern,
        out_shape=jax.ShapeDtypeStruct((N, H * W, C_out), jnp.float32),
        grid=(N,),
        in_specs=[
            pl.BlockSpec((1, H + 2, W + 2, C_in), lambda n: (n, 0, 0, 0)),
            pl.BlockSpec((9 * C_in, C_out), lambda n: (0, 0)),
            pl.BlockSpec((1, C_out), lambda n: (0, 0)),
        ],
        out_specs=pl.BlockSpec((1, H * W, C_out), lambda n: (n, 0, 0)),
        compiler_params=pltpu.CompilerParams(
            dimension_semantics=("parallel",),
            vmem_limit_bytes=VMEM_LIMIT),
    )(xp, w3_mat, b3.reshape(1, C_out).astype(jnp.float32))
    return out.reshape(N, H, W, C_out)


# ---------------------------------------------------------------------------
# Parameters (PyTorch module shapes)
# ---------------------------------------------------------------------------
def init_params(key, in_ch, m_ch, out_ch):
    ks = jax.random.split(key, 10)
    s = 0.1
    return {
        # ConvTranspose2d(in_ch, in_ch, 4, p=1, s=2): weight (Cin, Cout, 4, 4)
        "wt": s * jax.random.normal(ks[0], (in_ch, in_ch, 4, 4), jnp.float32),
        "bt": s * jax.random.normal(ks[1], (in_ch,), jnp.float32),
        # GroupNorm(32, in_ch) affine
        "gn_w": 1.0 + s * jax.random.normal(ks[2], (in_ch,), jnp.float32),
        "gn_b": s * jax.random.normal(ks[3], (in_ch,), jnp.float32),
        # ResBlock convs
        "w1": s * jax.random.normal(ks[4], (m_ch, 2 * in_ch, 1, 1), jnp.float32),
        "b1": s * jax.random.normal(ks[5], (m_ch,), jnp.float32),
        "w2": s * jax.random.normal(ks[6], (m_ch, m_ch, 1, 1), jnp.float32),
        "b2": s * jax.random.normal(ks[7], (m_ch,), jnp.float32),
        "w3": s * jax.random.normal(ks[8], (out_ch, m_ch, 3, 3), jnp.float32),
        "b3": s * jax.random.normal(ks[9], (out_ch,), jnp.float32),
    }


# ---------------------------------------------------------------------------
# Forward pass of `up` (accepts NCHW like PyTorch)
# ---------------------------------------------------------------------------
def up_forward(x_nchw, skip_nchw, params, negative_slope=NEG_SLOPE):
    N, Cin, H, W = x_nchw.shape
    Ho, Wo = 2 * H, 2 * W
    x = jnp.transpose(x_nchw, (0, 2, 3, 1))                          # NHWC

    # Stage 1: ConvTranspose2d + GroupNorm(32) + LeakyReLU, fully fused.
    y = convt_gn_lrelu(x, params["wt"], params["bt"], params["gn_w"],
                       params["gn_b"], negative_slope=negative_slope)
    # y: (N, Ho, Wo, Cin) bf16

    # Stage 2: concat + 1x1 + LReLU + 1x1 + LReLU (concat never materialised).
    skip_flat = jnp.transpose(skip_nchw, (0, 2, 3, 1)).reshape(N * Ho * Wo, Cin)
    y_flat = y.reshape(N * Ho * Wo, Cin)
    w1 = params["w1"][:, :, 0, 0].T.astype(jnp.bfloat16)             # (2Cin, m)
    w1a, w1b = w1[:Cin], w1[Cin:]
    w2 = params["w2"][:, :, 0, 0].T.astype(jnp.bfloat16)             # (m, m)
    r = cat_conv1x1_chain(y_flat, skip_flat, w1a, w1b, params["b1"], w2,
                          params["b2"], negative_slope=negative_slope)
    m_ch = params["w1"].shape[0]
    r = r.reshape(N, Ho, Wo, m_ch)

    # Stage 3: 3x3 conv (pad=1) + LeakyReLU, im2col fused into the kernel.
    o = conv3x3_lrelu(r, params["w3"], params["b3"],
                      negative_slope=negative_slope)
    return jnp.transpose(o, (0, 3, 1, 2))                            # NCHW


# ---------------------------------------------------------------------------
# Pure-JAX f32 reference (independent formulation) for a sanity check
# ---------------------------------------------------------------------------
def reference_forward(x, skip, params, negative_slope=NEG_SLOPE):
    P = jax.lax.Precision.HIGHEST

    def lrelu(v):
        return jnp.where(v >= 0, v, negative_slope * v)

    wt = params["wt"]
    wc = jnp.transpose(wt[:, :, ::-1, ::-1], (1, 0, 2, 3))      # (Cout,Cin,4,4)
    y = jax.lax.conv_general_dilated(
        x, wc, (1, 1), [(2, 2), (2, 2)], lhs_dilation=(2, 2),
        dimension_numbers=("NCHW", "OIHW", "NCHW"), precision=P)
    y = y + params["bt"][None, :, None, None]
    N, C, Hh, Ww = y.shape
    yg = y.reshape(N, 32, -1)
    mean = yg.mean(-1, keepdims=True)
    var = yg.var(-1, keepdims=True)
    yn = ((yg - mean) / jnp.sqrt(var + 1e-5)).reshape(N, C, Hh, Ww)
    yn = yn * params["gn_w"][None, :, None, None] + params["gn_b"][None, :, None, None]
    yn = lrelu(yn)
    cat = jnp.concatenate([yn, skip], axis=1)

    def c1x1(v, w, b):
        return lrelu(jnp.einsum("nchw,oc->nohw", v, w[:, :, 0, 0], precision=P)
                     + b[None, :, None, None])

    r = c1x1(cat, params["w1"], params["b1"])
    r = c1x1(r, params["w2"], params["b2"])
    r3 = jax.lax.conv_general_dilated(
        r, params["w3"], (1, 1), [(1, 1), (1, 1)],
        dimension_numbers=("NCHW", "OIHW", "NCHW"), precision=P)
    return lrelu(r3 + params["b3"][None, :, None, None])


if __name__ == "__main__":
    in_ch, m_ch, out_ch = 32, 16, 16     # in_ch must be divisible by 32 (GroupNorm)
    N, H, W = 2, 8, 8
    key = jax.random.PRNGKey(0)
    kx, ks, kp = jax.random.split(key, 3)
    x = jax.random.normal(kx, (N, in_ch, H, W), jnp.float32)
    x_skip = jax.random.normal(ks, (N, in_ch, 2 * H, 2 * W), jnp.float32)
    params = init_params(kp, in_ch, m_ch, out_ch)

    out = jax.jit(up_forward)(x, x_skip, params)
    out = jax.block_until_ready(out)
    assert out.shape == (N, out_ch, 2 * H, 2 * W), out.shape

    ref = reference_forward(x, x_skip, params)
    err = float(jnp.max(jnp.abs(out - ref)))
    # bf16 MXU operands (f32 accumulation) => slightly looser tolerance than f32.
    assert jnp.allclose(out, ref, atol=5e-2, rtol=5e-2), f"max abs err {err}"
    print("KERNEL_OK")
</pallas_src>

<mosaic_0001>
module attributes {stable_mosaic.version = 11 : i64} {
  func.func @_cat_1x1_1x1_kernel(%arg0: i32, %arg1: memref<512x32xbf16, #tpu.memory_space<vmem>>, %arg2: memref<512x32xf32, #tpu.memory_space<vmem>>, %arg3: memref<32x16xbf16, #tpu.memory_space<vmem>>, %arg4: memref<32x16xbf16, #tpu.memory_space<vmem>>, %arg5: memref<1x16xf32, #tpu.memory_space<vmem>>, %arg6: memref<16x16xbf16, #tpu.memory_space<vmem>>, %arg7: memref<1x16xf32, #tpu.memory_space<vmem>>, %arg8: memref<512x16xf32, #tpu.memory_space<vmem>>) attributes {dimension_semantics = [#tpu.dimension_semantics<parallel>], iteration_bounds = array<i64: 1>, scalar_prefetch = 0 : i64, scratch_operands = 0 : i64, tpu.core_type = #tpu.core_type<tc>, window_params = [{transform_indices = @transform_0, window_bounds = array<i64: 512, 32>}, {transform_indices = @transform_1, window_bounds = array<i64: 512, 32>}, {pipeline_mode = #tpu.pipeline_mode<synchronous>, transform_indices = @transform_2, window_bounds = array<i64: 32, 16>}, {pipeline_mode = #tpu.pipeline_mode<synchronous>, transform_indices = @transform_3, window_bounds = array<i64: 32, 16>}, {pipeline_mode = #tpu.pipeline_mode<synchronous>, transform_indices = @transform_4, window_bounds = array<i64: 1, 16>}, {pipeline_mode = #tpu.pipeline_mode<synchronous>, transform_indices = @transform_5, window_bounds = array<i64: 16, 16>}, {pipeline_mode = #tpu.pipeline_mode<synchronous>, transform_indices = @transform_6, window_bounds = array<i64: 1, 16>}, {transform_indices = @transform_7, window_bounds = array<i64: 512, 16>}]} {
    %c0 = arith.constant 0 : index
    %c0_0 = arith.constant 0 : index
    %0 = vector.load %arg1[%c0, %c0_0] : memref<512x32xbf16, #tpu.memory_space<vmem>>, vector<512x32xbf16>
    %c0_1 = arith.constant 0 : index
    %c0_2 = arith.constant 0 : index
    %1 = vector.load %arg3[%c0_1, %c0_2] : memref<32x16xbf16, #tpu.memory_space<vmem>>, vector<32x16xbf16>
    %cst = arith.constant dense<0.000000e+00> : vector<512x16xf32>
    %2 = tpu.matmul %0, %1, %cst {dimension_numbers = #tpu.dot_dimension_numbers<[1], [0], [0], [1], [0, 0, 1, 1], [], []>} : vector<512x32xbf16>, vector<32x16xbf16>, vector<512x16xf32> -> vector<512x16xf32>
    %c0_3 = arith.constant 0 : index
    %c0_4 = arith.constant 0 : index
    %3 = vector.load %arg2[%c0_3, %c0_4] : memref<512x32xf32, #tpu.memory_space<vmem>>, vector<512x32xf32>
    %4 = arith.truncf %3 : vector<512x32xf32> to vector<512x32xbf16>
    %c0_5 = arith.constant 0 : index
    %c0_6 = arith.constant 0 : index
    %5 = vector.load %arg4[%c0_5, %c0_6] : memref<32x16xbf16, #tpu.memory_space<vmem>>, vector<32x16xbf16>
    %cst_7 = arith.constant dense<0.000000e+00> : vector<512x16xf32>
    %6 = tpu.matmul %4, %5, %cst_7 {dimension_numbers = #tpu.dot_dimension_numbers<[1], [0], [0], [1], [0, 0, 1, 1], [], []>} : vector<512x32xbf16>, vector<32x16xbf16>, vector<512x16xf32> -> vector<512x16xf32>
    %7 = arith.addf %2, %6 : vector<512x16xf32>
    %c0_8 = arith.constant 0 : index
    %c0_9 = arith.constant 0 : index
    %8 = vector.load %arg5[%c0_8, %c0_9] : memref<1x16xf32, #tpu.memory_space<vmem>>, vector<1x16xf32>
    %9 = vector.broadcast %8 : vector<1x16xf32> to vector<512x16xf32>
    %10 = arith.addf %7, %9 : vector<512x16xf32>
    %cst_10 = arith.constant 0.000000e+00 : f32
    %11 = vector.broadcast %cst_10 : f32 to vector<512x16xf32>
    %12 = arith.cmpf oge, %10, %11 : vector<512x16xf32>
    %cst_11 = arith.constant 1.000000e-01 : f32
    %13 = vector.broadcast %cst_11 : f32 to vector<512x16xf32>
    %14 = arith.mulf %10, %13 : vector<512x16xf32>
    %15 = arith.select %12, %10, %14 : vector<512x16xi1>, vector<512x16xf32>
    %16 = arith.truncf %15 : vector<512x16xf32> to vector<512x16xbf16>
    %c0_12 = arith.constant 0 : index
    %c0_13 = arith.constant 0 : index
    %17 = vector.load %arg6[%c0_12, %c0_13] : memref<16x16xbf16, #tpu.memory_space<vmem>>, vector<16x16xbf16>
    %cst_14 = arith.constant dense<0.000000e+00> : vector<512x16xf32>
    %18 = tpu.matmul %16, %17, %cst_14 {dimension_numbers = #tpu.dot_dimension_numbers<[1], [0], [0], [1], [0, 0, 1, 1], [], []>} : vector<512x16xbf16>, vector<16x16xbf16>, vector<512x16xf32> -> vector<512x16xf32>
    %c0_15 = arith.constant 0 : index
    %c0_16 = arith.constant 0 : index
    %19 = vector.load %arg7[%c0_15, %c0_16] : memref<1x16xf32, #tpu.memory_space<vmem>>, vector<1x16xf32>
    %20 = vector.broadcast %19 : vector<1x16xf32> to vector<512x16xf32>
    %21 = arith.addf %18, %20 : vector<512x16xf32>
    %cst_17 = arith.constant 0.000000e+00 : f32
    %22 = vector.broadcast %cst_17 : f32 to vector<512x16xf32>
    %23 = arith.cmpf oge, %21, %22 : vector<512x16xf32>
    %cst_18 = arith.constant 1.000000e-01 : f32
    %24 = vector.broadcast %cst_18 : f32 to vector<512x16xf32>
    %25 = arith.mulf %21, %24 : vector<512x16xf32>
    %26 = arith.select %23, %21, %25 : vector<512x16xi1>, vector<512x16xf32>
    %c0_19 = arith.constant 0 : index
    %c0_20 = arith.constant 0 : index
    %27 = vector.load %arg8[%c0_19, %c0_20] : memref<512x16xf32, #tpu.memory_space<vmem>>, vector<512x16xf32>
    tpu.vector_store %arg8[%c0_19, %c0_20], %26 {strides = array<i32>} : memref<512x16xf32, #tpu.memory_space<vmem>>, vector<512x16xf32>,
    return
  }
  func.func @transform_0(%arg0: i32) -> (i32, i32) {
    %c0_i32 = arith.constant 0 : i32
    %c0_i32_0 = arith.constant 0 : i32
    return %arg0, %c0_i32 : i32, i32
  }
  func.func @transform_1(%arg0: i32) -> (i32, i32) {
    %c0_i32 = arith.constant 0 : i32
    %c0_i32_0 = arith.constant 0 : i32
    return %arg0, %c0_i32 : i32, i32
  }
  func.func @transform_2(%arg0: i32) -> (i32, i32) {
    %c0_i32 = arith.constant 0 : i32
    %c0_i32_0 = arith.constant 0 : i32
    %c0_i32_1 = arith.constant 0 : i32
    return %c0_i32, %c0_i32_0 : i32, i32
  }
  func.func @transform_3(%arg0: i32) -> (i32, i32) {
    %c0_i32 = arith.constant 0 : i32
    %c0_i32_0 = arith.constant 0 : i32
    %c0_i32_1 = arith.constant 0 : i32
    return %c0_i32, %c0_i32_0 : i32, i32
  }
  func.func @transform_4(%arg0: i32) -> (i32, i32) {
    %c0_i32 = arith.constant 0 : i32
    %c0_i32_0 = arith.constant 0 : i32
    %c0_i32_1 = arith.constant 0 : i32
    return %c0_i32, %c0_i32_0 : i32, i32
  }
  func.func @transform_5(%arg0: i32) -> (i32, i32) {
    %c0_i32 = arith.constant 0 : i32
    %c0_i32_0 = arith.constant 0 : i32
    %c0_i32_1 = arith.constant 0 : i32
    return %c0_i32, %c0_i32_0 : i32, i32
  }
  func.func @transform_6(%arg0: i32) -> (i32, i32) {
    %c0_i32 = arith.constant 0 : i32
    %c0_i32_0 = arith.constant 0 : i32
    %c0_i32_1 = arith.constant 0 : i32
    return %c0_i32, %c0_i32_0 : i32, i32
  }
  func.func @transform_7(%arg0: i32) -> (i32, i32) {
    %c0_i32 = arith.constant 0 : i32
    %c0_i32_0 = arith.constant 0 : i32
    return %arg0, %c0_i32 : i32, i32
  }
}

module attributes {stable_mosaic.version = 11 : i64} {
  func.func @_convt_gn_lrelu_kernel(%arg0: i32, %arg1: memref<1x10x10x32xf32, #tpu.memory_space<vmem>>, %arg2: memref<4x128x32xbf16, #tpu.memory_space<vmem>>, %arg3: memref<1x32xf32, #tpu.memory_space<vmem>>, %arg4: memref<1x32xf32, #tpu.memory_space<vmem>>, %arg5: memref<1x32xf32, #tpu.memory_space<vmem>>, %arg6: memref<1x4x64x32xbf16, #tpu.memory_space<vmem>>) attributes {dimension_semantics = [#tpu.dimension_semantics<parallel>], iteration_bounds = array<i64: 2>, scalar_prefetch = 0 : i64, scratch_operands = 0 : i64, tpu.core_type = #tpu.core_type<tc>, window_params = [{transform_indices = @transform_0, window_bounds = array<i64: 1, 10, 10, 32>}, {pipeline_mode = #tpu.pipeline_mode<synchronous>, transform_indices = @transform_1, window_bounds = array<i64: 4, 128, 32>}, {pipeline_mode = #tpu.pipeline_mode<synchronous>, transform_indices = @transform_2, window_bounds = array<i64: 1, 32>}, {pipeline_mode = #tpu.pipeline_mode<synchronous>, transform_indices = @transform_3, window_bounds = array<i64: 1, 32>}, {pipeline_mode = #tpu.pipeline_mode<synchronous>, transform_indices = @transform_4, window_bounds = array<i64: 1, 32>}, {transform_indices = @transform_5, window_bounds = array<i64: 1, 4, 64, 32>}]} {
    %c0 = arith.constant 0 : index
    %c0_0 = arith.constant 0 : index
    %c0_1 = arith.constant 0 : index
    %c0_2 = arith.constant 0 : index
    %0 = vector.load %arg1[%c0, %c0_0, %c0_1, %c0_2] : memref<1x10x10x32xf32, #tpu.memory_space<vmem>>, vector<1x8x8x32xf32>
    %1 = vector.shape_cast %0 : vector<1x8x8x32xf32> to vector<8x8x32xf32>
    %c0_3 = arith.constant 0 : index
    %c0_4 = arith.constant 0 : index
    %c1 = arith.constant 1 : index
    %c0_5 = arith.constant 0 : index
    %2 = vector.load %arg1[%c0_3, %c0_4, %c1, %c0_5] : memref<1x10x10x32xf32, #tpu.memory_space<vmem>>, vector<1x8x8x32xf32>
    %3 = vector.shape_cast %2 : vector<1x8x8x32xf32> to vector<8x8x32xf32>
    %c0_6 = arith.constant 0 : index
    %c1_7 = arith.constant 1 : index
    %c0_8 = arith.constant 0 : index
    %c0_9 = arith.constant 0 : index
    %4 = vector.load %arg1[%c0_6, %c1_7, %c0_8, %c0_9] : memref<1x10x10x32xf32, #tpu.memory_space<vmem>>, vector<1x8x8x32xf32>
    %5 = vector.shape_cast %4 : vector<1x8x8x32xf32> to vector<8x8x32xf32>
    %c0_10 = arith.constant 0 : index
    %c1_11 = arith.constant 1 : index
    %c1_12 = arith.constant 1 : index
    %c0_13 = arith.constant 0 : index
    %6 = vector.load %arg1[%c0_10, %c1_11, %c1_12, %c0_13] : memref<1x10x10x32xf32, #tpu.memory_space<vmem>>, vector<1x8x8x32xf32>
    %7 = vector.shape_cast %6 : vector<1x8x8x32xf32> to vector<8x8x32xf32>
    %8 = tpu.concatenate %1, %3, %5, %7 in 2 : vector<8x8x32xf32>, vector<8x8x32xf32>, vector<8x8x32xf32>, vector<8x8x32xf32> -> vector<8x8x128xf32>
    %9 = vector.shape_cast %8 : vector<8x8x128xf32> to vector<64x128xf32>
    %10 = arith.truncf %9 : vector<64x128xf32> to vector<64x128xbf16>
    %c0_14 = arith.constant 0 : index
    %c0_15 = arith.constant 0 : index
    %c0_16 = arith.constant 0 : index
    %11 = vector.load %arg2[%c0_14, %c0_15, %c0_16] : memref<4x128x32xbf16, #tpu.memory_space<vmem>>, vector<1x128x32xbf16>
    %12 = vector.shape_cast %11 : vector<1x128x32xbf16> to vector<128x32xbf16>
    %cst = arith.constant dense<0.000000e+00> : vector<64x32xf32>
    %13 = tpu.matmul %10, %12, %cst {dimension_numbers = #tpu.dot_dimension_numbers<[1], [0], [0], [1], [0, 0, 1, 1], [], []>} : vector<64x128xbf16>, vector<128x32xbf16>, vector<64x32xf32> -> vector<64x32xf32>
    %c0_17 = arith.constant 0 : index
    %c0_18 = arith.constant 0 : index
    %14 = vector.load %arg3[%c0_17, %c0_18] : memref<1x32xf32, #tpu.memory_space<vmem>>, vector<1x32xf32>
    %15 = vector.broadcast %14 : vector<1x32xf32> to vector<64x32xf32>
    %16 = arith.addf %13, %15 : vector<64x32xf32>
    %c0_19 = arith.constant 0 : index
    %c0_20 = arith.constant 0 : index
    %c1_21 = arith.constant 1 : index
    %c0_22 = arith.constant 0 : index
    %17 = vector.load %arg1[%c0_19, %c0_20, %c1_21, %c0_22] : memref<1x10x10x32xf32, #tpu.memory_space<vmem>>, vector<1x8x8x32xf32>
    %18 = vector.shape_cast %17 : vector<1x8x8x32xf32> to vector<8x8x32xf32>
    %c0_23 = arith.constant 0 : index
    %c0_24 = arith.constant 0 : index
    %c2 = arith.constant 2 : index
    %c0_25 = arith.constant 0 : index
    %19 = vector.load %arg1[%c0_23, %c0_24, %c2, %c0_25] : memref<1x10x10x32xf32, #tpu.memory_space<vmem>>, vector<1x8x8x32xf32>
    %20 = vector.shape_cast %19 : vector<1x8x8x32xf32> to vector<8x8x32xf32>
    %c0_26 = arith.constant 0 : index
    %c1_27 = arith.constant 1 : index
    %c1_28 = arith.constant 1 : index
    %c0_29 = arith.constant 0 : index
    %21 = vector.load %arg1[%c0_26, %c1_27, %c1_28, %c0_29] : memref<1x10x10x32xf32, #tpu.memory_space<vmem>>, vector<1x8x8x32xf32>
    %22 = vector.shape_cast %21 : vector<1x8x8x32xf32> to vector<8x8x32xf32>
    %c0_30 = arith.constant 0 : index
    %c1_31 = arith.constant 1 : index
    %c2_32 = arith.constant 2 : index
    %c0_33 = arith.constant 0 : index
    %23 = vector.load %arg1[%c0_30, %c1_31, %c2_32, %c0_33] : memref<1x10x10x32xf32, #tpu.memory_space<vmem>>, vector<1x8x8x32xf32>
    %24 = vector.shape_cast %23 : vector<1x8x8x32xf32> to vector<8x8x32xf32>
    %25 = tpu.concatenate %18, %20, %22, %24 in 2 : vector<8x8x32xf32>, vector<8x8x32xf32>, vector<8x8x32xf32>, vector<8x8x32xf32> -> vector<8x8x128xf32>
    %26 = vector.shape_cast %25 : vector<8x8x128xf32> to vector<64x128xf32>
    %27 = arith.truncf %26 : vector<64x128xf32> to vector<64x128xbf16>
    %c1_34 = arith.constant 1 : index
    %c0_35 = arith.constant 0 : index
    %c0_36 = arith.constant 0 : index
    %28 = vector.load %arg2[%c1_34, %c0_35, %c0_36] : memref<4x128x32xbf16, #tpu.memory_space<vmem>>, vector<1x128x32xbf16>
    %29 = vector.shape_cast %28 : vector<1x128x32xbf16> to vector<128x32xbf16>
    %cst_37 = arith.constant dense<0.000000e+00> : vector<64x32xf32>
    %30 = tpu.matmul %27, %29, %cst_37 {dimension_numbers = #tpu.dot_dimension_numbers<[1], [0], [0], [1], [0, 0, 1, 1], [], []>} : vector<64x128xbf16>, vector<128x32xbf16>, vector<64x32xf32> -> vector<64x32xf32>
    %c0_38 = arith.constant 0 : index
    %c0_39 = arith.constant 0 : index
    %31 = vector.load %arg3[%c0_38, %c0_39] : memref<1x32xf32, #tpu.memory_space<vmem>>, vector<1x32xf32>
    %32 = vector.broadcast %31 : vector<1x32xf32> to vector<64x32xf32>
    %33 = arith.addf %30, %32 : vector<64x32xf32>
    %c0_40 = arith.constant 0 : index
    %c1_41 = arith.constant 1 : index
    %c0_42 = arith.constant 0 : index
    %c0_43 = arith.constant 0 : index
    %34 = vector.load %arg1[%c0_40, %c1_41, %c0_42, %c0_43] : memref<1x10x10x32xf32, #tpu.memory_space<vmem>>, vector<1x8x8x32xf32>
    %35 = vector.shape_cast %34 : vector<1x8x8x32xf32> to vector<8x8x32xf32>
    %c0_44 = arith.constant 0 : index
    %c1_45 = arith.constant 1 : index
    %c1_46 = arith.constant 1 : index
    %c0_47 = arith.constant 0 : index
    %36 = vector.load %arg1[%c0_44, %c1_45, %c1_46, %c0_47] : memref<1x10x10x32xf32, #tpu.memory_space<vmem>>, vector<1x8x8x32xf32>
    %37 = vector.shape_cast %36 : vector<1x8x8x32xf32> to vector<8x8x32xf32>
    %c0_48 = arith.constant 0 : index
    %c2_49 = arith.constant 2 : index
    %c0_50 = arith.constant 0 : index
    %c0_51 = arith.constant 0 : index
    %38 = vector.load %arg1[%c0_48, %c2_49, %c0_50, %c0_51] : memref<1x10x10x32xf32, #tpu.memory_space<vmem>>, vector<1x8x8x32xf32>
    %39 = vector.shape_cast %38 : vector<1x8x8x32xf32> to vector<8x8x32xf32>
    %c0_52 = arith.constant 0 : index
    %c2_53 = arith.constant 2 : index
    %c1_54 = arith.constant 1 : index
    %c0_55 = arith.constant 0 : index
    %40 = vector.load %arg1[%c0_52, %c2_53, %c1_54, %c0_55] : memref<1x10x10x32xf32, #tpu.memory_space<vmem>>, vector<1x8x8x32xf32>
    %41 = vector.shape_cast %40 : vector<1x8x8x32xf32> to vector<8x8x32xf32>
    %42 = tpu.concatenate %35, %37, %39, %41 in 2 : vector<8x8x32xf32>, vector<8x8x32xf32>, vector<8x8x32xf32>, vector<8x8x32xf32> -> vector<8x8x128xf32>
    %43 = vector.shape_cast %42 : vector<8x8x128xf32> to vector<64x128xf32>
    %44 = arith.truncf %43 : vector<64x128xf32> to vector<64x128xbf16>
    %c2_56 = arith.constant 2 : index
    %c0_57 = arith.constant 0 : index
    %c0_58 = arith.constant 0 : index
    %45 = vector.load %arg2[%c2_56, %c0_57, %c0_58] : memref<4x128x32xbf16, #tpu.memory_space<vmem>>, vector<1x128x32xbf16>
    %46 = vector.shape_cast %45 : vector<1x128x32xbf16> to vector<128x32xbf16>
    %cst_59 = arith.constant dense<0.000000e+00> : vector<64x32xf32>
    %47 = tpu.matmul %44, %46, %cst_59 {dimension_numbers = #tpu.dot_dimension_numbers<[1], [0], [0], [1], [0, 0, 1, 1], [], []>} : vector<64x128xbf16>, vector<128x32xbf16>, vector<64x32xf32> -> vector<64x32xf32>
    %c0_60 = arith.constant 0 : index
    %c0_61 = arith.constant 0 : index
    %48 = vector.load %arg3[%c0_60, %c0_61] : memref<1x32xf32, #tpu.memory_space<vmem>>, vector<1x32xf32>
    %49 = vector.broadcast %48 : vector<1x32xf32> to vector<64x32xf32>
    %50 = arith.addf %47, %49 : vector<64x32xf32>
    %c0_62 = arith.constant 0 : index
    %c1_63 = arith.constant 1 : index
    %c1_64 = arith.constant 1 : index
    %c0_65 = arith.constant 0 : index
    %51 = vector.load %arg1[%c0_62, %c1_63, %c1_64, %c0_65] : memref<1x10x10x32xf32, #tpu.memory_space<vmem>>, vector<1x8x8x32xf32>
    %52 = vector.shape_cast %51 : vector<1x8x8x32xf32> to vector<8x8x32xf32>
    %c0_66 = arith.constant 0 : index
    %c1_67 = arith.constant 1 : index
    %c2_68 = arith.constant 2 : index
    %c0_69 = arith.constant 0 : index
    %53 = vector.load %arg1[%c0_66, %c1_67, %c2_68, %c0_69] : memref<1x10x10x32xf32, #tpu.memory_space<vmem>>, vector<1x8x8x32xf32>
    %54 = vector.shape_cast %53 : vector<1x8x8x32xf32> to vector<8x8x32xf32>
    %c0_70 = arith.constant 0 : index
    %c2_71 = arith.constant 2 : index
    %c1_72 = arith.constant 1 : index
    %c0_73 = arith.constant 0 : index
    %55 = vector.load %arg1[%c0_70, %c2_71, %c1_72, %c0_73] : memref<1x10x10x32xf32, #tpu.memory_space<vmem>>, vector<1x8x8x32xf32>
    %56 = vector.shape_cast %55 : vector<1x8x8x32xf32> to vector<8x8x32xf32>
    %c0_74 = arith.constant 0 : index
    %c2_75 = arith.constant 2 : index
    %c2_76 = arith.constant 2 : index
    %c0_77 = arith.constant 0 : index
    %57 = vector.load %arg1[%c0_74, %c2_75, %c2_76, %c0_77] : memref<1x10x10x32xf32, #tpu.memory_space<vmem>>, vector<1x8x8x32xf32>
    %58 = vector.shape_cast %57 : vector<1x8x8x32xf32> to vector<8x8x32xf32>
    %59 = tpu.concatenate %52, %54, %56, %58 in 2 : vector<8x8x32xf32>, vector<8x8x32xf32>, vector<8x8x32xf32>, vector<8x8x32xf32> -> vector<8x8x128xf32>
    %60 = vector.shape_cast %59 : vector<8x8x128xf32> to vector<64x128xf32>
    %61 = arith.truncf %60 : vector<64x128xf32> to vector<64x128xbf16>
    %c3 = arith.constant 3 : index
    %c0_78 = arith.constant 0 : index
    %c0_79 = arith.constant 0 : index
    %62 = vector.load %arg2[%c3, %c0_78, %c0_79] : memref<4x128x32xbf16, #tpu.memory_space<vmem>>, vector<1x128x32xbf16>
    %63 = vector.shape_cast %62 : vector<1x128x32xbf16> to vector<128x32xbf16>
    %cst_80 = arith.constant dense<0.000000e+00> : vector<64x32xf32>
    %64 = tpu.matmul %61, %63, %cst_80 {dimension_numbers = #tpu.dot_dimension_numbers<[1], [0], [0], [1], [0, 0, 1, 1], [], []>} : vector<64x128xbf16>, vector<128x32xbf16>, vector<64x32xf32> -> vector<64x32xf32>
    %c0_81 = arith.constant 0 : index
    %c0_82 = arith.constant 0 : index
    %65 = vector.load %arg3[%c0_81, %c0_82] : memref<1x32xf32, #tpu.memory_space<vmem>>, vector<1x32xf32>
    %66 = vector.broadcast %65 : vector<1x32xf32> to vector<64x32xf32>
    %67 = arith.addf %64, %66 : vector<64x32xf32>
    %cst_83 = arith.constant dense<0.000000e+00> : vector<32xf32>
    %68 = vector.multi_reduction <add>, %16, %cst_83 [0] : vector<64x32xf32> to vector<32xf32>
    %69 = vector.shape_cast %68 : vector<32xf32> to vector<1x32xf32>
    %70 = arith.mulf %16, %16 : vector<64x32xf32>
    %cst_84 = arith.constant dense<0.000000e+00> : vector<32xf32>
    %71 = vector.multi_reduction <add>, %70, %cst_84 [0] : vector<64x32xf32> to vector<32xf32>
    %72 = vector.shape_cast %71 : vector<32xf32> to vector<1x32xf32>
    %cst_85 = arith.constant dense<0.000000e+00> : vector<32xf32>
    %73 = vector.multi_reduction <add>, %33, %cst_85 [0] : vector<64x32xf32> to vector<32xf32>
    %74 = vector.shape_cast %73 : vector<32xf32> to vector<1x32xf32>
    %75 = arith.addf %69, %74 : vector<1x32xf32>
    %76 = arith.mulf %33, %33 : vector<64x32xf32>
    %cst_86 = arith.constant dense<0.000000e+00> : vector<32xf32>
    %77 = vector.multi_reduction <add>, %76, %cst_86 [0] : vector<64x32xf32> to vector<32xf32>
    %78 = vector.shape_cast %77 : vector<32xf32> to vector<1x32xf32>
    %79 = arith.addf %72, %78 : vector<1x32xf32>
    %cst_87 = arith.constant dense<0.000000e+00> : vector<32xf32>
    %80 = vector.multi_reduction <add>, %50, %cst_87 [0] : vector<64x32xf32> to vector<32xf32>
    %81 = vector.shape_cast %80 : vector<32xf32> to vector<1x32xf32>
    %82 = arith.addf %75, %81 : vector<1x32xf32>
    %83 = arith.mulf %50, %50 : vector<64x32xf32>
    %cst_88 = arith.constant dense<0.000000e+00> : vector<32xf32>
    %84 = vector.multi_reduction <add>, %83, %cst_88 [0] : vector<64x32xf32> to vector<32xf32>
    %85 = vector.shape_cast %84 : vector<32xf32> to vector<1x32xf32>
    %86 = arith.addf %79, %85 : vector<1x32xf32>
    %cst_89 = arith.constant dense<0.000000e+00> : vector<32xf32>
    %87 = vector.multi_reduction <add>, %67, %cst_89 [0] : vector<64x32xf32> to vector<32xf32>
    %88 = vector.shape_cast %87 : vector<32xf32> to vector<1x32xf32>
    %89 = arith.addf %82, %88 : vector<1x32xf32>
    %90 = arith.mulf %67, %67 : vector<64x32xf32>
    %cst_90 = arith.constant dense<0.000000e+00> : vector<32xf32>
    %91 = vector.multi_reduction <add>, %90, %cst_90 [0] : vector<64x32xf32> to vector<32xf32>
    %92 = vector.shape_cast %91 : vector<32xf32> to vector<1x32xf32>
    %93 = arith.addf %86, %92 : vector<1x32xf32>
    %cst_91 = arith.constant 2.560000e+02 : f32
    %94 = vector.broadcast %cst_91 : f32 to vector<1x32xf32>
    %95 = arith.divf %89, %94 : vector<1x32xf32>
    %cst_92 = arith.constant 2.560000e+02 : f32
    %96 = vector.broadcast %cst_92 : f32 to vector<1x32xf32>
    %97 = arith.divf %93, %96 : vector<1x32xf32>
    %98 = arith.mulf %95, %95 : vector<1x32xf32>
    %99 = arith.subf %97, %98 : vector<1x32xf32>
    %cst_93 = arith.constant 0.000000e+00 : f32
    %100 = vector.broadcast %cst_93 : f32 to vector<1x32xf32>
    %101 = arith.maximumf %99, %100 : vector<1x32xf32>
    %cst_94 = arith.constant 9.99999974E-6 : f32
    %102 = vector.broadcast %cst_94 : f32 to vector<1x32xf32>
    %103 = arith.addf %101, %102 : vector<1x32xf32>
    %104 = math.rsqrt %103 : vector<1x32xf32>
    %c0_95 = arith.constant 0 : index
    %c0_96 = arith.constant 0 : index
    %105 = vector.load %arg4[%c0_95, %c0_96] : memref<1x32xf32, #tpu.memory_space<vmem>>, vector<1x32xf32>
    %106 = arith.mulf %104, %105 : vector<1x32xf32>
    %c0_97 = arith.constant 0 : index
    %c0_98 = arith.constant 0 : index
    %107 = vector.load %arg5[%c0_97, %c0_98] : memref<1x32xf32, #tpu.memory_space<vmem>>, vector<1x32xf32>
    %108 = arith.mulf %95, %106 : vector<1x32xf32>
    %109 = arith.subf %107, %108 : vector<1x32xf32>
    %110 = vector.broadcast %106 : vector<1x32xf32> to vector<64x32xf32>
    %111 = arith.mulf %16, %110 : vector<64x32xf32>
    %112 = vector.broadcast %109 : vector<1x32xf32> to vector<64x32xf32>
    %113 = arith.addf %111, %112 : vector<64x32xf32>
    %cst_99 = arith.constant 0.000000e+00 : f32
    %114 = vector.broadcast %cst_99 : f32 to vector<64x32xf32>
    %115 = arith.cmpf oge, %113, %114 : vector<64x32xf32>
    %cst_100 = arith.constant 1.000000e-01 : f32
    %116 = vector.broadcast %cst_100 : f32 to vector<64x32xf32>
    %117 = arith.mulf %113, %116 : vector<64x32xf32>
    %118 = arith.select %115, %113, %117 : vector<64x32xi1>, vector<64x32xf32>
    %119 = arith.truncf %118 : vector<64x32xf32> to vector<64x32xbf16>
    %c0_101 = arith.constant 0 : index
    %c0_102 = arith.constant 0 : index
    %c0_103 = arith.constant 0 : index
    %c0_104 = arith.constant 0 : index
    %120 = vector.load %arg6[%c0_101, %c0_102, %c0_103, %c0_104] : memref<1x4x64x32xbf16, #tpu.memory_space<vmem>>, vector<1x1x64x32xbf16>
    %121 = vector.shape_cast %120 : vector<1x1x64x32xbf16> to vector<64x32xbf16>
    %122 = vector.shape_cast %119 : vector<64x32xbf16> to vector<1x1x64x32xbf16>
    tpu.vector_store %arg6[%c0_101, %c0_102, %c0_103, %c0_104], %122 {strides = array<i32>} : memref<1x4x64x32xbf16, #tpu.memory_space<vmem>>, vector<1x1x64x32xbf16>,
    %123 = vector.broadcast %106 : vector<1x32xf32> to vector<64x32xf32>
    %124 = arith.mulf %33, %123 : vector<64x32xf32>
    %125 = vector.broadcast %109 : vector<1x32xf32> to vector<64x32xf32>
    %126 = arith.addf %124, %125 : vector<64x32xf32>
    %cst_105 = arith.constant 0.000000e+00 : f32
    %127 = vector.broadcast %cst_105 : f32 to vector<64x32xf32>
    %128 = arith.cmpf oge, %126, %127 : vector<64x32xf32>
    %cst_106 = arith.constant 1.000000e-01 : f32
    %129 = vector.broadcast %cst_106 : f32 to vector<64x32xf32>
    %130 = arith.mulf %126, %129 : vector<64x32xf32>
    %131 = arith.select %128, %126, %130 : vector<64x32xi1>, vector<64x32xf32>
    %132 = arith.truncf %131 : vector<64x32xf32> to vector<64x32xbf16>
    %c0_107 = arith.constant 0 : index
    %c1_108 = arith.constant 1 : index
    %c0_109 = arith.constant 0 : index
    %c0_110 = arith.constant 0 : index
    %133 = vector.load %arg6[%c0_107, %c1_108, %c0_109, %c0_110] : memref<1x4x64x32xbf16, #tpu.memory_space<vmem>>, vector<1x1x64x32xbf16>
    %134 = vector.shape_cast %133 : vector<1x1x64x32xbf16> to vector<64x32xbf16>
    %135 = vector.shape_cast %132 : vector<64x32xbf16> to vector<1x1x64x32xbf16>
    tpu.vector_store %arg6[%c0_107, %c1_108, %c0_109, %c0_110], %135 {strides = array<i32>} : memref<1x4x64x32xbf16, #tpu.memory_space<vmem>>, vector<1x1x64x32xbf16>,
    %136 = vector.broadcast %106 : vector<1x32xf32> to vector<64x32xf32>
    %137 = arith.mulf %50, %136 : vector<64x32xf32>
    %138 = vector.broadcast %109 : vector<1x32xf32> to vector<64x32xf32>
    %139 = arith.addf %137, %138 : vector<64x32xf32>
    %cst_111 = arith.constant 0.000000e+00 : f32
    %140 = vector.broadcast %cst_111 : f32 to vector<64x32xf32>
    %141 = arith.cmpf oge, %139, %140 : vector<64x32xf32>
    %cst_112 = arith.constant 1.000000e-01 : f32
    %142 = vector.broadcast %cst_112 : f32 to vector<64x32xf32>
    %143 = arith.mulf %139, %142 : vector<64x32xf32>
    %144 = arith.select %141, %139, %143 : vector<64x32xi1>, vector<64x32xf32>
    %145 = arith.truncf %144 : vector<64x32xf32> to vector<64x32xbf16>
    %c0_113 = arith.constant 0 : index
    %c2_114 = arith.constant 2 : index
    %c0_115 = arith.constant 0 : index
    %c0_116 = arith.constant 0 : index
    %146 = vector.load %arg6[%c0_113, %c2_114, %c0_115, %c0_116] : memref<1x4x64x32xbf16, #tpu.memory_space<vmem>>, vector<1x1x64x32xbf16>
    %147 = vector.shape_cast %146 : vector<1x1x64x32xbf16> to vector<64x32xbf16>
    %148 = vector.shape_cast %145 : vector<64x32xbf16> to vector<1x1x64x32xbf16>
    tpu.vector_store %arg6[%c0_113, %c2_114, %c0_115, %c0_116], %148 {strides = array<i32>} : memref<1x4x64x32xbf16, #tpu.memory_space<vmem>>, vector<1x1x64x32xbf16>,
    %149 = vector.broadcast %106 : vector<1x32xf32> to vector<64x32xf32>
    %150 = arith.mulf %67, %149 : vector<64x32xf32>
    %151 = vector.broadcast %109 : vector<1x32xf32> to vector<64x32xf32>
    %152 = arith.addf %150, %151 : vector<64x32xf32>
    %cst_117 = arith.constant 0.000000e+00 : f32
    %153 = vector.broadcast %cst_117 : f32 to vector<64x32xf32>
    %154 = arith.cmpf oge, %152, %153 : vector<64x32xf32>
    %cst_118 = arith.constant 1.000000e-01 : f32
    %155 = vector.broadcast %cst_118 : f32 to vector<64x32xf32>
    %156 = arith.mulf %152, %155 : vector<64x32xf32>
    %157 = arith.select %154, %152, %156 : vector<64x32xi1>, vector<64x32xf32>
    %158 = arith.truncf %157 : vector<64x32xf32> to vector<64x32xbf16>
    %c0_119 = arith.constant 0 : index
    %c3_120 = arith.constant 3 : index
    %c0_121 = arith.constant 0 : index
    %c0_122 = arith.constant 0 : index
    %159 = vector.load %arg6[%c0_119, %c3_120, %c0_121, %c0_122] : memref<1x4x64x32xbf16, #tpu.memory_space<vmem>>, vector<1x1x64x32xbf16>
    %160 = vector.shape_cast %159 : vector<1x1x64x32xbf16> to vector<64x32xbf16>
    %161 = vector.shape_cast %158 : vector<64x32xbf16> to vector<1x1x64x32xbf16>
    tpu.vector_store %arg6[%c0_119, %c3_120, %c0_121, %c0_122], %161 {strides = array<i32>} : memref<1x4x64x32xbf16, #tpu.memory_space<vmem>>, vector<1x1x64x32xbf16>,
    return
  }
  func.func @transform_0(%arg0: i32) -> (i32, i32, i32, i32) {
    %c0_i32 = arith.constant 0 : i32
    %c0_i32_0 = arith.constant 0 : i32
    %c0_i32_1 = arith.constant 0 : i32
    %c0_i32_2 = arith.constant 0 : i32
    return %arg0, %c0_i32, %c0_i32_0, %c0_i32_1 : i32, i32, i32, i32
  }
  func.func @transform_1(%arg0: i32) -> (i32, i32, i32) {
    %c0_i32 = arith.constant 0 : i32
    %c0_i32_0 = arith.constant 0 : i32
    %c0_i32_1 = arith.constant 0 : i32
    %c0_i32_2 = arith.constant 0 : i32
    return %c0_i32, %c0_i32_0, %c0_i32_1 : i32, i32, i32
  }
  func.func @transform_2(%arg0: i32) -> (i32, i32) {
    %c0_i32 = arith.constant 0 : i32
    %c0_i32_0 = arith.constant 0 : i32
    %c0_i32_1 = arith.constant 0 : i32
    return %c0_i32, %c0_i32_0 : i32, i32
  }
  func.func @transform_3(%arg0: i32) -> (i32, i32) {
    %c0_i32 = arith.constant 0 : i32
    %c0_i32_0 = arith.constant 0 : i32
    %c0_i32_1 = arith.constant 0 : i32
    return %c0_i32, %c0_i32_0 : i32, i32
  }
  func.func @transform_4(%arg0: i32) -> (i32, i32) {
    %c0_i32 = arith.constant 0 : i32
    %c0_i32_0 = arith.constant 0 : i32
    %c0_i32_1 = arith.constant 0 : i32
    return %c0_i32, %c0_i32_0 : i32, i32
  }
  func.func @transform_5(%arg0: i32) -> (i32, i32, i32, i32) {
    %c0_i32 = arith.constant 0 : i32
    %c0_i32_0 = arith.constant 0 : i32
    %c0_i32_1 = arith.constant 0 : i32
    %c0_i32_2 = arith.constant 0 : i32
    return %arg0, %c0_i32, %c0_i32_0, %c0_i32_1 : i32, i32, i32, i32
  }
}

module attributes {stable_mosaic.version = 11 : i64} {
  func.func @_conv3x3_lrelu_kernel(%arg0: i32, %arg1: memref<1x18x18x16xf32, #tpu.memory_space<vmem>>, %arg2: memref<144x16xbf16, #tpu.memory_space<vmem>>, %arg3: memref<1x16xf32, #tpu.memory_space<vmem>>, %arg4: memref<1x256x16xf32, #tpu.memory_space<vmem>>) attributes {dimension_semantics = [#tpu.dimension_semantics<parallel>], iteration_bounds = array<i64: 2>, scalar_prefetch = 0 : i64, scratch_operands = 0 : i64, tpu.core_type = #tpu.core_type<tc>, window_params = [{transform_indices = @transform_0, window_bounds = array<i64: 1, 18, 18, 16>}, {pipeline_mode = #tpu.pipeline_mode<synchronous>, transform_indices = @transform_1, window_bounds = array<i64: 144, 16>}, {pipeline_mode = #tpu.pipeline_mode<synchronous>, transform_indices = @transform_2, window_bounds = array<i64: 1, 16>}, {transform_indices = @transform_3, window_bounds = array<i64: 1, 256, 16>}]} {
    %c0 = arith.constant 0 : index
    %c0_0 = arith.constant 0 : index
    %c0_1 = arith.constant 0 : index
    %c0_2 = arith.constant 0 : index
    %0 = vector.load %arg1[%c0, %c0_0, %c0_1, %c0_2] : memref<1x18x18x16xf32, #tpu.memory_space<vmem>>, vector<1x16x16x16xf32>
    %1 = vector.shape_cast %0 : vector<1x16x16x16xf32> to vector<16x16x16xf32>
    %c0_3 = arith.constant 0 : index
    %c0_4 = arith.constant 0 : index
    %c1 = arith.constant 1 : index
    %c0_5 = arith.constant 0 : index
    %2 = vector.load %arg1[%c0_3, %c0_4, %c1, %c0_5] : memref<1x18x18x16xf32, #tpu.memory_space<vmem>>, vector<1x16x16x16xf32>
    %3 = vector.shape_cast %2 : vector<1x16x16x16xf32> to vector<16x16x16xf32>
    %c0_6 = arith.constant 0 : index
    %c0_7 = arith.constant 0 : index
    %c2 = arith.constant 2 : index
    %c0_8 = arith.constant 0 : index
    %4 = vector.load %arg1[%c0_6, %c0_7, %c2, %c0_8] : memref<1x18x18x16xf32, #tpu.memory_space<vmem>>, vector<1x16x16x16xf32>
    %5 = vector.shape_cast %4 : vector<1x16x16x16xf32> to vector<16x16x16xf32>
    %c0_9 = arith.constant 0 : index
    %c1_10 = arith.constant 1 : index
    %c0_11 = arith.constant 0 : index
    %c0_12 = arith.constant 0 : index
    %6 = vector.load %arg1[%c0_9, %c1_10, %c0_11, %c0_12] : memref<1x18x18x16xf32, #tpu.memory_space<vmem>>, vector<1x16x16x16xf32>
    %7 = vector.shape_cast %6 : vector<1x16x16x16xf32> to vector<16x16x16xf32>
    %c0_13 = arith.constant 0 : index
    %c1_14 = arith.constant 1 : index
    %c1_15 = arith.constant 1 : index
    %c0_16 = arith.constant 0 : index
    %8 = vector.load %arg1[%c0_13, %c1_14, %c1_15, %c0_16] : memref<1x18x18x16xf32, #tpu.memory_space<vmem>>, vector<1x16x16x16xf32>
    %9 = vector.shape_cast %8 : vector<1x16x16x16xf32> to vector<16x16x16xf32>
    %c0_17 = arith.constant 0 : index
    %c1_18 = arith.constant 1 : index
    %c2_19 = arith.constant 2 : index
    %c0_20 = arith.constant 0 : index
    %10 = vector.load %arg1[%c0_17, %c1_18, %c2_19, %c0_20] : memref<1x18x18x16xf32, #tpu.memory_space<vmem>>, vector<1x16x16x16xf32>
    %11 = vector.shape_cast %10 : vector<1x16x16x16xf32> to vector<16x16x16xf32>
    %c0_21 = arith.constant 0 : index
    %c2_22 = arith.constant 2 : index
    %c0_23 = arith.constant 0 : index
    %c0_24 = arith.constant 0 : index
    %12 = vector.load %arg1[%c0_21, %c2_22, %c0_23, %c0_24] : memref<1x18x18x16xf32, #tpu.memory_space<vmem>>, vector<1x16x16x16xf32>
    %13 = vector.shape_cast %12 : vector<1x16x16x16xf32> to vector<16x16x16xf32>
    %c0_25 = arith.constant 0 : index
    %c2_26 = arith.constant 2 : index
    %c1_27 = arith.constant 1 : index
    %c0_28 = arith.constant 0 : index
    %14 = vector.load %arg1[%c0_25, %c2_26, %c1_27, %c0_28] : memref<1x18x18x16xf32, #tpu.memory_space<vmem>>, vector<1x16x16x16xf32>
    %15 = vector.shape_cast %14 : vector<1x16x16x16xf32> to vector<16x16x16xf32>
    %c0_29 = arith.constant 0 : index
    %c2_30 = arith.constant 2 : index
    %c2_31 = arith.constant 2 : index
    %c0_32 = arith.constant 0 : index
    %16 = vector.load %arg1[%c0_29, %c2_30, %c2_31, %c0_32] : memref<1x18x18x16xf32, #tpu.memory_space<vmem>>, vector<1x16x16x16xf32>
    %17 = vector.shape_cast %16 : vector<1x16x16x16xf32> to vector<16x16x16xf32>
    %18 = tpu.concatenate %1, %3, %5, %7, %9, %11, %13, %15, %17 in 2 : vector<16x16x16xf32>, vector<16x16x16xf32>, vector<16x16x16xf32>, vector<16x16x16xf32>, vector<16x16x16xf32>, vector<16x16x16xf32>, vector<16x16x16xf32>, vector<16x16x16xf32>, vector<16x16x16xf32> -> vector<16x16x144xf32>
    %19 = vector.shape_cast %18 : vector<16x16x144xf32> to vector<256x144xf32>
    %20 = arith.truncf %19 : vector<256x144xf32> to vector<256x144xbf16>
    %c0_33 = arith.constant 0 : index
    %c0_34 = arith.constant 0 : index
    %21 = vector.load %arg2[%c0_33, %c0_34] : memref<144x16xbf16, #tpu.memory_space<vmem>>, vector<144x16xbf16>
    %cst = arith.constant dense<0.000000e+00> : vector<256x16xf32>
    %22 = tpu.matmul %20, %21, %cst {dimension_numbers = #tpu.dot_dimension_numbers<[1], [0], [0], [1], [0, 0, 1, 1], [], []>} : vector<256x144xbf16>, vector<144x16xbf16>, vector<256x16xf32> -> vector<256x16xf32>
    %c0_35 = arith.constant 0 : index
    %c0_36 = arith.constant 0 : index
    %23 = vector.load %arg3[%c0_35, %c0_36] : memref<1x16xf32, #tpu.memory_space<vmem>>, vector<1x16xf32>
    %24 = vector.broadcast %23 : vector<1x16xf32> to vector<256x16xf32>
    %25 = arith.addf %22, %24 : vector<256x16xf32>
    %cst_37 = arith.constant 0.000000e+00 : f32
    %26 = vector.broadcast %cst_37 : f32 to vector<256x16xf32>
    %27 = arith.cmpf oge, %25, %26 : vector<256x16xf32>
    %cst_38 = arith.constant 1.000000e-01 : f32
    %28 = vector.broadcast %cst_38 : f32 to vector<256x16xf32>
    %29 = arith.mulf %25, %28 : vector<256x16xf32>
    %30 = arith.select %27, %25, %29 : vector<256x16xi1>, vector<256x16xf32>
    %c0_39 = arith.constant 0 : index
    %c0_40 = arith.constant 0 : index
    %c0_41 = arith.constant 0 : index
    %31 = vector.load %arg4[%c0_39, %c0_40, %c0_41] : memref<1x256x16xf32, #tpu.memory_space<vmem>>, vector<1x256x16xf32>
    %32 = vector.shape_cast %31 : vector<1x256x16xf32> to vector<256x16xf32>
    %33 = vector.shape_cast %30 : vector<256x16xf32> to vector<1x256x16xf32>
    tpu.vector_store %arg4[%c0_39, %c0_40, %c0_41], %33 {strides = array<i32>} : memref<1x256x16xf32, #tpu.memory_space<vmem>>, vector<1x256x16xf32>,
    return
  }
  func.func @transform_0(%arg0: i32) -> (i32, i32, i32, i32) {
    %c0_i32 = arith.constant 0 : i32
    %c0_i32_0 = arith.constant 0 : i32
    %c0_i32_1 = arith.constant 0 : i32
    %c0_i32_2 = arith.constant 0 : i32
    return %arg0, %c0_i32, %c0_i32_0, %c0_i32_1 : i32, i32, i32, i32
  }
  func.func @transform_1(%arg0: i32) -> (i32, i32) {
    %c0_i32 = arith.constant 0 : i32
    %c0_i32_0 = arith.constant 0 : i32
    %c0_i32_1 = arith.constant 0 : i32
    return %c0_i32, %c0_i32_0 : i32, i32
  }
  func.func @transform_2(%arg0: i32) -> (i32, i32) {
    %c0_i32 = arith.constant 0 : i32
    %c0_i32_0 = arith.constant 0 : i32
    %c0_i32_1 = arith.constant 0 : i32
    return %c0_i32, %c0_i32_0 : i32, i32
  }
  func.func @transform_3(%arg0: i32) -> (i32, i32, i32) {
    %c0_i32 = arith.constant 0 : i32
    %c0_i32_0 = arith.constant 0 : i32
    %c0_i32_1 = arith.constant 0 : i32
    return %arg0, %c0_i32, %c0_i32_0 : i32, i32, i32
  }
}

</mosaic_0001>

<llo_original>
// kernel: up_forward.5
$region0: #{up_forward.5}
  #allocation0 [shape = 'u32[]', space=smem, size = 0x4, offset = 0x4, fixed_abs, tag = 'smem constant byte address 0x4 - core index']
  #allocation1 [shape = 'u32[144,128]{1,0:T(1,128)}', space=vmem, size = 0x12000, scoped, tag = 'internal scratch']
  %s0 = inlined_call_operand.vmem [shape: f32[2,18,18,16], index: 0, kind: input, shape index: {}]
  %s1 = inlined_call_operand.vmem [shape: bf16[144,16], index: 1, kind: input, shape index: {}]
  %s2 = inlined_call_operand.vmem [shape: f32[1,16], index: 2, kind: input, shape index: {}]
  %s3 = inlined_call_operand.vmem [shape: f32[2,256,16], index: 3, kind: output, shape index: {}]
  %s4 = sld [smem:[#allocation0]]
  $region45: #{up_forward.5} parent=0
    _
  %s6 = ssub.s32 1, %s4
  %s7 = scalar_select 0, %s6, %s4
  loop: start=0, step=1, limit=4
  $region2: #{up_forward.5} parent=0 // loop_pre_header
    _
  $region3: #{up_forward.5} parent=0 // loop_header
    %s9 = sphi 0, %s13
    %p10 = scmp.ge.s32.totalorder %s9, 4
    %s19 = sphi 0, %s21
    %s22 = sphi 0, %s19
    %s23 = sphi 0, %s22
    %s39 = sphi 0, %s23
    %s43 = sphi 0, %s43
    %s45 = sphi 0, %s43
    %s46 = sphi 0, %s45
    %s60 = sphi 0, %s46
    %s64 = sphi 0, %s64
    %s66 = sphi 0, %s64
    %s67 = sphi 0, %s66
    %s81 = sphi 0, %s67
    %s87 = sphi 0, %s89
    %s90 = sphi 0, %s87
    %s91 = sphi 0, %s90
    %s107 = sphi 0, %s91
  $region4: #{up_forward.5} parent=0 // loop_header_branch
    %12 = sbr.rel (%p10) target = $region8
  $region5: #{up_forward.5} parent=0 // loop_body
    %s14 = ssub.s32 %s9, 1
    %s15 = ssub.s32 %s9, 2
    %s16 = sadd.s32 %s9, 1
    %s17 = ssub.s32 %s9, %s16
    %p18 = scmp.eq.s32.totalorder %s17, 0
    %s20 = sadd.s32 %s19, 1
    %s21 = scalar_select %p18, %s19, %s20
    %p24 = pneg %p18
    %p25 = scmp.eq.s32.totalorder %s9, 1
    %p26 = por %p24, %p25
    %p27 = scmp.ne.s32.totalorder %s19, %s22
    %p28 = scmp.eq.s32.totalorder %s9, 0
    %p29 = por %p27, %p28
    %p30 = scmp.ne.s32.totalorder %s19, %s22
    %p31 = scmp.eq.s32.totalorder %s14, 1
    %p32 = por %p30, %p31
    %p33 = scmp.ne.s32.totalorder %s22, %s23
    %p34 = scmp.eq.s32.totalorder %s14, 0
    %p35 = por %p33, %p34
    %p36 = scmp.ne.s32.totalorder %s22, %s23
    %p37 = scmp.eq.s32.totalorder %s15, 1
    %p38 = por %p36, %p37
    %p40 = scmp.ne.s32.totalorder %s23, %s39
    %p41 = scmp.eq.s32.totalorder %s15, 0
    %p42 = por %p40, %p41
    %s44 = sadd.s32 %s43, 1
    %p47 = scmp.eq.s32.totalorder %s9, 1
    %p48 = scmp.ne.s32.totalorder %s43, %s45
    %p49 = scmp.eq.s32.totalorder %s9, 0
    %p50 = por %p48, %p49
    %p51 = scmp.ne.s32.totalorder %s43, %s45
    %p52 = scmp.eq.s32.totalorder %s14, 1
    %p53 = por %p51, %p52
    %p54 = scmp.ne.s32.totalorder %s45, %s46
    %p55 = scmp.eq.s32.totalorder %s14, 0
    %p56 = por %p54, %p55
    %p57 = scmp.ne.s32.totalorder %s45, %s46
    %p58 = scmp.eq.s32.totalorder %s15, 1
    %p59 = por %p57, %p58
    %p61 = scmp.ne.s32.totalorder %s46, %s60
    %p62 = scmp.eq.s32.totalorder %s15, 0
    %p63 = por %p61, %p62
    %s65 = sadd.s32 %s64, 1
    %p68 = scmp.eq.s32.totalorder %s9, 1
    %p69 = scmp.ne.s32.totalorder %s64, %s66
    %p70 = scmp.eq.s32.totalorder %s9, 0
    %p71 = por %p69, %p70
    %p72 = scmp.ne.s32.totalorder %s64, %s66
    %p73 = scmp.eq.s32.totalorder %s14, 1
    %p74 = por %p72, %p73
    %p75 = scmp.ne.s32.totalorder %s66, %s67
    %p76 = scmp.eq.s32.totalorder %s14, 0
    %p77 = por %p75, %p76
    %p78 = scmp.ne.s32.totalorder %s66, %s67
    %p79 = scmp.eq.s32.totalorder %s15, 1
    %p80 = por %p78, %p79
    %p82 = scmp.ne.s32.totalorder %s67, %s81
    %p83 = scmp.eq.s32.totalorder %s15, 0
    %p84 = por %p82, %p83
    %s85 = ssub.s32 %s9, %s16
    %p86 = scmp.eq.s32.totalorder %s85, 0
    %s88 = sadd.s32 %s87, 1
    %s89 = scalar_select %p86, %s87, %s88
    %p92 = pneg %p86
    %p93 = scmp.eq.s32.totalorder %s9, 1
    %p94 = por %p92, %p93
    %p95 = scmp.ne.s32.totalorder %s87, %s90
    %p96 = scmp.eq.s32.totalorder %s9, 0
    %p97 = por %p95, %p96
    %p98 = scmp.ne.s32.totalorder %s87, %s90
    %p99 = scmp.eq.s32.totalorder %s14, 1
    %p100 = por %p98, %p99
    %p101 = scmp.ne.s32.totalorder %s90, %s91
    %p102 = scmp.eq.s32.totalorder %s14, 0
    %p103 = por %p101, %p102
    %p104 = scmp.ne.s32.totalorder %s90, %s91
    %p105 = scmp.eq.s32.totalorder %s15, 1
    %p106 = por %p104, %p105
    %p108 = scmp.ne.s32.totalorder %s91, %s107
    %p109 = scmp.eq.s32.totalorder %s15, 0
    %p110 = por %p108, %p109
    %p111 = scmp.le.s32.totalorder 1, %s9
    %p112 = scmp.lt.s32.totalorder %s9, 3
    %p113 = pnand %p111, %p112
    %p114 = pneg %p113
    // Predicated region
    $region9: #{up_forward.5} parent=5 // pred_check
      _
    $region10: #{up_forward.5} parent=5 // pred_check_branch
      %116 = sbr.rel (%p113) target = $region12
    $region11: #{up_forward.5} parent=5 // pred_region
      %s117 = ssub.s32 %s9, 1
      // Predicated region
      $region13: #{up_forward.5} parent=11 // pred_check
        %p118 = pneg %p56
      $region14: #{up_forward.5} parent=11 // pred_check_branch
        %120 = sbr.rel (%p118) target = $region16
      $region15: #{up_forward.5} parent=11 // pred_region
        _
      $region16: #{up_forward.5} parent=11 // pred_fallthru
        _
      // Predicated region
      $region17: #{up_forward.5} parent=11 // pred_check
        %p121 = pneg %p77
      $region18: #{up_forward.5} parent=11 // pred_check_branch
        %123 = sbr.rel (%p121) target = $region20
      $region19: #{up_forward.5} parent=11 // pred_region
        _
      $region20: #{up_forward.5} parent=11 // pred_fallthru
        _
    $region12: #{up_forward.5} parent=5 // pred_fallthru
      _
    %p124 = scmp.lt.s32.totalorder %s9, 2
    // Predicated region
    $region21: #{up_forward.5} parent=5 // pred_check
      %p125 = pneg %p124
    $region22: #{up_forward.5} parent=5 // pred_check_branch
      %127 = sbr.rel (%p125) target = $region24
    $region23: #{up_forward.5} parent=5 // pred_region
      // Predicated region
      $region25: #{up_forward.5} parent=23 // pred_check
        %p128 = pneg %p29
      $region26: #{up_forward.5} parent=23 // pred_check_branch
        %130 = sbr.rel (%p128) target = $region28
      $region27: #{up_forward.5} parent=23 // pred_region
        %p131 = scmp.lt.s32.totalorder %s9, 1
        %s132 = scalar_select %p131, %s9, 1
        %s133 = smul.addr %s132, 54
        %s134 = smul.addr %s133, 8
        %s135 = scalar_lea.vmem %s0, %s134
      $region28: #{up_forward.5} parent=23 // pred_fallthru
        _
    $region24: #{up_forward.5} parent=5 // pred_fallthru
      _
    %p136 = scmp.le.s32.totalorder 1, %s9
    %p137 = scmp.lt.s32.totalorder %s9, 3
    %p138 = pnand %p136, %p137
    %p139 = pneg %p138
    // Predicated region
    $region29: #{up_forward.5} parent=5 // pred_check
      _
    $region30: #{up_forward.5} parent=5 // pred_check_branch
      %141 = sbr.rel (%p138) target = $region32
    $region31: #{up_forward.5} parent=5 // pred_region
      %s142 = ssub.s32 %s9, 1
      %p143 = scmp.lt.s32.totalorder %s14, 1
      %s144 = scalar_select %p143, %s14, 1
      %s145 = smul.addr %s144, 54
      %s146 = smul.addr %s145, 8
      %s147 = scalar_lea.vmem %s0, %s146
      %p148 = pneg %p35
      %p149 = pneg %p32
      %p150 = pneg %p56
      %p151 = pneg %p53
      %p152 = pneg %p77
      %p153 = pneg %p74
      %p154 = pneg %p103
      %p155 = pneg %p100
      %p156 = scmp.lt.s32.totalorder %s14, 1
      %s157 = scalar_select %p156, %s14, 1
      %s158 = smul.addr %s157, 32
      %s159 = smul.addr %s158, 8
      %s160 = scalar_lea.vmem %s3, %s159
      %p161 = scmp.lt.s32.totalorder %s14, 1
      %s162 = scalar_select %p161, %s14, 1
      %s163 = smul.addr %s162, 54
      %s164 = smul.addr %s163, 8
      %s165 = scalar_lea.vmem %s0, %s164
      %p166 = scmp.lt.s32.totalorder %s14, 1
      %s167 = scalar_select %p166, %s14, 1
      %s168 = smul.addr %s167, 32
      %s169 = smul.addr %s168, 8
      %s170 = scalar_lea.vmem %s3, %s169
      %v172 = vld [vmem:[%s165] sm:$0xff]
      %v173 = vld [vmem:[%s165 + $0x8] sm:$0xff]
      %v174 = vld [vmem:[%s165 + $0x18] sm:$0xff]
      %v175 = vld [vmem:[%s165 + $0x20] sm:$0xff]
      %v176 = vld [vmem:[%s165 + $0x30] sm:$0xff]
      %v177 = vld [vmem:[%s165 + $0x38] sm:$0xff]
      %v178 = vld [vmem:[%s165 + $0x48] sm:$0xff]
      %v179 = vld [vmem:[%s165 + $0x50] sm:$0xff]
      %v180 = vld [vmem:[%s165 + $0x60] sm:$0xff]
      %v181 = vld [vmem:[%s165 + $0x68] sm:$0xff]
      %v182 = vld [vmem:[%s165 + $0x78] sm:$0xff]
      %v183 = vld [vmem:[%s165 + $0x80] sm:$0xff]
      %v184 = vld [vmem:[%s165 + $0x90] sm:$0xff]
      %v185 = vld [vmem:[%s165 + $0x98] sm:$0xff]
      %v186 = vld [vmem:[%s165 + $0xa8] sm:$0xff]
      %v187 = vld [vmem:[%s165 + $0xb0] sm:$0xff]
      %v188 = vld [vmem:[%s165 + $0xc0] sm:$0xff]
      %v189 = vld [vmem:[%s165 + $0xc8] sm:$0xff]
      %v190 = vld [vmem:[%s165 + $0xd8] sm:$0xff]
      %v191 = vld [vmem:[%s165 + $0xe0] sm:$0xff]
      %v192 = vld [vmem:[%s165 + $0xf0] sm:$0xff]
      %v193 = vld [vmem:[%s165 + $0xf8] sm:$0xff]
      %v194 = vld [vmem:[%s165 + $0x108] sm:$0xff]
      %v195 = vld [vmem:[%s165 + $0x110] sm:$0xff]
      %v196 = vld [vmem:[%s165 + $0x120] sm:$0xff]
      %v197 = vld [vmem:[%s165 + $0x128] sm:$0xff]
      %v198 = vld [vmem:[%s165 + $0x138] sm:$0xff]
      %v199 = vld [vmem:[%s165 + $0x140] sm:$0xff]
      %v200 = vld [vmem:[%s165 + $0x150] sm:$0xff]
      %v201 = vld [vmem:[%s165 + $0x158] sm:$0xff]
      %v202 = vld [vmem:[%s165 + $0x168] sm:$0xff]
      %v203 = vld [vmem:[%s165 + $0x170] sm:$0xff]
      %v204 = vld [vmem:[%s165 + $0x1] sm:$0xff]
      %v205 = vld [vmem:[%s165 + $0x9] sm:$0xff]
      %v206 = vld [vmem:[%s165 + $0x19] sm:$0xff]
      %v207 = vld [vmem:[%s165 + $0x21] sm:$0xff]
      %v208 = vld [vmem:[%s165 + $0x31] sm:$0xff]
      %v209 = vld [vmem:[%s165 + $0x39] sm:$0xff]
      %v210 = vld [vmem:[%s165 + $0x49] sm:$0xff]
      %v211 = vld [vmem:[%s165 + $0x51] sm:$0xff]
      %v212 = vld [vmem:[%s165 + $0x61] sm:$0xff]
      %v213 = vld [vmem:[%s165 + $0x69] sm:$0xff]
      %v214 = vld [vmem:[%s165 + $0x79] sm:$0xff]
      %v215 = vld [vmem:[%s165 + $0x81] sm:$0xff]
      %v216 = vld [vmem:[%s165 + $0x91] sm:$0xff]
      %v217 = vld [vmem:[%s165 + $0x99] sm:$0xff]
      %v218 = vld [vmem:[%s165 + $0xa9] sm:$0xff]
      %v219 = vld [vmem:[%s165 + $0xb1] sm:$0xff]
      %v220 = vld [vmem:[%s165 + $0xc1] sm:$0xff]
      %v221 = vld [vmem:[%s165 + $0xc9] sm:$0xff]
      %v222 = vld [vmem:[%s165 + $0xd9] sm:$0xff]
      %v223 = vld [vmem:[%s165 + $0xe1] sm:$0xff]
      %v224 = vld [vmem:[%s165 + $0xf1] sm:$0xff]
      %v225 = vld [vmem:[%s165 + $0xf9] sm:$0xff]
      %v226 = vld [vmem:[%s165 + $0x109] sm:$0xff]
      %v227 = vld [vmem:[%s165 + $0x111] sm:$0xff]
      %v228 = vld [vmem:[%s165 + $0x121] sm:$0xff]
      %v229 = vld [vmem:[%s165 + $0x129] sm:$0xff]
      %v230 = vld [vmem:[%s165 + $0x139] sm:$0xff]
      %v231 = vld [vmem:[%s165 + $0x141] sm:$0xff]
      %v232 = vld [vmem:[%s165 + $0x151] sm:$0xff]
      %v233 = vld [vmem:[%s165 + $0x159] sm:$0xff]
      %v234 = vld [vmem:[%s165 + $0x169] sm:$0xff]
      %v235 = vld [vmem:[%s165 + $0x171] sm:$0xff]
      %v236 = vld [vmem:[%s165 + $0x2] sm:$0xff]
      %v237 = vld [vmem:[%s165 + $0xa] sm:$0xff]
      %v238 = vld [vmem:[%s165 + $0x1a] sm:$0xff]
      %v239 = vld [vmem:[%s165 + $0x22] sm:$0xff]
      %v240 = vld [vmem:[%s165 + $0x32] sm:$0xff]
      %v241 = vld [vmem:[%s165 + $0x3a] sm:$0xff]
      %v242 = vld [vmem:[%s165 + $0x4a] sm:$0xff]
      %v243 = vld [vmem:[%s165 + $0x52] sm:$0xff]
      %v244 = vld [vmem:[%s165 + $0x62] sm:$0xff]
      %v245 = vld [vmem:[%s165 + $0x6a] sm:$0xff]
      %v246 = vld [vmem:[%s165 + $0x7a] sm:$0xff]
      %v247 = vld [vmem:[%s165 + $0x82] sm:$0xff]
      %v248 = vld [vmem:[%s165 + $0x92] sm:$0xff]
      %v249 = vld [vmem:[%s165 + $0x9a] sm:$0xff]
      %v250 = vld [vmem:[%s165 + $0xaa] sm:$0xff]
      %v251 = vld [vmem:[%s165 + $0xb2] sm:$0xff]
      %v252 = vld [vmem:[%s165 + $0xc2] sm:$0xff]
      %v253 = vld [vmem:[%s165 + $0xca] sm:$0xff]
      %v254 = vld [vmem:[%s165 + $0xda] sm:$0xff]
      %v255 = vld [vmem:[%s165 + $0xe2] sm:$0xff]
      %v256 = vld [vmem:[%s165 + $0xf2] sm:$0xff]
      %v257 = vld [vmem:[%s165 + $0xfa] sm:$0xff]
      %v258 = vld [vmem:[%s165 + $0x10a] sm:$0xff]
      %v259 = vld [vmem:[%s165 + $0x112] sm:$0xff]
      %v260 = vld [vmem:[%s165 + $0x122] sm:$0xff]
      %v261 = vld [vmem:[%s165 + $0x12a] sm:$0xff]
      %v262 = vld [vmem:[%s165 + $0x13a] sm:$0xff]
      %v263 = vld [vmem:[%s165 + $0x142] sm:$0xff]
      %v264 = vld [vmem:[%s165 + $0x152] sm:$0xff]
      %v265 = vld [vmem:[%s165 + $0x15a] sm:$0xff]
      %v266 = vld [vmem:[%s165 + $0x16a] sm:$0xff]
      %v267 = vld [vmem:[%s165 + $0x172] sm:$0xff]
      %s268 = scalar_lea.vmem %s165, 24
      %v269 = vld [vmem:[%s268] sm:$0xff]
      %v270 = vld [vmem:[%s268 + $0x8] sm:$0xff]
      %v271 = vld [vmem:[%s268 + $0x18] sm:$0xff]
      %v272 = vld [vmem:[%s268 + $0x20] sm:$0xff]
      %v273 = vld [vmem:[%s268 + $0x30] sm:$0xff]
      %v274 = vld [vmem:[%s268 + $0x38] sm:$0xff]
      %v275 = vld [vmem:[%s268 + $0x48] sm:$0xff]
      %v276 = vld [vmem:[%s268 + $0x50] sm:$0xff]
      %v277 = vld [vmem:[%s268 + $0x60] sm:$0xff]
      %v278 = vld [vmem:[%s268 + $0x68] sm:$0xff]
      %v279 = vld [vmem:[%s268 + $0x78] sm:$0xff]
      %v280 = vld [vmem:[%s268 + $0x80] sm:$0xff]
      %v281 = vld [vmem:[%s268 + $0x90] sm:$0xff]
      %v282 = vld [vmem:[%s268 + $0x98] sm:$0xff]
      %v283 = vld [vmem:[%s268 + $0xa8] sm:$0xff]
      %v284 = vld [vmem:[%s268 + $0xb0] sm:$0xff]
      %v285 = vld [vmem:[%s268 + $0xc0] sm:$0xff]
      %v286 = vld [vmem:[%s268 + $0xc8] sm:$0xff]
      %v287 = vld [vmem:[%s268 + $0xd8] sm:$0xff]
      %v288 = vld [vmem:[%s268 + $0xe0] sm:$0xff]
      %v289 = vld [vmem:[%s268 + $0xf0] sm:$0xff]
      %v290 = vld [vmem:[%s268 + $0xf8] sm:$0xff]
      %v291 = vld [vmem:[%s268 + $0x108] sm:$0xff]
      %v292 = vld [vmem:[%s268 + $0x110] sm:$0xff]
      %v293 = vld [vmem:[%s268 + $0x120] sm:$0xff]
      %v294 = vld [vmem:[%s268 + $0x128] sm:$0xff]
      %v295 = vld [vmem:[%s268 + $0x138] sm:$0xff]
      %v296 = vld [vmem:[%s268 + $0x140] sm:$0xff]
      %v297 = vld [vmem:[%s268 + $0x150] sm:$0xff]
      %v298 = vld [vmem:[%s268 + $0x158] sm:$0xff]
      %v299 = vld [vmem:[%s268 + $0x168] sm:$0xff]
      %v300 = vld [vmem:[%s268 + $0x170] sm:$0xff]
      %v301 = vld [vmem:[%s268 + $0x1] sm:$0xff]
      %v302 = vld [vmem:[%s268 + $0x9] sm:$0xff]
      %v303 = vld [vmem:[%s268 + $0x19] sm:$0xff]
      %v304 = vld [vmem:[%s268 + $0x21] sm:$0xff]
      %v305 = vld [vmem:[%s268 + $0x31] sm:$0xff]
      %v306 = vld [vmem:[%s268 + $0x39] sm:$0xff]
      %v307 = vld [vmem:[%s268 + $0x49] sm:$0xff]
      %v308 = vld [vmem:[%s268 + $0x51] sm:$0xff]
      %v309 = vld [vmem:[%s268 + $0x61] sm:$0xff]
      %v310 = vld [vmem:[%s268 + $0x69] sm:$0xff]
      %v311 = vld [vmem:[%s268 + $0x79] sm:$0xff]
      %v312 = vld [vmem:[%s268 + $0x81] sm:$0xff]
      %v313 = vld [vmem:[%s268 + $0x91] sm:$0xff]
      %v314 = vld [vmem:[%s268 + $0x99] sm:$0xff]
      %v315 = vld [vmem:[%s268 + $0xa9] sm:$0xff]
      %v316 = vld [vmem:[%s268 + $0xb1] sm:$0xff]
      %v317 = vld [vmem:[%s268 + $0xc1] sm:$0xff]
      %v318 = vld [vmem:[%s268 + $0xc9] sm:$0xff]
      %v319 = vld [vmem:[%s268 + $0xd9] sm:$0xff]
      %v320 = vld [vmem:[%s268 + $0xe1] sm:$0xff]
      %v321 = vld [vmem:[%s268 + $0xf1] sm:$0xff]
      %v322 = vld [vmem:[%s268 + $0xf9] sm:$0xff]
      %v323 = vld [vmem:[%s268 + $0x109] sm:$0xff]
      %v324 = vld [vmem:[%s268 + $0x111] sm:$0xff]
      %v325 = vld [vmem:[%s268 + $0x121] sm:$0xff]
      %v326 = vld [vmem:[%s268 + $0x129] sm:$0xff]
      %v327 = vld [vmem:[%s268 + $0x139] sm:$0xff]
      %v328 = vld [vmem:[%s268 + $0x141] sm:$0xff]
      %v329 = vld [vmem:[%s268 + $0x151] sm:$0xff]
      %v330 = vld [vmem:[%s268 + $0x159] sm:$0xff]
      %v331 = vld [vmem:[%s268 + $0x169] sm:$0xff]
      %v332 = vld [vmem:[%s268 + $0x171] sm:$0xff]
      %v333 = vld [vmem:[%s268 + $0x2] sm:$0xff]
      %v334 = vld [vmem:[%s268 + $0xa] sm:$0xff]
      %v335 = vld [vmem:[%s268 + $0x1a] sm:$0xff]
      %v336 = vld [vmem:[%s268 + $0x22] sm:$0xff]
      %v337 = vld [vmem:[%s268 + $0x32] sm:$0xff]
      %v338 = vld [vmem:[%s268 + $0x3a] sm:$0xff]
      %v339 = vld [vmem:[%s268 + $0x4a] sm:$0xff]
      %v340 = vld [vmem:[%s268 + $0x52] sm:$0xff]
      %v341 = vld [vmem:[%s268 + $0x62] sm:$0xff]
      %v342 = vld [vmem:[%s268 + $0x6a] sm:$0xff]
      %v343 = vld [vmem:[%s268 + $0x7a] sm:$0xff]
      %v344 = vld [vmem:[%s268 + $0x82] sm:$0xff]
      %v345 = vld [vmem:[%s268 + $0x92] sm:$0xff]
      %v346 = vld [vmem:[%s268 + $0x9a] sm:$0xff]
      %v347 = vld [vmem:[%s268 + $0xaa] sm:$0xff]
      %v348 = vld [vmem:[%s268 + $0xb2] sm:$0xff]
      %v349 = vld [vmem:[%s268 + $0xc2] sm:$0xff]
      %v350 = vld [vmem:[%s268 + $0xca] sm:$0xff]
      %v351 = vld [vmem:[%s268 + $0xda] sm:$0xff]
      %v352 = vld [vmem:[%s268 + $0xe2] sm:$0xff]
      %v353 = vld [vmem:[%s268 + $0xf2] sm:$0xff]
      %v354 = vld [vmem:[%s268 + $0xfa] sm:$0xff]
      %v355 = vld [vmem:[%s268 + $0x10a] sm:$0xff]
      %v356 = vld [vmem:[%s268 + $0x112] sm:$0xff]
      %v357 = vld [vmem:[%s268 + $0x122] sm:$0xff]
      %v358 = vld [vmem:[%s268 + $0x12a] sm:$0xff]
      %v359 = vld [vmem:[%s268 + $0x13a] sm:$0xff]
      %v360 = vld [vmem:[%s268 + $0x142] sm:$0xff]
      %v361 = vld [vmem:[%s268 + $0x152] sm:$0xff]
      %v362 = vld [vmem:[%s268 + $0x15a] sm:$0xff]
      %v363 = vld [vmem:[%s268 + $0x16a] sm:$0xff]
      %v364 = vld [vmem:[%s268 + $0x172] sm:$0xff]
      %s365 = scalar_lea.vmem %s165, 48
      %v366 = vld [vmem:[%s365] sm:$0xff]
      %v367 = vld [vmem:[%s365 + $0x8] sm:$0xff]
      %v368 = vld [vmem:[%s365 + $0x18] sm:$0xff]
      %v369 = vld [vmem:[%s365 + $0x20] sm:$0xff]
      %v370 = vld [vmem:[%s365 + $0x30] sm:$0xff]
      %v371 = vld [vmem:[%s365 + $0x38] sm:$0xff]
      %v372 = vld [vmem:[%s365 + $0x48] sm:$0xff]
      %v373 = vld [vmem:[%s365 + $0x50] sm:$0xff]
      %v374 = vld [vmem:[%s365 + $0x60] sm:$0xff]
      %v375 = vld [vmem:[%s365 + $0x68] sm:$0xff]
      %v376 = vld [vmem:[%s365 + $0x78] sm:$0xff]
      %v377 = vld [vmem:[%s365 + $0x80] sm:$0xff]
      %v378 = vld [vmem:[%s365 + $0x90] sm:$0xff]
      %v379 = vld [vmem:[%s365 + $0x98] sm:$0xff]
      %v380 = vld [vmem:[%s365 + $0xa8] sm:$0xff]
      %v381 = vld [vmem:[%s365 + $0xb0] sm:$0xff]
      %v382 = vld [vmem:[%s365 + $0xc0] sm:$0xff]
      %v383 = vld [vmem:[%s365 + $0xc8] sm:$0xff]
      %v384 = vld [vmem:[%s365 + $0xd8] sm:$0xff]
      %v385 = vld [vmem:[%s365 + $0xe0] sm:$0xff]
      %v386 = vld [vmem:[%s365 + $0xf0] sm:$0xff]
      %v387 = vld [vmem:[%s365 + $0xf8] sm:$0xff]
      %v388 = vld [vmem:[%s365 + $0x108] sm:$0xff]
      %v389 = vld [vmem:[%s365 + $0x110] sm:$0xff]
      %v390 = vld [vmem:[%s365 + $0x120] sm:$0xff]
      %v391 = vld [vmem:[%s365 + $0x128] sm:$0xff]
      %v392 = vld [vmem:[%s365 + $0x138] sm:$0xff]
      %v393 = vld [vmem:[%s365 + $0x140] sm:$0xff]
      %v394 = vld [vmem:[%s365 + $0x150] sm:$0xff]
      %v395 = vld [vmem:[%s365 + $0x158] sm:$0xff]
      %v396 = vld [vmem:[%s365 + $0x168] sm:$0xff]
      %v397 = vld [vmem:[%s365 + $0x170] sm:$0xff]
      %v398 = vld [vmem:[%s365 + $0x1] sm:$0xff]
      %v399 = vld [vmem:[%s365 + $0x9] sm:$0xff]
      %v400 = vld [vmem:[%s365 + $0x19] sm:$0xff]
      %v401 = vld [vmem:[%s365 + $0x21] sm:$0xff]
      %v402 = vld [vmem:[%s365 + $0x31] sm:$0xff]
      %v403 = vld [vmem:[%s365 + $0x39] sm:$0xff]
      %v404 = vld [vmem:[%s365 + $0x49] sm:$0xff]
      %v405 = vld [vmem:[%s365 + $0x51] sm:$0xff]
      %v406 = vld [vmem:[%s365 + $0x61] sm:$0xff]
      %v407 = vld [vmem:[%s365 + $0x69] sm:$0xff]
      %v408 = vld [vmem:[%s365 + $0x79] sm:$0xff]
      %v409 = vld [vmem:[%s365 + $0x81] sm:$0xff]
      %v410 = vld [vmem:[%s365 + $0x91] sm:$0xff]
      %v411 = vld [vmem:[%s365 + $0x99] sm:$0xff]
      %v412 = vld [vmem:[%s365 + $0xa9] sm:$0xff]
      %v413 = vld [vmem:[%s365 + $0xb1] sm:$0xff]
      %v414 = vld [vmem:[%s365 + $0xc1] sm:$0xff]
      %v415 = vld [vmem:[%s365 + $0xc9] sm:$0xff]
      %v416 = vld [vmem:[%s365 + $0xd9] sm:$0xff]
      %v417 = vld [vmem:[%s365 + $0xe1] sm:$0xff]
      %v418 = vld [vmem:[%s365 + $0xf1] sm:$0xff]
      %v419 = vld [vmem:[%s365 + $0xf9] sm:$0xff]
      %v420 = vld [vmem:[%s365 + $0x109] sm:$0xff]
      %v421 = vld [vmem:[%s365 + $0x111] sm:$0xff]
      %v422 = vld [vmem:[%s365 + $0x121] sm:$0xff]
      %v423 = vld [vmem:[%s365 + $0x129] sm:$0xff]
      %v424 = vld [vmem:[%s365 + $0x139] sm:$0xff]
      %v425 = vld [vmem:[%s365 + $0x141] sm:$0xff]
      %v426 = vld [vmem:[%s365 + $0x151] sm:$0xff]
      %v427 = vld [vmem:[%s365 + $0x159] sm:$0xff]
      %v428 = vld [vmem:[%s365 + $0x169] sm:$0xff]
      %v429 = vld [vmem:[%s365 + $0x171] sm:$0xff]
      %v430 = vld [vmem:[%s365 + $0x2] sm:$0xff]
      %v431 = vld [vmem:[%s365 + $0xa] sm:$0xff]
      %v432 = vld [vmem:[%s365 + $0x1a] sm:$0xff]
      %v433 = vld [vmem:[%s365 + $0x22] sm:$0xff]
      %v434 = vld [vmem:[%s365 + $0x32] sm:$0xff]
      %v435 = vld [vmem:[%s365 + $0x3a] sm:$0xff]
      %v436 = vld [vmem:[%s365 + $0x4a] sm:$0xff]
      %v437 = vld [vmem:[%s365 + $0x52] sm:$0xff]
      %v438 = vld [vmem:[%s365 + $0x62] sm:$0xff]
      %v439 = vld [vmem:[%s365 + $0x6a] sm:$0xff]
      %v440 = vld [vmem:[%s365 + $0x7a] sm:$0xff]
      %v441 = vld [vmem:[%s365 + $0x82] sm:$0xff]
      %v442 = vld [vmem:[%s365 + $0x92] sm:$0xff]
      %v443 = vld [vmem:[%s365 + $0x9a] sm:$0xff]
      %v444 = vld [vmem:[%s365 + $0xaa] sm:$0xff]
      %v445 = vld [vmem:[%s365 + $0xb2] sm:$0xff]
      %v446 = vld [vmem:[%s365 + $0xc2] sm:$0xff]
      %v447 = vld [vmem:[%s365 + $0xca] sm:$0xff]
      %v448 = vld [vmem:[%s365 + $0xda] sm:$0xff]
      %v449 = vld [vmem:[%s365 + $0xe2] sm:$0xff]
      %v450 = vld [vmem:[%s365 + $0xf2] sm:$0xff]
      %v451 = vld [vmem:[%s365 + $0xfa] sm:$0xff]
      %v452 = vld [vmem:[%s365 + $0x10a] sm:$0xff]
      %v453 = vld [vmem:[%s365 + $0x112] sm:$0xff]
      %v454 = vld [vmem:[%s365 + $0x122] sm:$0xff]
      %v455 = vld [vmem:[%s365 + $0x12a] sm:$0xff]
      %v456 = vld [vmem:[%s365 + $0x13a] sm:$0xff]
      %v457 = vld [vmem:[%s365 + $0x142] sm:$0xff]
      %v458 = vld [vmem:[%s365 + $0x152] sm:$0xff]
      %v459 = vld [vmem:[%s365 + $0x15a] sm:$0xff]
      %v460 = vld [vmem:[%s365 + $0x16a] sm:$0xff]
      %v461 = vld [vmem:[%s365 + $0x172] sm:$0xff]
      %494 = vrot.lane.b32.xlu0 %v204, 16
      %v495 = vpop.permute.xlu0 %494
      %496 = vrot.lane.b32.xlu0 %v205, 16
      %v497 = vpop.permute.xlu0 %496
      %498 = vrot.lane.b32.xlu0 %v206, 16
      %v499 = vpop.permute.xlu0 %498
      %500 = vrot.lane.b32.xlu0 %v207, 16
      %v501 = vpop.permute.xlu0 %500
      %502 = vrot.lane.b32.xlu0 %v208, 16
      %v503 = vpop.permute.xlu0 %502
      %504 = vrot.lane.b32.xlu0 %v209, 16
      %v505 = vpop.permute.xlu0 %504
      %506 = vrot.lane.b32.xlu0 %v210, 16
      %v507 = vpop.permute.xlu0 %506
      %508 = vrot.lane.b32.xlu0 %v211, 16
      %v509 = vpop.permute.xlu0 %508
      %510 = vrot.lane.b32.xlu0 %v212, 16
      %v511 = vpop.permute.xlu0 %510
      %512 = vrot.lane.b32.xlu0 %v213, 16
      %v513 = vpop.permute.xlu0 %512
      %514 = vrot.lane.b32.xlu0 %v214, 16
      %v515 = vpop.permute.xlu0 %514
      %516 = vrot.lane.b32.xlu0 %v215, 16
      %v517 = vpop.permute.xlu0 %516
      %518 = vrot.lane.b32.xlu0 %v216, 16
      %v519 = vpop.permute.xlu0 %518
      %520 = vrot.lane.b32.xlu0 %v217, 16
      %v521 = vpop.permute.xlu0 %520
      %522 = vrot.lane.b32.xlu0 %v218, 16
      %v523 = vpop.permute.xlu0 %522
      %524 = vrot.lane.b32.xlu0 %v219, 16
      %v525 = vpop.permute.xlu0 %524
      %526 = vrot.lane.b32.xlu0 %v220, 16
      %v527 = vpop.permute.xlu0 %526
      %528 = vrot.lane.b32.xlu0 %v221, 16
      %v529 = vpop.permute.xlu0 %528
      %530 = vrot.lane.b32.xlu0 %v222, 16
      %v531 = vpop.permute.xlu0 %530
      %532 = vrot.lane.b32.xlu0 %v223, 16
      %v533 = vpop.permute.xlu0 %532
      %534 = vrot.lane.b32.xlu0 %v224, 16
      %v535 = vpop.permute.xlu0 %534
      %536 = vrot.lane.b32.xlu0 %v225, 16
      %v537 = vpop.permute.xlu0 %536
      %538 = vrot.lane.b32.xlu0 %v226, 16
      %v539 = vpop.permute.xlu0 %538
      %540 = vrot.lane.b32.xlu0 %v227, 16
      %v541 = vpop.permute.xlu0 %540
      %542 = vrot.lane.b32.xlu0 %v228, 16
      %v543 = vpop.permute.xlu0 %542
      %544 = vrot.lane.b32.xlu0 %v229, 16
      %v545 = vpop.permute.xlu0 %544
      %546 = vrot.lane.b32.xlu0 %v230, 16
      %v547 = vpop.permute.xlu0 %546
      %548 = vrot.lane.b32.xlu0 %v231, 16
      %v549 = vpop.permute.xlu0 %548
      %550 = vrot.lane.b32.xlu0 %v232, 16
      %v551 = vpop.permute.xlu0 %550
      %552 = vrot.lane.b32.xlu0 %v233, 16
      %v553 = vpop.permute.xlu0 %552
      %554 = vrot.lane.b32.xlu0 %v234, 16
      %v555 = vpop.permute.xlu0 %554
      %556 = vrot.lane.b32.xlu0 %v235, 16
      %v557 = vpop.permute.xlu0 %556
      %622 = vrot.lane.b32.xlu0 %v236, 32
      %v623 = vpop.permute.xlu0 %622
      %624 = vrot.lane.b32.xlu0 %v237, 32
      %v625 = vpop.permute.xlu0 %624
      %626 = vrot.lane.b32.xlu0 %v238, 32
      %v627 = vpop.permute.xlu0 %626
      %628 = vrot.lane.b32.xlu0 %v239, 32
      %v629 = vpop.permute.xlu0 %628
      %630 = vrot.lane.b32.xlu0 %v240, 32
      %v631 = vpop.permute.xlu0 %630
      %632 = vrot.lane.b32.xlu0 %v241, 32
      %v633 = vpop.permute.xlu0 %632
      %634 = vrot.lane.b32.xlu0 %v242, 32
      %v635 = vpop.permute.xlu0 %634
      %636 = vrot.lane.b32.xlu0 %v243, 32
      %v637 = vpop.permute.xlu0 %636
      %638 = vrot.lane.b32.xlu0 %v244, 32
      %v639 = vpop.permute.xlu0 %638
      %640 = vrot.lane.b32.xlu0 %v245, 32
      %v641 = vpop.permute.xlu0 %640
      %642 = vrot.lane.b32.xlu0 %v246, 32
      %v643 = vpop.permute.xlu0 %642
      %644 = vrot.lane.b32.xlu0 %v247, 32
      %v645 = vpop.permute.xlu0 %644
      %646 = vrot.lane.b32.xlu0 %v248, 32
      %v647 = vpop.permute.xlu0 %646
      %648 = vrot.lane.b32.xlu0 %v249, 32
      %v649 = vpop.permute.xlu0 %648
      %650 = vrot.lane.b32.xlu0 %v250, 32
      %v651 = vpop.permute.xlu0 %650
      %652 = vrot.lane.b32.xlu0 %v251, 32
      %v653 = vpop.permute.xlu0 %652
      %654 = vrot.lane.b32.xlu0 %v252, 32
      %v655 = vpop.permute.xlu0 %654
      %656 = vrot.lane.b32.xlu0 %v253, 32
      %v657 = vpop.permute.xlu0 %656
      %658 = vrot.lane.b32.xlu0 %v254, 32
      %v659 = vpop.permute.xlu0 %658
      %660 = vrot.lane.b32.xlu0 %v255, 32
      %v661 = vpop.permute.xlu0 %660
      %662 = vrot.lane.b32.xlu0 %v256, 32
      %v663 = vpop.permute.xlu0 %662
      %664 = vrot.lane.b32.xlu0 %v257, 32
      %v665 = vpop.permute.xlu0 %664
      %666 = vrot.lane.b32.xlu0 %v258, 32
      %v667 = vpop.permute.xlu0 %666
      %668 = vrot.lane.b32.xlu0 %v259, 32
      %v669 = vpop.permute.xlu0 %668
      %670 = vrot.lane.b32.xlu0 %v260, 32
      %v671 = vpop.permute.xlu0 %670
      %672 = vrot.lane.b32.xlu0 %v261, 32
      %v673 = vpop.permute.xlu0 %672
      %674 = vrot.lane.b32.xlu0 %v262, 32
      %v675 = vpop.permute.xlu0 %674
      %676 = vrot.lane.b32.xlu0 %v263, 32
      %v677 = vpop.permute.xlu0 %676
      %678 = vrot.lane.b32.xlu0 %v264, 32
      %v679 = vpop.permute.xlu0 %678
      %680 = vrot.lane.b32.xlu0 %v265, 32
      %v681 = vpop.permute.xlu0 %680
      %682 = vrot.lane.b32.xlu0 %v266, 32
      %v683 = vpop.permute.xlu0 %682
      %684 = vrot.lane.b32.xlu0 %v267, 32
      %v685 = vpop.permute.xlu0 %684
      %750 = vrot.lane.b32.xlu0 %v269, 48
      %v751 = vpop.permute.xlu0 %750
      %752 = vrot.lane.b32.xlu0 %v270, 48
      %v753 = vpop.permute.xlu0 %752
      %754 = vrot.lane.b32.xlu0 %v271, 48
      %v755 = vpop.permute.xlu0 %754
      %756 = vrot.lane.b32.xlu0 %v272, 48
      %v757 = vpop.permute.xlu0 %756
      %758 = vrot.lane.b32.xlu0 %v273, 48
      %v759 = vpop.permute.xlu0 %758
      %760 = vrot.lane.b32.xlu0 %v274, 48
      %v761 = vpop.permute.xlu0 %760
      %762 = vrot.lane.b32.xlu0 %v275, 48
      %v763 = vpop.permute.xlu0 %762
      %764 = vrot.lane.b32.xlu0 %v276, 48
      %v765 = vpop.permute.xlu0 %764
      %766 = vrot.lane.b32.xlu0 %v277, 48
      %v767 = vpop.permute.xlu0 %766
      %768 = vrot.lane.b32.xlu0 %v278, 48
      %v769 = vpop.permute.xlu0 %768
      %770 = vrot.lane.b32.xlu0 %v279, 48
      %v771 = vpop.permute.xlu0 %770
      %772 = vrot.lane.b32.xlu0 %v280, 48
      %v773 = vpop.permute.xlu0 %772
      %774 = vrot.lane.b32.xlu0 %v281, 48
      %v775 = vpop.permute.xlu0 %774
      %776 = vrot.lane.b32.xlu0 %v282, 48
      %v777 = vpop.permute.xlu0 %776
      %778 = vrot.lane.b32.xlu0 %v283, 48
      %v779 = vpop.permute.xlu0 %778
      %780 = vrot.lane.b32.xlu0 %v284, 48
      %v781 = vpop.permute.xlu0 %780
      %782 = vrot.lane.b32.xlu0 %v285, 48
      %v783 = vpop.permute.xlu0 %782
      %784 = vrot.lane.b32.xlu0 %v286, 48
      %v785 = vpop.permute.xlu0 %784
      %786 = vrot.lane.b32.xlu0 %v287, 48
      %v787 = vpop.permute.xlu0 %786
      %788 = vrot.lane.b32.xlu0 %v288, 48
      %v789 = vpop.permute.xlu0 %788
      %790 = vrot.lane.b32.xlu0 %v289, 48
      %v791 = vpop.permute.xlu0 %790
      %792 = vrot.lane.b32.xlu0 %v290, 48
      %v793 = vpop.permute.xlu0 %792
      %794 = vrot.lane.b32.xlu0 %v291, 48
      %v795 = vpop.permute.xlu0 %794
      %796 = vrot.lane.b32.xlu0 %v292, 48
      %v797 = vpop.permute.xlu0 %796
      %798 = vrot.lane.b32.xlu0 %v293, 48
      %v799 = vpop.permute.xlu0 %798
      %800 = vrot.lane.b32.xlu0 %v294, 48
      %v801 = vpop.permute.xlu0 %800
      %802 = vrot.lane.b32.xlu0 %v295, 48
      %v803 = vpop.permute.xlu0 %802
      %804 = vrot.lane.b32.xlu0 %v296, 48
      %v805 = vpop.permute.xlu0 %804
      %806 = vrot.lane.b32.xlu0 %v297, 48
      %v807 = vpop.permute.xlu0 %806
      %808 = vrot.lane.b32.xlu0 %v298, 48
      %v809 = vpop.permute.xlu0 %808
      %810 = vrot.lane.b32.xlu0 %v299, 48
      %v811 = vpop.permute.xlu0 %810
      %812 = vrot.lane.b32.xlu0 %v300, 48
      %v813 = vpop.permute.xlu0 %812
      %878 = vrot.lane.b32.xlu0 %v301, 64
      %v879 = vpop.permute.xlu0 %878
      %880 = vrot.lane.b32.xlu0 %v302, 64
      %v881 = vpop.permute.xlu0 %880
      %882 = vrot.lane.b32.xlu0 %v303, 64
      %v883 = vpop.permute.xlu0 %882
      %884 = vrot.lane.b32.xlu0 %v304, 64
      %v885 = vpop.permute.xlu0 %884
      %886 = vrot.lane.b32.xlu0 %v305, 64
      %v887 = vpop.permute.xlu0 %886
      %888 = vrot.lane.b32.xlu0 %v306, 64
      %v889 = vpop.permute.xlu0 %888
      %890 = vrot.lane.b32.xlu0 %v307, 64
      %v891 = vpop.permute.xlu0 %890
      %892 = vrot.lane.b32.xlu0 %v308, 64
      %v893 = vpop.permute.xlu0 %892
      %894 = vrot.lane.b32.xlu0 %v309, 64
      %v895 = vpop.permute.xlu0 %894
      %896 = vrot.lane.b32.xlu0 %v310, 64
      %v897 = vpop.permute.xlu0 %896
      %898 = vrot.lane.b32.xlu0 %v311, 64
      %v899 = vpop.permute.xlu0 %898
      %900 = vrot.lane.b32.xlu0 %v312, 64
      %v901 = vpop.permute.xlu0 %900
      %902 = vrot.lane.b32.xlu0 %v313, 64
      %v903 = vpop.permute.xlu0 %902
      %904 = vrot.lane.b32.xlu0 %v314, 64
      %v905 = vpop.permute.xlu0 %904
      %906 = vrot.lane.b32.xlu0 %v315, 64
      %v907 = vpop.permute.xlu0 %906
      %908 = vrot.lane.b32.xlu0 %v316, 64
      %v909 = vpop.permute.xlu0 %908
      %910 = vrot.lane.b32.xlu0 %v317, 64
      %v911 = vpop.permute.xlu0 %910
      %912 = vrot.lane.b32.xlu0 %v318, 64
      %v913 = vpop.permute.xlu0 %912
      %914 = vrot.lane.b32.xlu0 %v319, 64
      %v915 = vpop.permute.xlu0 %914
      %916 = vrot.lane.b32.xlu0 %v320, 64
      %v917 = vpop.permute.xlu0 %916
      %918 = vrot.lane.b32.xlu0 %v321, 64
      %v919 = vpop.permute.xlu0 %918
      %920 = vrot.lane.b32.xlu0 %v322, 64
      %v921 = vpop.permute.xlu0 %920
      %922 = vrot.lane.b32.xlu0 %v323, 64
      %v923 = vpop.permute.xlu0 %922
      %924 = vrot.lane.b32.xlu0 %v324, 64
      %v925 = vpop.permute.xlu0 %924
      %926 = vrot.lane.b32.xlu0 %v325, 64
      %v927 = vpop.permute.xlu0 %926
      %928 = vrot.lane.b32.xlu0 %v326, 64
      %v929 = vpop.permute.xlu0 %928
      %930 = vrot.lane.b32.xlu0 %v327, 64
      %v931 = vpop.permute.xlu0 %930
      %932 = vrot.lane.b32.xlu0 %v328, 64
      %v933 = vpop.permute.xlu0 %932
      %934 = vrot.lane.b32.xlu0 %v329, 64
      %v935 = vpop.permute.xlu0 %934
      %936 = vrot.lane.b32.xlu0 %v330, 64
      %v937 = vpop.permute.xlu0 %936
      %938 = vrot.lane.b32.xlu0 %v331, 64
      %v939 = vpop.permute.xlu0 %938
      %940 = vrot.lane.b32.xlu0 %v332, 64
      %v941 = vpop.permute.xlu0 %940
      %1006 = vrot.lane.b32.xlu0 %v333, 80
      %v1007 = vpop.permute.xlu0 %1006
      %1008 = vrot.lane.b32.xlu0 %v334, 80
      %v1009 = vpop.permute.xlu0 %1008
      %1010 = vrot.lane.b32.xlu0 %v335, 80
      %v1011 = vpop.permute.xlu0 %1010
      %1012 = vrot.lane.b32.xlu0 %v336, 80
      %v1013 = vpop.permute.xlu0 %1012
      %1014 = vrot.lane.b32.xlu0 %v337, 80
      %v1015 = vpop.permute.xlu0 %1014
      %1016 = vrot.lane.b32.xlu0 %v338, 80
      %v1017 = vpop.permute.xlu0 %1016
      %1018 = vrot.lane.b32.xlu0 %v339, 80
      %v1019 = vpop.permute.xlu0 %1018
      %1020 = vrot.lane.b32.xlu0 %v340, 80
      %v1021 = vpop.permute.xlu0 %1020
      %1022 = vrot.lane.b32.xlu0 %v341, 80
      %v1023 = vpop.permute.xlu0 %1022
      %1024 = vrot.lane.b32.xlu0 %v342, 80
      %v1025 = vpop.permute.xlu0 %1024
      %1026 = vrot.lane.b32.xlu0 %v343, 80
      %v1027 = vpop.permute.xlu0 %1026
      %1028 = vrot.lane.b32.xlu0 %v344, 80
      %v1029 = vpop.permute.xlu0 %1028
      %1030 = vrot.lane.b32.xlu0 %v345, 80
      %v1031 = vpop.permute.xlu0 %1030
      %1032 = vrot.lane.b32.xlu0 %v346, 80
      %v1033 = vpop.permute.xlu0 %1032
      %1034 = vrot.lane.b32.xlu0 %v347, 80
      %v1035 = vpop.permute.xlu0 %1034
      %1036 = vrot.lane.b32.xlu0 %v348, 80
      %v1037 = vpop.permute.xlu0 %1036
      %1038 = vrot.lane.b32.xlu0 %v349, 80
      %v1039 = vpop.permute.xlu0 %1038
      %1040 = vrot.lane.b32.xlu0 %v350, 80
      %v1041 = vpop.permute.xlu0 %1040
      %1042 = vrot.lane.b32.xlu0 %v351, 80
      %v1043 = vpop.permute.xlu0 %1042
      %1044 = vrot.lane.b32.xlu0 %v352, 80
      %v1045 = vpop.permute.xlu0 %1044
      %1046 = vrot.lane.b32.xlu0 %v353, 80
      %v1047 = vpop.permute.xlu0 %1046
      %1048 = vrot.lane.b32.xlu0 %v354, 80
      %v1049 = vpop.permute.xlu0 %1048
      %1050 = vrot.lane.b32.xlu0 %v355, 80
      %v1051 = vpop.permute.xlu0 %1050
      %1052 = vrot.lane.b32.xlu0 %v356, 80
      %v1053 = vpop.permute.xlu0 %1052
      %1054 = vrot.lane.b32.xlu0 %v357, 80
      %v1055 = vpop.permute.xlu0 %1054
      %1056 = vrot.lane.b32.xlu0 %v358, 80
      %v1057 = vpop.permute.xlu0 %1056
      %1058 = vrot.lane.b32.xlu0 %v359, 80
      %v1059 = vpop.permute.xlu0 %1058
      %1060 = vrot.lane.b32.xlu0 %v360, 80
      %v1061 = vpop.permute.xlu0 %1060
      %1062 = vrot.lane.b32.xlu0 %v361, 80
      %v1063 = vpop.permute.xlu0 %1062
      %1064 = vrot.lane.b32.xlu0 %v362, 80
      %v1065 = vpop.permute.xlu0 %1064
      %1066 = vrot.lane.b32.xlu0 %v363, 80
      %v1067 = vpop.permute.xlu0 %1066
      %1068 = vrot.lane.b32.xlu0 %v364, 80
      %v1069 = vpop.permute.xlu0 %1068
      %1134 = vrot.lane.b32.xlu0 %v366, 96
      %v1135 = vpop.permute.xlu0 %1134
      %1136 = vrot.lane.b32.xlu0 %v367, 96
      %v1137 = vpop.permute.xlu0 %1136
      %1138 = vrot.lane.b32.xlu0 %v368, 96
      %v1139 = vpop.permute.xlu0 %1138
      %1140 = vrot.lane.b32.xlu0 %v369, 96
      %v1141 = vpop.permute.xlu0 %1140
      %1142 = vrot.lane.b32.xlu0 %v370, 96
      %v1143 = vpop.permute.xlu0 %1142
      %1144 = vrot.lane.b32.xlu0 %v371, 96
      %v1145 = vpop.permute.xlu0 %1144
      %1146 = vrot.lane.b32.xlu0 %v372, 96
      %v1147 = vpop.permute.xlu0 %1146
      %1148 = vrot.lane.b32.xlu0 %v373, 96
      %v1149 = vpop.permute.xlu0 %1148
      %1150 = vrot.lane.b32.xlu0 %v374, 96
      %v1151 = vpop.permute.xlu0 %1150
      %1152 = vrot.lane.b32.xlu0 %v375, 96
      %v1153 = vpop.permute.xlu0 %1152
      %1154 = vrot.lane.b32.xlu0 %v376, 96
      %v1155 = vpop.permute.xlu0 %1154
      %1156 = vrot.lane.b32.xlu0 %v377, 96
      %v1157 = vpop.permute.xlu0 %1156
      %1158 = vrot.lane.b32.xlu0 %v378, 96
      %v1159 = vpop.permute.xlu0 %1158
      %1160 = vrot.lane.b32.xlu0 %v379, 96
      %v1161 = vpop.permute.xlu0 %1160
      %1162 = vrot.lane.b32.xlu0 %v380, 96
      %v1163 = vpop.permute.xlu0 %1162
      %1164 = vrot.lane.b32.xlu0 %v381, 96
      %v1165 = vpop.permute.xlu0 %1164
      %1166 = vrot.lane.b32.xlu0 %v382, 96
      %v1167 = vpop.permute.xlu0 %1166
      %1168 = vrot.lane.b32.xlu0 %v383, 96
      %v1169 = vpop.permute.xlu0 %1168
      %1170 = vrot.lane.b32.xlu0 %v384, 96
      %v1171 = vpop.permute.xlu0 %1170
      %1172 = vrot.lane.b32.xlu0 %v385, 96
      %v1173 = vpop.permute.xlu0 %1172
      %1174 = vrot.lane.b32.xlu0 %v386, 96
      %v1175 = vpop.permute.xlu0 %1174
      %1176 = vrot.lane.b32.xlu0 %v387, 96
      %v1177 = vpop.permute.xlu0 %1176
      %1178 = vrot.lane.b32.xlu0 %v388, 96
      %v1179 = vpop.permute.xlu0 %1178
      %1180 = vrot.lane.b32.xlu0 %v389, 96
      %v1181 = vpop.permute.xlu0 %1180
      %1182 = vrot.lane.b32.xlu0 %v390, 96
      %v1183 = vpop.permute.xlu0 %1182
      %1184 = vrot.lane.b32.xlu0 %v391, 96
      %v1185 = vpop.permute.xlu0 %1184
      %1186 = vrot.lane.b32.xlu0 %v392, 96
      %v1187 = vpop.permute.xlu0 %1186
      %1188 = vrot.lane.b32.xlu0 %v393, 96
      %v1189 = vpop.permute.xlu0 %1188
      %1190 = vrot.lane.b32.xlu0 %v394, 96
      %v1191 = vpop.permute.xlu0 %1190
      %1192 = vrot.lane.b32.xlu0 %v395, 96
      %v1193 = vpop.permute.xlu0 %1192
      %1194 = vrot.lane.b32.xlu0 %v396, 96
      %v1195 = vpop.permute.xlu0 %1194
      %1196 = vrot.lane.b32.xlu0 %v397, 96
      %v1197 = vpop.permute.xlu0 %1196
      %1262 = vrot.lane.b32.xlu0 %v398, 112
      %v1263 = vpop.permute.xlu0 %1262
      %1264 = vrot.lane.b32.xlu0 %v399, 112
      %v1265 = vpop.permute.xlu0 %1264
      %1266 = vrot.lane.b32.xlu0 %v400, 112
      %v1267 = vpop.permute.xlu0 %1266
      %1268 = vrot.lane.b32.xlu0 %v401, 112
      %v1269 = vpop.permute.xlu0 %1268
      %1270 = vrot.lane.b32.xlu0 %v402, 112
      %v1271 = vpop.permute.xlu0 %1270
      %1272 = vrot.lane.b32.xlu0 %v403, 112
      %v1273 = vpop.permute.xlu0 %1272
      %1274 = vrot.lane.b32.xlu0 %v404, 112
      %v1275 = vpop.permute.xlu0 %1274
      %1276 = vrot.lane.b32.xlu0 %v405, 112
      %v1277 = vpop.permute.xlu0 %1276
      %1278 = vrot.lane.b32.xlu0 %v406, 112
      %v1279 = vpop.permute.xlu0 %1278
      %1280 = vrot.lane.b32.xlu0 %v407, 112
      %v1281 = vpop.permute.xlu0 %1280
      %1282 = vrot.lane.b32.xlu0 %v408, 112
      %v1283 = vpop.permute.xlu0 %1282
      %1284 = vrot.lane.b32.xlu0 %v409, 112
      %v1285 = vpop.permute.xlu0 %1284
      %1286 = vrot.lane.b32.xlu0 %v410, 112
      %v1287 = vpop.permute.xlu0 %1286
      %1288 = vrot.lane.b32.xlu0 %v411, 112
      %v1289 = vpop.permute.xlu0 %1288
      %1290 = vrot.lane.b32.xlu0 %v412, 112
      %v1291 = vpop.permute.xlu0 %1290
      %1292 = vrot.lane.b32.xlu0 %v413, 112
      %v1293 = vpop.permute.xlu0 %1292
      %1294 = vrot.lane.b32.xlu0 %v414, 112
      %v1295 = vpop.permute.xlu0 %1294
      %1296 = vrot.lane.b32.xlu0 %v415, 112
      %v1297 = vpop.permute.xlu0 %1296
      %1298 = vrot.lane.b32.xlu0 %v416, 112
      %v1299 = vpop.permute.xlu0 %1298
      %1300 = vrot.lane.b32.xlu0 %v417, 112
      %v1301 = vpop.permute.xlu0 %1300
      %1302 = vrot.lane.b32.xlu0 %v418, 112
      %v1303 = vpop.permute.xlu0 %1302
      %1304 = vrot.lane.b32.xlu0 %v419, 112
      %v1305 = vpop.permute.xlu0 %1304
      %1306 = vrot.lane.b32.xlu0 %v420, 112
      %v1307 = vpop.permute.xlu0 %1306
      %1308 = vrot.lane.b32.xlu0 %v421, 112
      %v1309 = vpop.permute.xlu0 %1308
      %1310 = vrot.lane.b32.xlu0 %v422, 112
      %v1311 = vpop.permute.xlu0 %1310
      %1312 = vrot.lane.b32.xlu0 %v423, 112
      %v1313 = vpop.permute.xlu0 %1312
      %1314 = vrot.lane.b32.xlu0 %v424, 112
      %v1315 = vpop.permute.xlu0 %1314
      %1316 = vrot.lane.b32.xlu0 %v425, 112
      %v1317 = vpop.permute.xlu0 %1316
      %1318 = vrot.lane.b32.xlu0 %v426, 112
      %v1319 = vpop.permute.xlu0 %1318
      %1320 = vrot.lane.b32.xlu0 %v427, 112
      %v1321 = vpop.permute.xlu0 %1320
      %1322 = vrot.lane.b32.xlu0 %v428, 112
      %v1323 = vpop.permute.xlu0 %1322
      %1324 = vrot.lane.b32.xlu0 %v429, 112
      %v1325 = vpop.permute.xlu0 %1324
      %vm1358 = vcmask 130048
      %v1359 = vsel %vm1358, %v172, %v495
      %v1360 = vsel %vm1358, %v173, %v497
      %v1361 = vsel %vm1358, %v174, %v499
      %v1362 = vsel %vm1358, %v175, %v501
      %v1363 = vsel %vm1358, %v176, %v503
      %v1364 = vsel %vm1358, %v177, %v505
      %v1365 = vsel %vm1358, %v178, %v507
      %v1366 = vsel %vm1358, %v179, %v509
      %v1367 = vsel %vm1358, %v180, %v511
      %v1368 = vsel %vm1358, %v181, %v513
      %v1369 = vsel %vm1358, %v182, %v515
      %v1370 = vsel %vm1358, %v183, %v517
      %v1371 = vsel %vm1358, %v184, %v519
      %v1372 = vsel %vm1358, %v185, %v521
      %v1373 = vsel %vm1358, %v186, %v523
      %v1374 = vsel %vm1358, %v187, %v525
      %v1375 = vsel %vm1358, %v188, %v527
      %v1376 = vsel %vm1358, %v189, %v529
      %v1377 = vsel %vm1358, %v190, %v531
      %v1378 = vsel %vm1358, %v191, %v533
      %v1379 = vsel %vm1358, %v192, %v535
      %v1380 = vsel %vm1358, %v193, %v537
      %v1381 = vsel %vm1358, %v194, %v539
      %v1382 = vsel %vm1358, %v195, %v541
      %v1383 = vsel %vm1358, %v196, %v543
      %v1384 = vsel %vm1358, %v197, %v545
      %v1385 = vsel %vm1358, %v198, %v547
      %v1386 = vsel %vm1358, %v199, %v549
      %v1387 = vsel %vm1358, %v200, %v551
      %v1388 = vsel %vm1358, %v201, %v553
      %v1389 = vsel %vm1358, %v202, %v555
      %v1390 = vsel %vm1358, %v203, %v557
      %vm1391 = vcmask 261120
      %v1392 = vsel %vm1391, %v1359, %v623
      %v1393 = vsel %vm1391, %v1360, %v625
      %v1394 = vsel %vm1391, %v1361, %v627
      %v1395 = vsel %vm1391, %v1362, %v629
      %v1396 = vsel %vm1391, %v1363, %v631
      %v1397 = vsel %vm1391, %v1364, %v633
      %v1398 = vsel %vm1391, %v1365, %v635
      %v1399 = vsel %vm1391, %v1366, %v637
      %v1400 = vsel %vm1391, %v1367, %v639
      %v1401 = vsel %vm1391, %v1368, %v641
      %v1402 = vsel %vm1391, %v1369, %v643
      %v1403 = vsel %vm1391, %v1370, %v645
      %v1404 = vsel %vm1391, %v1371, %v647
      %v1405 = vsel %vm1391, %v1372, %v649
      %v1406 = vsel %vm1391, %v1373, %v651
      %v1407 = vsel %vm1391, %v1374, %v653
      %v1408 = vsel %vm1391, %v1375, %v655
      %v1409 = vsel %vm1391, %v1376, %v657
      %v1410 = vsel %vm1391, %v1377, %v659
      %v1411 = vsel %vm1391, %v1378, %v661
      %v1412 = vsel %vm1391, %v1379, %v663
      %v1413 = vsel %vm1391, %v1380, %v665
      %v1414 = vsel %vm1391, %v1381, %v667
      %v1415 = vsel %vm1391, %v1382, %v669
      %v1416 = vsel %vm1391, %v1383, %v671
      %v1417 = vsel %vm1391, %v1384, %v673
      %v1418 = vsel %vm1391, %v1385, %v675
      %v1419 = vsel %vm1391, %v1386, %v677
      %v1420 = vsel %vm1391, %v1387, %v679
      %v1421 = vsel %vm1391, %v1388, %v681
      %v1422 = vsel %vm1391, %v1389, %v683
      %v1423 = vsel %vm1391, %v1390, %v685
      %vm1424 = vcmask 392192
      %v1425 = vsel %vm1424, %v1392, %v751
      %v1426 = vsel %vm1424, %v1393, %v753
      %v1427 = vsel %vm1424, %v1394, %v755
      %v1428 = vsel %vm1424, %v1395, %v757
      %v1429 = vsel %vm1424, %v1396, %v759
      %v1430 = vsel %vm1424, %v1397, %v761
      %v1431 = vsel %vm1424, %v1398, %v763
      %v1432 = vsel %vm1424, %v1399, %v765
      %v1433 = vsel %vm1424, %v1400, %v767
      %v1434 = vsel %vm1424, %v1401, %v769
      %v1435 = vsel %vm1424, %v1402, %v771
      %v1436 = vsel %vm1424, %v1403, %v773
      %v1437 = vsel %vm1424, %v1404, %v775
      %v1438 = vsel %vm1424, %v1405, %v777
      %v1439 = vsel %vm1424, %v1406, %v779
      %v1440 = vsel %vm1424, %v1407, %v781
      %v1441 = vsel %vm1424, %v1408, %v783
      %v1442 = vsel %vm1424, %v1409, %v785
      %v1443 = vsel %vm1424, %v1410, %v787
      %v1444 = vsel %vm1424, %v1411, %v789
      %v1445 = vsel %vm1424, %v1412, %v791
      %v1446 = vsel %vm1424, %v1413, %v793
      %v1447 = vsel %vm1424, %v1414, %v795
      %v1448 = vsel %vm1424, %v1415, %v797
      %v1449 = vsel %vm1424, %v1416, %v799
      %v1450 = vsel %vm1424, %v1417, %v801
      %v1451 = vsel %vm1424, %v1418, %v803
      %v1452 = vsel %vm1424, %v1419, %v805
      %v1453 = vsel %vm1424, %v1420, %v807
      %v1454 = vsel %vm1424, %v1421, %v809
      %v1455 = vsel %vm1424, %v1422, %v811
      %v1456 = vsel %vm1424, %v1423, %v813
      %vm1457 = vcmask 523264
      %v1458 = vsel %vm1457, %v1425, %v879
      %v1459 = vsel %vm1457, %v1426, %v881
      %v1460 = vsel %vm1457, %v1427, %v883
      %v1461 = vsel %vm1457, %v1428, %v885
      %v1462 = vsel %vm1457, %v1429, %v887
      %v1463 = vsel %vm1457, %v1430, %v889
      %v1464 = vsel %vm1457, %v1431, %v891
      %v1465 = vsel %vm1457, %v1432, %v893
      %v1466 = vsel %vm1457, %v1433, %v895
      %v1467 = vsel %vm1457, %v1434, %v897
      %v1468 = vsel %vm1457, %v1435, %v899
      %v1469 = vsel %vm1457, %v1436, %v901
      %v1470 = vsel %vm1457, %v1437, %v903
      %v1471 = vsel %vm1457, %v1438, %v905
      %v1472 = vsel %vm1457, %v1439, %v907
      %v1473 = vsel %vm1457, %v1440, %v909
      %v1474 = vsel %vm1457, %v1441, %v911
      %v1475 = vsel %vm1457, %v1442, %v913
      %v1476 = vsel %vm1457, %v1443, %v915
      %v1477 = vsel %vm1457, %v1444, %v917
      %v1478 = vsel %vm1457, %v1445, %v919
      %v1479 = vsel %vm1457, %v1446, %v921
      %v1480 = vsel %vm1457, %v1447, %v923
      %v1481 = vsel %vm1457, %v1448, %v925
      %v1482 = vsel %vm1457, %v1449, %v927
      %v1483 = vsel %vm1457, %v1450, %v929
      %v1484 = vsel %vm1457, %v1451, %v931
      %v1485 = vsel %vm1457, %v1452, %v933
      %v1486 = vsel %vm1457, %v1453, %v935
      %v1487 = vsel %vm1457, %v1454, %v937
      %v1488 = vsel %vm1457, %v1455, %v939
      %v1489 = vsel %vm1457, %v1456, %v941
      %vm1490 = vcmask 654336
      %v1491 = vsel %vm1490, %v1458, %v1007
      %v1492 = vsel %vm1490, %v1459, %v1009
      %v1493 = vsel %vm1490, %v1460, %v1011
      %v1494 = vsel %vm1490, %v1461, %v1013
      %v1495 = vsel %vm1490, %v1462, %v1015
      %v1496 = vsel %vm1490, %v1463, %v1017
      %v1497 = vsel %vm1490, %v1464, %v1019
      %v1498 = vsel %vm1490, %v1465, %v1021
      %v1499 = vsel %vm1490, %v1466, %v1023
      %v1500 = vsel %vm1490, %v1467, %v1025
      %v1501 = vsel %vm1490, %v1468, %v1027
      %v1502 = vsel %vm1490, %v1469, %v1029
      %v1503 = vsel %vm1490, %v1470, %v1031
      %v1504 = vsel %vm1490, %v1471, %v1033
      %v1505 = vsel %vm1490, %v1472, %v1035
      %v1506 = vsel %vm1490, %v1473, %v1037
      %v1507 = vsel %vm1490, %v1474, %v1039
      %v1508 = vsel %vm1490, %v1475, %v1041
      %v1509 = vsel %vm1490, %v1476, %v1043
      %v1510 = vsel %vm1490, %v1477, %v1045
      %v1511 = vsel %vm1490, %v1478, %v1047
      %v1512 = vsel %vm1490, %v1479, %v1049
      %v1513 = vsel %vm1490, %v1480, %v1051
      %v1514 = vsel %vm1490, %v1481, %v1053
      %v1515 = vsel %vm1490, %v1482, %v1055
      %v1516 = vsel %vm1490, %v1483, %v1057
      %v1517 = vsel %vm1490, %v1484, %v1059
      %v1518 = vsel %vm1490, %v1485, %v1061
      %v1519 = vsel %vm1490, %v1486, %v1063
      %v1520 = vsel %vm1490, %v1487, %v1065
      %v1521 = vsel %vm1490, %v1488, %v1067
      %v1522 = vsel %vm1490, %v1489, %v1069
      %vm1523 = vcmask 785408
      %v1524 = vsel %vm1523, %v1491, %v1135
      %v1525 = vsel %vm1523, %v1492, %v1137
      %v1526 = vsel %vm1523, %v1493, %v1139
      %v1527 = vsel %vm1523, %v1494, %v1141
      %v1528 = vsel %vm1523, %v1495, %v1143
      %v1529 = vsel %vm1523, %v1496, %v1145
      %v1530 = vsel %vm1523, %v1497, %v1147
      %v1531 = vsel %vm1523, %v1498, %v1149
      %v1532 = vsel %vm1523, %v1499, %v1151
      %v1533 = vsel %vm1523, %v1500, %v1153
      %v1534 = vsel %vm1523, %v1501, %v1155
      %v1535 = vsel %vm1523, %v1502, %v1157
      %v1536 = vsel %vm1523, %v1503, %v1159
      %v1537 = vsel %vm1523, %v1504, %v1161
      %v1538 = vsel %vm1523, %v1505, %v1163
      %v1539 = vsel %vm1523, %v1506, %v1165
      %v1540 = vsel %vm1523, %v1507, %v1167
      %v1541 = vsel %vm1523, %v1508, %v1169
      %v1542 = vsel %vm1523, %v1509, %v1171
      %v1543 = vsel %vm1523, %v1510, %v1173
      %v1544 = vsel %vm1523, %v1511, %v1175
      %v1545 = vsel %vm1523, %v1512, %v1177
      %v1546 = vsel %vm1523, %v1513, %v1179
      %v1547 = vsel %vm1523, %v1514, %v1181
      %v1548 = vsel %vm1523, %v1515, %v1183
      %v1549 = vsel %vm1523, %v1516, %v1185
      %v1550 = vsel %vm1523, %v1517, %v1187
      %v1551 = vsel %vm1523, %v1518, %v1189
      %v1552 = vsel %vm1523, %v1519, %v1191
      %v1553 = vsel %vm1523, %v1520, %v1193
      %v1554 = vsel %vm1523, %v1521, %v1195
      %v1555 = vsel %vm1523, %v1522, %v1197
      %vm1556 = vcmask 916480
      %v1557 = vsel %vm1556, %v1524, %v1263
      %v1558 = vsel %vm1556, %v1525, %v1265
      %v1559 = vsel %vm1556, %v1526, %v1267
      %v1560 = vsel %vm1556, %v1527, %v1269
      %v1561 = vsel %vm1556, %v1528, %v1271
      %v1562 = vsel %vm1556, %v1529, %v1273
      %v1563 = vsel %vm1556, %v1530, %v1275
      %v1564 = vsel %vm1556, %v1531, %v1277
      %v1565 = vsel %vm1556, %v1532, %v1279
      %v1566 = vsel %vm1556, %v1533, %v1281
      %v1567 = vsel %vm1556, %v1534, %v1283
      %v1568 = vsel %vm1556, %v1535, %v1285
      %v1569 = vsel %vm1556, %v1536, %v1287
      %v1570 = vsel %vm1556, %v1537, %v1289
      %v1571 = vsel %vm1556, %v1538, %v1291
      %v1572 = vsel %vm1556, %v1539, %v1293
      %v1573 = vsel %vm1556, %v1540, %v1295
      %v1574 = vsel %vm1556, %v1541, %v1297
      %v1575 = vsel %vm1556, %v1542, %v1299
      %v1576 = vsel %vm1556, %v1543, %v1301
      %v1577 = vsel %vm1556, %v1544, %v1303
      %v1578 = vsel %vm1556, %v1545, %v1305
      %v1579 = vsel %vm1556, %v1546, %v1307
      %v1580 = vsel %vm1556, %v1547, %v1309
      %v1581 = vsel %vm1556, %v1548, %v1311
      %v1582 = vsel %vm1556, %v1549, %v1313
      %v1583 = vsel %vm1556, %v1550, %v1315
      %v1584 = vsel %vm1556, %v1551, %v1317
      %v1585 = vsel %vm1556, %v1552, %v1319
      %v1586 = vsel %vm1556, %v1553, %v1321
      %v1587 = vsel %vm1556, %v1554, %v1323
      %v1588 = vsel %vm1556, %v1555, %v1325
      %v1589 = vpack.c.bf16 %v1558, %v1557
      %v1590 = vpack.c.bf16 %v431, %v430
      %v1591 = vpack.c.bf16 %v1560, %v1559
      %v1592 = vpack.c.bf16 %v433, %v432
      %v1593 = vpack.c.bf16 %v1562, %v1561
      %v1594 = vpack.c.bf16 %v435, %v434
      %v1595 = vpack.c.bf16 %v1564, %v1563
      %v1596 = vpack.c.bf16 %v437, %v436
      %v1597 = vpack.c.bf16 %v1566, %v1565
      %v1598 = vpack.c.bf16 %v439, %v438
      %v1599 = vpack.c.bf16 %v1568, %v1567
      %v1600 = vpack.c.bf16 %v441, %v440
      %v1601 = vpack.c.bf16 %v1570, %v1569
      %v1602 = vpack.c.bf16 %v443, %v442
      %v1603 = vpack.c.bf16 %v1572, %v1571
      %v1604 = vpack.c.bf16 %v445, %v444
      %v1605 = vpack.c.bf16 %v1574, %v1573
      %v1606 = vpack.c.bf16 %v447, %v446
      %v1607 = vpack.c.bf16 %v1576, %v1575
      %v1608 = vpack.c.bf16 %v449, %v448
      %v1609 = vpack.c.bf16 %v1578, %v1577
      %v1610 = vpack.c.bf16 %v451, %v450
      %v1611 = vpack.c.bf16 %v1580, %v1579
      %v1612 = vpack.c.bf16 %v453, %v452
      %v1613 = vpack.c.bf16 %v1582, %v1581
      %v1614 = vpack.c.bf16 %v455, %v454
      %v1615 = vpack.c.bf16 %v1584, %v1583
      %v1616 = vpack.c.bf16 %v457, %v456
      %v1617 = vpack.c.bf16 %v1586, %v1585
      %v1618 = vpack.c.bf16 %v459, %v458
      %v1619 = vpack.c.bf16 %v1588, %v1587
      %v1620 = vpack.c.bf16 %v461, %v460
      %v1621 = vld [vmem:[%s1] sm:$0xf]
      %v1622 = vld [vmem:[%s1 + $0x4] sm:$0xf]
      %v1623 = vld [vmem:[%s1 + $0x8] sm:$0xf]
      %v1624 = vld [vmem:[%s1 + $0xc] sm:$0xf]
      %v1625 = vld [vmem:[%s1 + $0x10] sm:$0xf]
      %v1626 = vld [vmem:[%s1 + $0x14] sm:$0xf]
      %v1627 = vld [vmem:[%s1 + $0x18] sm:$0xf]
      %v1628 = vld [vmem:[%s1 + $0x1c] sm:$0xf]
      %v1629 = vld [vmem:[%s1 + $0x20] sm:$0xf]
      %v1630 = vld [vmem:[%s1 + $0x24] sm:$0xf]
      %v1631 = vld [vmem:[%s1 + $0x28] sm:$0xf]
      %v1632 = vld [vmem:[%s1 + $0x2c] sm:$0xf]
      %v1633 = vld [vmem:[%s1 + $0x30] sm:$0xf]
      %v1634 = vld [vmem:[%s1 + $0x34] sm:$0xf]
      %v1635 = vld [vmem:[%s1 + $0x38] sm:$0xf]
      %v1636 = vld [vmem:[%s1 + $0x3c] sm:$0xf]
      %v1637 = vld [vmem:[%s1 + $0x40] sm:$0xf]
      %v1638 = vld [vmem:[%s1 + $0x44] sm:$0xf]
      %v1639 = vld [vmem:[%s2] sm:$0x1]
      %v1641 = vlaneseq
      %v1642 = vshrl.u32 %v1641, 7
      %v1643 = vsub.s32 0, %v1642
      %v1644 = vrot.slane %v1639, %v1643
      %v1664 = vunpack.c.l.b16 %v1621
      %v1665 = vunpack.c.l.b16 %v1622
      %v1666 = vunpack.c.l.b16 %v1623
      %v1667 = vunpack.c.l.b16 %v1624
      %v1668 = vunpack.c.l.b16 %v1625
      %v1669 = vunpack.c.l.b16 %v1626
      %v1670 = vunpack.c.l.b16 %v1627
      %v1671 = vunpack.c.l.b16 %v1628
      %v1672 = vunpack.c.l.b16 %v1629
      %v1673 = vunpack.c.l.b16 %v1630
      %v1674 = vunpack.c.l.b16 %v1631
      %v1675 = vunpack.c.l.b16 %v1632
      %v1676 = vunpack.c.l.b16 %v1633
      %v1677 = vunpack.c.l.b16 %v1634
      %v1678 = vunpack.c.l.b16 %v1635
      %v1679 = vunpack.c.l.b16 %v1636
      %v1680 = vunpack.c.l.b16 %v1637
      %v1681 = vunpack.c.l.b16 %v1638
      %v1682 = vpack.c.b16 %v1665, %v1664
      %v1683 = vpack.c.b16 %v1667, %v1666
      %v1684 = vpack.c.b16 %v1669, %v1668
      %v1685 = vpack.c.b16 %v1671, %v1670
      %v1686 = vpack.c.b16 %v1673, %v1672
      %v1687 = vpack.c.b16 %v1675, %v1674
      %v1688 = vpack.c.b16 %v1677, %v1676
      %v1689 = vpack.c.b16 %v1679, %v1678
      %v1690 = vpack.c.b16 %v1681, %v1680
      %v1701 = vsel %vm1358, %v1590, 0
      %v1704 = vsel %vm1358, %v1592, 0
      %v1707 = vsel %vm1358, %v1594, 0
      %v1710 = vsel %vm1358, %v1596, 0
      %v1713 = vsel %vm1358, %v1598, 0
      %v1716 = vsel %vm1358, %v1600, 0
      %v1719 = vsel %vm1358, %v1602, 0
      %v1722 = vsel %vm1358, %v1604, 0
      %v1725 = vsel %vm1358, %v1606, 0
      %v1728 = vsel %vm1358, %v1608, 0
      %v1731 = vsel %vm1358, %v1610, 0
      %v1734 = vsel %vm1358, %v1612, 0
      %v1737 = vsel %vm1358, %v1614, 0
      %v1740 = vsel %vm1358, %v1616, 0
      %v1743 = vsel %vm1358, %v1618, 0
      %v1746 = vsel %vm1358, %v1620, 0
      %1748 = vmatprep.subr.bf16.mxu0 0
      %1749 = vmatpush1.bf16.msra.mxu0 %v1689
      %1750 = vmatprep.subr.bf16.mxu0 0
      %1751 = vmatpush1.bf16.msra.mxu0 %v1688
      %1752 = vmatprep.subr.bf16.mxu0 0
      %1753 = vmatpush1.bf16.msra.mxu0 %v1687
      %1754 = vmatprep.subr.bf16.mxu0 0
      %1755 = vmatpush1.bf16.msra.mxu0 %v1686
      %1756 = vmatprep.subr.bf16.mxu0 0
      %1757 = vmatpush1.bf16.msra.mxu0 %v1685
      %1758 = vmatprep.subr.bf16.mxu0 0
      %1759 = vmatpush1.bf16.msra.mxu0 %v1684
      %1760 = vmatprep.subr.bf16.mxu0 0
      %1761 = vmatpush1.bf16.msra.mxu0 %v1683
      %1762 = vmatprep.subr.bf16.mxu0 0
      %1763 = vmatpush1.bf16.msra.mxu0 %v1682
      %1764 = vmatprep.subr.bf16.mxu0 0
      %1765 = vmatpush2.bf16.msra.mxu0 0
      %1766 = vmatprep.subr.bf16.mxu0 0
      %1767 = vmatpush2.bf16.msra.mxu0 0
      %1768 = vmatprep.subr.bf16.mxu0 0
      %1769 = vmatpush2.bf16.msra.mxu0 0
      %1770 = vmatprep.subr.bf16.mxu0 0
      %1771 = vmatpush2.bf16.msra.mxu0 0
      %1772 = vmatprep.subr.bf16.mxu0 0
      %1773 = vmatpush2.bf16.msra.mxu0 0
      %1774 = vmatprep.subr.bf16.mxu0 0
      %1775 = vmatpush2.bf16.msra.mxu0 0
      %1776 = vmatprep.subr.bf16.mxu0 0
      %1777 = vmatpush2.bf16.msra.mxu0 0
      %1778 = vmatprep.subr.bf16.mxu0 0
      %1779 = vmatpush2.bf16.msra.mxu0 %v1690
      %1780 = vmatprep.mubr.bf16.mxu0 %v1701
      %1781 = vmatmul.mubr.bf16.gmra.mxu0 %v1589
      %v1782 = vpop.f32.mrf.mxu0
      %v1783 = vadd.f32 %v1644, %v1782
      %v1784 = vpop.f32.mrf.mxu0
      %v1785 = vpop.f32.mrf.mxu0
      %v1786 = vadd.f32 %v1644, %v1785
      %v1787 = vpop.f32.mrf.mxu0
      %1788 = vmatprep.mubr.bf16.mxu0 %v1704
      %1789 = vmatmul.mubr.bf16.gmra.mxu0 %v1591
      %v1790 = vpop.f32.mrf.mxu0
      %v1791 = vadd.f32 %v1644, %v1790
      %v1792 = vpop.f32.mrf.mxu0
      %v1793 = vpop.f32.mrf.mxu0
      %v1794 = vadd.f32 %v1644, %v1793
      %v1795 = vpop.f32.mrf.mxu0
      %1796 = vmatprep.mubr.bf16.mxu0 %v1707
      %1797 = vmatmul.mubr.bf16.gmra.mxu0 %v1593
      %v1798 = vpop.f32.mrf.mxu0
      %v1799 = vadd.f32 %v1644, %v1798
      %v1800 = vpop.f32.mrf.mxu0
      %v1801 = vpop.f32.mrf.mxu0
      %v1802 = vadd.f32 %v1644, %v1801
      %v1803 = vpop.f32.mrf.mxu0
      %1804 = vmatprep.mubr.bf16.mxu0 %v1710
      %1805 = vmatmul.mubr.bf16.gmra.mxu0 %v1595
      %v1806 = vpop.f32.mrf.mxu0
      %v1807 = vadd.f32 %v1644, %v1806
      %v1808 = vpop.f32.mrf.mxu0
      %v1809 = vpop.f32.mrf.mxu0
      %v1810 = vadd.f32 %v1644, %v1809
      %v1811 = vpop.f32.mrf.mxu0
      %1812 = vmatprep.mubr.bf16.mxu0 %v1713
      %1813 = vmatmul.mubr.bf16.gmra.mxu0 %v1597
      %v1814 = vpop.f32.mrf.mxu0
      %v1815 = vadd.f32 %v1644, %v1814
      %v1816 = vpop.f32.mrf.mxu0
      %v1817 = vpop.f32.mrf.mxu0
      %v1818 = vadd.f32 %v1644, %v1817
      %v1819 = vpop.f32.mrf.mxu0
      %1820 = vmatprep.mubr.bf16.mxu0 %v1716
      %1821 = vmatmul.mubr.bf16.gmra.mxu0 %v1599
      %v1822 = vpop.f32.mrf.mxu0
      %v1823 = vadd.f32 %v1644, %v1822
      %v1824 = vpop.f32.mrf.mxu0
      %v1825 = vpop.f32.mrf.mxu0
      %v1826 = vadd.f32 %v1644, %v1825
      %v1827 = vpop.f32.mrf.mxu0
      %1828 = vmatprep.mubr.bf16.mxu0 %v1719
      %1829 = vmatmul.mubr.bf16.gmra.mxu0 %v1601
      %v1830 = vpop.f32.mrf.mxu0
      %v1831 = vadd.f32 %v1644, %v1830
      %v1832 = vpop.f32.mrf.mxu0
      %v1833 = vpop.f32.mrf.mxu0
      %v1834 = vadd.f32 %v1644, %v1833
      %v1835 = vpop.f32.mrf.mxu0
      %1836 = vmatprep.mubr.bf16.mxu0 %v1722
      %1837 = vmatmul.mubr.bf16.gmra.mxu0 %v1603
      %v1838 = vpop.f32.mrf.mxu0
      %v1839 = vadd.f32 %v1644, %v1838
      %v1840 = vpop.f32.mrf.mxu0
      %v1841 = vpop.f32.mrf.mxu0
      %v1842 = vadd.f32 %v1644, %v1841
      %v1843 = vpop.f32.mrf.mxu0
      %1844 = vmatprep.mubr.bf16.mxu0 %v1725
      %1845 = vmatmul.mubr.bf16.gmra.mxu0 %v1605
      %v1846 = vpop.f32.mrf.mxu0
      %v1847 = vadd.f32 %v1644, %v1846
      %v1848 = vpop.f32.mrf.mxu0
      %v1849 = vpop.f32.mrf.mxu0
      %v1850 = vadd.f32 %v1644, %v1849
      %v1851 = vpop.f32.mrf.mxu0
      %1852 = vmatprep.mubr.bf16.mxu0 %v1728
      %1853 = vmatmul.mubr.bf16.gmra.mxu0 %v1607
      %v1854 = vpop.f32.mrf.mxu0
      %v1855 = vadd.f32 %v1644, %v1854
      %v1856 = vpop.f32.mrf.mxu0
      %v1857 = vpop.f32.mrf.mxu0
      %v1858 = vadd.f32 %v1644, %v1857
      %v1859 = vpop.f32.mrf.mxu0
      %1860 = vmatprep.mubr.bf16.mxu0 %v1731
      %1861 = vmatmul.mubr.bf16.gmra.mxu0 %v1609
      %v1862 = vpop.f32.mrf.mxu0
      %v1863 = vadd.f32 %v1644, %v1862
      %v1864 = vpop.f32.mrf.mxu0
      %v1865 = vpop.f32.mrf.mxu0
      %v1866 = vadd.f32 %v1644, %v1865
      %v1867 = vpop.f32.mrf.mxu0
      %1868 = vmatprep.mubr.bf16.mxu0 %v1734
      %1869 = vmatmul.mubr.bf16.gmra.mxu0 %v1611
      %v1870 = vpop.f32.mrf.mxu0
      %v1871 = vadd.f32 %v1644, %v1870
      %v1872 = vpop.f32.mrf.mxu0
      %v1873 = vpop.f32.mrf.mxu0
      %v1874 = vadd.f32 %v1644, %v1873
      %v1875 = vpop.f32.mrf.mxu0
      %1876 = vmatprep.mubr.bf16.mxu0 %v1737
      %1877 = vmatmul.mubr.bf16.gmra.mxu0 %v1613
      %v1878 = vpop.f32.mrf.mxu0
      %v1879 = vadd.f32 %v1644, %v1878
      %v1880 = vpop.f32.mrf.mxu0
      %v1881 = vpop.f32.mrf.mxu0
      %v1882 = vadd.f32 %v1644, %v1881
      %v1883 = vpop.f32.mrf.mxu0
      %1884 = vmatprep.mubr.bf16.mxu0 %v1740
      %1885 = vmatmul.mubr.bf16.gmra.mxu0 %v1615
      %v1886 = vpop.f32.mrf.mxu0
      %v1887 = vadd.f32 %v1644, %v1886
      %v1888 = vpop.f32.mrf.mxu0
      %v1889 = vpop.f32.mrf.mxu0
      %v1890 = vadd.f32 %v1644, %v1889
      %v1891 = vpop.f32.mrf.mxu0
      %1892 = vmatprep.mubr.bf16.mxu0 %v1743
      %1893 = vmatmul.mubr.bf16.gmra.mxu0 %v1617
      %v1894 = vpop.f32.mrf.mxu0
      %v1895 = vadd.f32 %v1644, %v1894
      %v1896 = vpop.f32.mrf.mxu0
      %v1897 = vpop.f32.mrf.mxu0
      %v1898 = vadd.f32 %v1644, %v1897
      %v1899 = vpop.f32.mrf.mxu0
      %1900 = vmatprep.mubr.bf16.mxu0 %v1746
      %1901 = vmatmul.mubr.bf16.gmra.mxu0 %v1619
      %v1902 = vpop.f32.mrf.mxu0
      %v1903 = vadd.f32 %v1644, %v1902
      %v1904 = vpop.f32.mrf.mxu0
      %v1905 = vpop.f32.mrf.mxu0
      %v1906 = vadd.f32 %v1644, %v1905
      %v1907 = vpop.f32.mrf.mxu0
      %1908 = vdwg.mxu0
      %vm1909 = vcmp.ge.f32.partialorder %v1783, 0.0
      %vm1910 = vcmp.ge.f32.partialorder %v1786, 0.0
      %vm1911 = vcmp.ge.f32.partialorder %v1791, 0.0
      %vm1912 = vcmp.ge.f32.partialorder %v1794, 0.0
      %vm1913 = vcmp.ge.f32.partialorder %v1799, 0.0
      %vm1914 = vcmp.ge.f32.partialorder %v1802, 0.0
      %vm1915 = vcmp.ge.f32.partialorder %v1807, 0.0
      %vm1916 = vcmp.ge.f32.partialorder %v1810, 0.0
      %vm1917 = vcmp.ge.f32.partialorder %v1815, 0.0
      %vm1918 = vcmp.ge.f32.partialorder %v1818, 0.0
      %vm1919 = vcmp.ge.f32.partialorder %v1823, 0.0
      %vm1920 = vcmp.ge.f32.partialorder %v1826, 0.0
      %vm1921 = vcmp.ge.f32.partialorder %v1831, 0.0
      %vm1922 = vcmp.ge.f32.partialorder %v1834, 0.0
      %vm1923 = vcmp.ge.f32.partialorder %v1839, 0.0
      %vm1924 = vcmp.ge.f32.partialorder %v1842, 0.0
      %vm1925 = vcmp.ge.f32.partialorder %v1847, 0.0
      %vm1926 = vcmp.ge.f32.partialorder %v1850, 0.0
      %vm1927 = vcmp.ge.f32.partialorder %v1855, 0.0
      %vm1928 = vcmp.ge.f32.partialorder %v1858, 0.0
      %vm1929 = vcmp.ge.f32.partialorder %v1863, 0.0
      %vm1930 = vcmp.ge.f32.partialorder %v1866, 0.0
      %vm1931 = vcmp.ge.f32.partialorder %v1871, 0.0
      %vm1932 = vcmp.ge.f32.partialorder %v1874, 0.0
      %vm1933 = vcmp.ge.f32.partialorder %v1879, 0.0
      %vm1934 = vcmp.ge.f32.partialorder %v1882, 0.0
      %vm1935 = vcmp.ge.f32.partialorder %v1887, 0.0
      %vm1936 = vcmp.ge.f32.partialorder %v1890, 0.0
      %vm1937 = vcmp.ge.f32.partialorder %v1895, 0.0
      %vm1938 = vcmp.ge.f32.partialorder %v1898, 0.0
      %vm1939 = vcmp.ge.f32.partialorder %v1903, 0.0
      %vm1940 = vcmp.ge.f32.partialorder %v1906, 0.0
      %v1941 = vmul.f32 %v1783, 0.1
      %v1942 = vmul.f32 %v1786, 0.1
      %v1943 = vmul.f32 %v1791, 0.1
      %v1944 = vmul.f32 %v1794, 0.1
      %v1945 = vmul.f32 %v1799, 0.1
      %v1946 = vmul.f32 %v1802, 0.1
      %v1947 = vmul.f32 %v1807, 0.1
      %v1948 = vmul.f32 %v1810, 0.1
      %v1949 = vmul.f32 %v1815, 0.1
      %v1950 = vmul.f32 %v1818, 0.1
      %v1951 = vmul.f32 %v1823, 0.1
      %v1952 = vmul.f32 %v1826, 0.1
      %v1953 = vmul.f32 %v1831, 0.1
      %v1954 = vmul.f32 %v1834, 0.1
      %v1955 = vmul.f32 %v1839, 0.1
      %v1956 = vmul.f32 %v1842, 0.1
      %v1957 = vmul.f32 %v1847, 0.1
      %v1958 = vmul.f32 %v1850, 0.1
      %v1959 = vmul.f32 %v1855, 0.1
      %v1960 = vmul.f32 %v1858, 0.1
      %v1961 = vmul.f32 %v1863, 0.1
      %v1962 = vmul.f32 %v1866, 0.1
      %v1963 = vmul.f32 %v1871, 0.1
      %v1964 = vmul.f32 %v1874, 0.1
      %v1965 = vmul.f32 %v1879, 0.1
      %v1966 = vmul.f32 %v1882, 0.1
      %v1967 = vmul.f32 %v1887, 0.1
      %v1968 = vmul.f32 %v1890, 0.1
      %v1969 = vmul.f32 %v1895, 0.1
      %v1970 = vmul.f32 %v1898, 0.1
      %v1971 = vmul.f32 %v1903, 0.1
      %v1972 = vmul.f32 %v1906, 0.1
      %v1973 = vsel %vm1909, %v1783, %v1941
      %v1974 = vsel %vm1910, %v1786, %v1942
      %v1975 = vsel %vm1911, %v1791, %v1943
      %v1976 = vsel %vm1912, %v1794, %v1944
      %v1977 = vsel %vm1913, %v1799, %v1945
      %v1978 = vsel %vm1914, %v1802, %v1946
      %v1979 = vsel %vm1915, %v1807, %v1947
      %v1980 = vsel %vm1916, %v1810, %v1948
      %v1981 = vsel %vm1917, %v1815, %v1949
      %v1982 = vsel %vm1918, %v1818, %v1950
      %v1983 = vsel %vm1919, %v1823, %v1951
      %v1984 = vsel %vm1920, %v1826, %v1952
      %v1985 = vsel %vm1921, %v1831, %v1953
      %v1986 = vsel %vm1922, %v1834, %v1954
      %v1987 = vsel %vm1923, %v1839, %v1955
      %v1988 = vsel %vm1924, %v1842, %v1956
      %v1989 = vsel %vm1925, %v1847, %v1957
      %v1990 = vsel %vm1926, %v1850, %v1958
      %v1991 = vsel %vm1927, %v1855, %v1959
      %v1992 = vsel %vm1928, %v1858, %v1960
      %v1993 = vsel %vm1929, %v1863, %v1961
      %v1994 = vsel %vm1930, %v1866, %v1962
      %v1995 = vsel %vm1931, %v1871, %v1963
      %v1996 = vsel %vm1932, %v1874, %v1964
      %v1997 = vsel %vm1933, %v1879, %v1965
      %v1998 = vsel %vm1934, %v1882, %v1966
      %v1999 = vsel %vm1935, %v1887, %v1967
      %v2000 = vsel %vm1936, %v1890, %v1968
      %v2001 = vsel %vm1937, %v1895, %v1969
      %v2002 = vsel %vm1938, %v1898, %v1970
      %v2003 = vsel %vm1939, %v1903, %v1971
      %v2004 = vsel %vm1940, %v1906, %v1972
      %2005 = vst.msk [vmem:[%s170] sm:$0xff] %vm1358, %v1973
      %2006 = vst.msk [vmem:[%s170 + $0x8] sm:$0xff] %vm1358, %v1974
      %2007 = vst.msk [vmem:[%s170 + $0x10] sm:$0xff] %vm1358, %v1975
      %2008 = vst.msk [vmem:[%s170 + $0x18] sm:$0xff] %vm1358, %v1976
      %2009 = vst.msk [vmem:[%s170 + $0x20] sm:$0xff] %vm1358, %v1977
      %2010 = vst.msk [vmem:[%s170 + $0x28] sm:$0xff] %vm1358, %v1978
      %2011 = vst.msk [vmem:[%s170 + $0x30] sm:$0xff] %vm1358, %v1979
      %2012 = vst.msk [vmem:[%s170 + $0x38] sm:$0xff] %vm1358, %v1980
      %2013 = vst.msk [vmem:[%s170 + $0x40] sm:$0xff] %vm1358, %v1981
      %2014 = vst.msk [vmem:[%s170 + $0x48] sm:$0xff] %vm1358, %v1982
      %2015 = vst.msk [vmem:[%s170 + $0x50] sm:$0xff] %vm1358, %v1983
      %2016 = vst.msk [vmem:[%s170 + $0x58] sm:$0xff] %vm1358, %v1984
      %2017 = vst.msk [vmem:[%s170 + $0x60] sm:$0xff] %vm1358, %v1985
      %2018 = vst.msk [vmem:[%s170 + $0x68] sm:$0xff] %vm1358, %v1986
      %2019 = vst.msk [vmem:[%s170 + $0x70] sm:$0xff] %vm1358, %v1987
      %2020 = vst.msk [vmem:[%s170 + $0x78] sm:$0xff] %vm1358, %v1988
      %2021 = vst.msk [vmem:[%s170 + $0x80] sm:$0xff] %vm1358, %v1989
      %2022 = vst.msk [vmem:[%s170 + $0x88] sm:$0xff] %vm1358, %v1990
      %2023 = vst.msk [vmem:[%s170 + $0x90] sm:$0xff] %vm1358, %v1991
      %2024 = vst.msk [vmem:[%s170 + $0x98] sm:$0xff] %vm1358, %v1992
      %2025 = vst.msk [vmem:[%s170 + $0xa0] sm:$0xff] %vm1358, %v1993
      %2026 = vst.msk [vmem:[%s170 + $0xa8] sm:$0xff] %vm1358, %v1994
      %2027 = vst.msk [vmem:[%s170 + $0xb0] sm:$0xff] %vm1358, %v1995
      %2028 = vst.msk [vmem:[%s170 + $0xb8] sm:$0xff] %vm1358, %v1996
      %2029 = vst.msk [vmem:[%s170 + $0xc0] sm:$0xff] %vm1358, %v1997
      %2030 = vst.msk [vmem:[%s170 + $0xc8] sm:$0xff] %vm1358, %v1998
      %2031 = vst.msk [vmem:[%s170 + $0xd0] sm:$0xff] %vm1358, %v1999
      %2032 = vst.msk [vmem:[%s170 + $0xd8] sm:$0xff] %vm1358, %v2000
      %2033 = vst.msk [vmem:[%s170 + $0xe0] sm:$0xff] %vm1358, %v2001
      %2034 = vst.msk [vmem:[%s170 + $0xe8] sm:$0xff] %vm1358, %v2002
      %2035 = vst.msk [vmem:[%s170 + $0xf0] sm:$0xff] %vm1358, %v2003
      %2036 = vst.msk [vmem:[%s170 + $0xf8] sm:$0xff] %vm1358, %v2004
      %p2037 = scmp.lt.s32.totalorder %s14, 1
      %s2038 = scalar_select %p2037, %s14, 1
      %s2039 = smul.addr %s2038, 32
      %s2040 = smul.addr %s2039, 8
      %s2041 = scalar_lea.vmem %s3, %s2040
      // Predicated region
      $region33: #{up_forward.5} parent=31 // pred_check
        %p2042 = pneg %p100
      $region34: #{up_forward.5} parent=31 // pred_check_branch
        %2044 = sbr.rel (%p2042) target = $region36
      $region35: #{up_forward.5} parent=31 // pred_region
        _
      $region36: #{up_forward.5} parent=31 // pred_fallthru
        _
    $region32: #{up_forward.5} parent=5 // pred_fallthru
      _
    %p2045 = scmp.le.s32.totalorder 2, %s9
    // Predicated region
    $region37: #{up_forward.5} parent=5 // pred_check
      %p2046 = pneg %p2045
    $region38: #{up_forward.5} parent=5 // pred_check_branch
      %2048 = sbr.rel (%p2046) target = $region40
    $region39: #{up_forward.5} parent=5 // pred_region
      %s2049 = ssub.s32 %s9, 2
      // Predicated region
      $region41: #{up_forward.5} parent=39 // pred_check
        %p2050 = pneg %p106
      $region42: #{up_forward.5} parent=39 // pred_check_branch
        %2052 = sbr.rel (%p2050) target = $region44
      $region43: #{up_forward.5} parent=39 // pred_region
        %p2053 = scmp.lt.s32.totalorder %s15, 1
        %s2054 = scalar_select %p2053, %s15, 1
        %s2055 = smul.addr %s2054, 32
        %s2056 = smul.addr %s2055, 8
        %s2057 = scalar_lea.vmem %s3, %s2056
      $region44: #{up_forward.5} parent=39 // pred_fallthru
        _
    $region40: #{up_forward.5} parent=5 // pred_fallthru
      _
  $region6: #{up_forward.5} parent=0 // loop_footer
    %s13 = sadd.s32 1, %s9
  $region7: #{up_forward.5} parent=0 // loop_footer_branch
    %8 = sbr.rel target = $region3
  $region8: #{up_forward.5} parent=0 // loop_exit
    _

// kernel: up_forward.4
$region0: #{up_forward.4}
  #allocation0 [shape = 'u32[]', space=smem, size = 0x4, offset = 0x4, fixed_abs, tag = 'smem constant byte address 0x4 - core index']
  #allocation1 [shape = 'u32[144,128]{1,0:T(1,128)}', space=vmem, size = 0x12000, scoped, tag = 'internal scratch']
  %s0 = inlined_call_operand.vmem [shape: bf16[512,32], index: 0, kind: input, shape index: {}]
  %s1 = inlined_call_operand.vmem [shape: f32[512,32], index: 1, kind: input, shape index: {}]
  %s2 = inlined_call_operand.vmem [shape: bf16[32,16], index: 2, kind: input, shape index: {}]
  %s3 = inlined_call_operand.vmem [shape: bf16[32,16], index: 3, kind: input, shape index: {}]
  %s4 = inlined_call_operand.vmem [shape: f32[1,16], index: 4, kind: input, shape index: {}]
  %s5 = inlined_call_operand.vmem [shape: bf16[16,16], index: 5, kind: input, shape index: {}]
  %s6 = inlined_call_operand.vmem [shape: f32[1,16], index: 6, kind: input, shape index: {}]
  %s7 = inlined_call_operand.vmem [shape: f32[512,16], index: 7, kind: output, shape index: {}]
  %s8 = sld [smem:[#allocation0]]
  $region38: #{up_forward.4} parent=0
    _
  %s10 = ssub.s32 1, %s8
  %s11 = scalar_select 0, %s10, %s8
  // Predicated region
  $region2: #{up_forward.4} parent=0 // pred_check
    _
  $region3: #{up_forward.4} parent=0 // pred_check_branch
    %13 = sbr.rel (0) target = $region5
  $region4: #{up_forward.4} parent=0 // pred_region
    _
  $region5: #{up_forward.4} parent=0 // pred_fallthru
    _
  // Predicated region
  $region6: #{up_forward.4} parent=0 // pred_check
    _
  $region7: #{up_forward.4} parent=0 // pred_check_branch
    %15 = sbr.rel (0) target = $region9
  $region8: #{up_forward.4} parent=0 // pred_region
    _
  $region9: #{up_forward.4} parent=0 // pred_fallthru
    _
  // Predicated region
  $region10: #{up_forward.4} parent=0 // pred_check
    _
  $region11: #{up_forward.4} parent=0 // pred_check_branch
    %17 = sbr.rel (0) target = $region13
  $region12: #{up_forward.4} parent=0 // pred_region
    _
  $region13: #{up_forward.4} parent=0 // pred_fallthru
    _
  // Predicated region
  $region14: #{up_forward.4} parent=0 // pred_check
    _
  $region15: #{up_forward.4} parent=0 // pred_check_branch
    %19 = sbr.rel (0) target = $region17
  $region16: #{up_forward.4} parent=0 // pred_region
    _
  $region17: #{up_forward.4} parent=0 // pred_fallthru
    _
  // Predicated region
  $region18: #{up_forward.4} parent=0 // pred_check
    _
  $region19: #{up_forward.4} parent=0 // pred_check_branch
    %21 = sbr.rel (0) target = $region21
  $region20: #{up_forward.4} parent=0 // pred_region
    _
  $region21: #{up_forward.4} parent=0 // pred_fallthru
    _
  // Predicated region
  $region22: #{up_forward.4} parent=0 // pred_check
    _
  $region23: #{up_forward.4} parent=0 // pred_check_branch
    %23 = sbr.rel (0) target = $region25
  $region24: #{up_forward.4} parent=0 // pred_region
    _
  $region25: #{up_forward.4} parent=0 // pred_fallthru
    _
  // Predicated region
  $region26: #{up_forward.4} parent=0 // pred_check
    _
  $region27: #{up_forward.4} parent=0 // pred_check_branch
    %25 = sbr.rel (0) target = $region29
  $region28: #{up_forward.4} parent=0 // pred_region
    _
  $region29: #{up_forward.4} parent=0 // pred_fallthru
    _
  %v27 = vld [vmem:[%s0] sm:$0xf]
  %v28 = vld [vmem:[%s0 + $0x4] sm:$0xf]
  %v29 = vld [vmem:[%s0 + $0x8] sm:$0xf]
  %v30 = vld [vmem:[%s0 + $0xc] sm:$0xf]
  %v31 = vld [vmem:[%s0 + $0x10] sm:$0xf]
  %v32 = vld [vmem:[%s0 + $0x14] sm:$0xf]
  %v33 = vld [vmem:[%s0 + $0x18] sm:$0xf]
  %v34 = vld [vmem:[%s0 + $0x1c] sm:$0xf]
  %v35 = vld [vmem:[%s0 + $0x20] sm:$0xf]
  %v36 = vld [vmem:[%s0 + $0x24] sm:$0xf]
  %v37 = vld [vmem:[%s0 + $0x28] sm:$0xf]
  %v38 = vld [vmem:[%s0 + $0x2c] sm:$0xf]
  %v39 = vld [vmem:[%s0 + $0x30] sm:$0xf]
  %v40 = vld [vmem:[%s0 + $0x34] sm:$0xf]
  %v41 = vld [vmem:[%s0 + $0x38] sm:$0xf]
  %v42 = vld [vmem:[%s0 + $0x3c] sm:$0xf]
  %v43 = vld [vmem:[%s0 + $0x40] sm:$0xf]
  %v44 = vld [vmem:[%s0 + $0x44] sm:$0xf]
  %v45 = vld [vmem:[%s0 + $0x48] sm:$0xf]
  %v46 = vld [vmem:[%s0 + $0x4c] sm:$0xf]
  %v47 = vld [vmem:[%s0 + $0x50] sm:$0xf]
  %v48 = vld [vmem:[%s0 + $0x54] sm:$0xf]
  %v49 = vld [vmem:[%s0 + $0x58] sm:$0xf]
  %v50 = vld [vmem:[%s0 + $0x5c] sm:$0xf]
  %v51 = vld [vmem:[%s0 + $0x60] sm:$0xf]
  %v52 = vld [vmem:[%s0 + $0x64] sm:$0xf]
  %v53 = vld [vmem:[%s0 + $0x68] sm:$0xf]
  %v54 = vld [vmem:[%s0 + $0x6c] sm:$0xf]
  %v55 = vld [vmem:[%s0 + $0x70] sm:$0xf]
  %v56 = vld [vmem:[%s0 + $0x74] sm:$0xf]
  %v57 = vld [vmem:[%s0 + $0x78] sm:$0xf]
  %v58 = vld [vmem:[%s0 + $0x7c] sm:$0xf]
  %v59 = vld [vmem:[%s0 + $0x80] sm:$0xf]
  %v60 = vld [vmem:[%s0 + $0x84] sm:$0xf]
  %v61 = vld [vmem:[%s0 + $0x88] sm:$0xf]
  %v62 = vld [vmem:[%s0 + $0x8c] sm:$0xf]
  %v63 = vld [vmem:[%s0 + $0x90] sm:$0xf]
  %v64 = vld [vmem:[%s0 + $0x94] sm:$0xf]
  %v65 = vld [vmem:[%s0 + $0x98] sm:$0xf]
  %v66 = vld [vmem:[%s0 + $0x9c] sm:$0xf]
  %v67 = vld [vmem:[%s0 + $0xa0] sm:$0xf]
  %v68 = vld [vmem:[%s0 + $0xa4] sm:$0xf]
  %v69 = vld [vmem:[%s0 + $0xa8] sm:$0xf]
  %v70 = vld [vmem:[%s0 + $0xac] sm:$0xf]
  %v71 = vld [vmem:[%s0 + $0xb0] sm:$0xf]
  %v72 = vld [vmem:[%s0 + $0xb4] sm:$0xf]
  %v73 = vld [vmem:[%s0 + $0xb8] sm:$0xf]
  %v74 = vld [vmem:[%s0 + $0xbc] sm:$0xf]
  %v75 = vld [vmem:[%s0 + $0xc0] sm:$0xf]
  %v76 = vld [vmem:[%s0 + $0xc4] sm:$0xf]
  %v77 = vld [vmem:[%s0 + $0xc8] sm:$0xf]
  %v78 = vld [vmem:[%s0 + $0xcc] sm:$0xf]
  %v79 = vld [vmem:[%s0 + $0xd0] sm:$0xf]
  %v80 = vld [vmem:[%s0 + $0xd4] sm:$0xf]
  %v81 = vld [vmem:[%s0 + $0xd8] sm:$0xf]
  %v82 = vld [vmem:[%s0 + $0xdc] sm:$0xf]
  %v83 = vld [vmem:[%s0 + $0xe0] sm:$0xf]
  %v84 = vld [vmem:[%s0 + $0xe4] sm:$0xf]
  %v85 = vld [vmem:[%s0 + $0xe8] sm:$0xf]
  %v86 = vld [vmem:[%s0 + $0xec] sm:$0xf]
  %v87 = vld [vmem:[%s0 + $0xf0] sm:$0xf]
  %v88 = vld [vmem:[%s0 + $0xf4] sm:$0xf]
  %v89 = vld [vmem:[%s0 + $0xf8] sm:$0xf]
  %v90 = vld [vmem:[%s0 + $0xfc] sm:$0xf]
  %v91 = vld [vmem:[%s2] sm:$0xf]
  %v92 = vld [vmem:[%s2 + $0x4] sm:$0xf]
  %v93 = vld [vmem:[%s2 + $0x8] sm:$0xf]
  %v94 = vld [vmem:[%s2 + $0xc] sm:$0xf]
  %v95 = vld [vmem:[%s1] sm:$0xff]
  %v96 = vld [vmem:[%s1 + $0x8] sm:$0xff]
  %v97 = vld [vmem:[%s1 + $0x10] sm:$0xff]
  %v98 = vld [vmem:[%s1 + $0x18] sm:$0xff]
  %v99 = vld [vmem:[%s1 + $0x20] sm:$0xff]
  %v100 = vld [vmem:[%s1 + $0x28] sm:$0xff]
  %v101 = vld [vmem:[%s1 + $0x30] sm:$0xff]
  %v102 = vld [vmem:[%s1 + $0x38] sm:$0xff]
  %v103 = vld [vmem:[%s1 + $0x40] sm:$0xff]
  %v104 = vld [vmem:[%s1 + $0x48] sm:$0xff]
  %v105 = vld [vmem:[%s1 + $0x50] sm:$0xff]
  %v106 = vld [vmem:[%s1 + $0x58] sm:$0xff]
  %v107 = vld [vmem:[%s1 + $0x60] sm:$0xff]
  %v108 = vld [vmem:[%s1 + $0x68] sm:$0xff]
  %v109 = vld [vmem:[%s1 + $0x70] sm:$0xff]
  %v110 = vld [vmem:[%s1 + $0x78] sm:$0xff]
  %v111 = vld [vmem:[%s1 + $0x80] sm:$0xff]
  %v112 = vld [vmem:[%s1 + $0x88] sm:$0xff]
  %v113 = vld [vmem:[%s1 + $0x90] sm:$0xff]
  %v114 = vld [vmem:[%s1 + $0x98] sm:$0xff]
  %v115 = vld [vmem:[%s1 + $0xa0] sm:$0xff]
  %v116 = vld [vmem:[%s1 + $0xa8] sm:$0xff]
  %v117 = vld [vmem:[%s1 + $0xb0] sm:$0xff]
  %v118 = vld [vmem:[%s1 + $0xb8] sm:$0xff]
  %v119 = vld [vmem:[%s1 + $0xc0] sm:$0xff]
  %v120 = vld [vmem:[%s1 + $0xc8] sm:$0xff]
  %v121 = vld [vmem:[%s1 + $0xd0] sm:$0xff]
  %v122 = vld [vmem:[%s1 + $0xd8] sm:$0xff]
  %v123 = vld [vmem:[%s1 + $0xe0] sm:$0xff]
  %v124 = vld [vmem:[%s1 + $0xe8] sm:$0xff]
  %v125 = vld [vmem:[%s1 + $0xf0] sm:$0xff]
  %v126 = vld [vmem:[%s1 + $0xf8] sm:$0xff]
  %v127 = vld [vmem:[%s1 + $0x100] sm:$0xff]
  %v128 = vld [vmem:[%s1 + $0x108] sm:$0xff]
  %v129 = vld [vmem:[%s1 + $0x110] sm:$0xff]
  %v130 = vld [vmem:[%s1 + $0x118] sm:$0xff]
  %v131 = vld [vmem:[%s1 + $0x120] sm:$0xff]
  %v132 = vld [vmem:[%s1 + $0x128] sm:$0xff]
  %v133 = vld [vmem:[%s1 + $0x130] sm:$0xff]
  %v134 = vld [vmem:[%s1 + $0x138] sm:$0xff]
  %v135 = vld [vmem:[%s1 + $0x140] sm:$0xff]
  %v136 = vld [vmem:[%s1 + $0x148] sm:$0xff]
  %v137 = vld [vmem:[%s1 + $0x150] sm:$0xff]
  %v138 = vld [vmem:[%s1 + $0x158] sm:$0xff]
  %v139 = vld [vmem:[%s1 + $0x160] sm:$0xff]
  %v140 = vld [vmem:[%s1 + $0x168] sm:$0xff]
  %v141 = vld [vmem:[%s1 + $0x170] sm:$0xff]
  %v142 = vld [vmem:[%s1 + $0x178] sm:$0xff]
  %v143 = vld [vmem:[%s1 + $0x180] sm:$0xff]
  %v144 = vld [vmem:[%s1 + $0x188] sm:$0xff]
  %v145 = vld [vmem:[%s1 + $0x190] sm:$0xff]
  %v146 = vld [vmem:[%s1 + $0x198] sm:$0xff]
  %v147 = vld [vmem:[%s1 + $0x1a0] sm:$0xff]
  %v148 = vld [vmem:[%s1 + $0x1a8] sm:$0xff]
  %v149 = vld [vmem:[%s1 + $0x1b0] sm:$0xff]
  %v150 = vld [vmem:[%s1 + $0x1b8] sm:$0xff]
  %v151 = vld [vmem:[%s1 + $0x1c0] sm:$0xff]
  %v152 = vld [vmem:[%s1 + $0x1c8] sm:$0xff]
  %v153 = vld [vmem:[%s1 + $0x1d0] sm:$0xff]
  %v154 = vld [vmem:[%s1 + $0x1d8] sm:$0xff]
  %v155 = vld [vmem:[%s1 + $0x1e0] sm:$0xff]
  %v156 = vld [vmem:[%s1 + $0x1e8] sm:$0xff]
  %v157 = vld [vmem:[%s1 + $0x1f0] sm:$0xff]
  %v158 = vld [vmem:[%s1 + $0x1f8] sm:$0xff]
  %v159 = vpack.c.bf16 %v96, %v95
  %v160 = vpack.c.bf16 %v98, %v97
  %v161 = vpack.c.bf16 %v100, %v99
  %v162 = vpack.c.bf16 %v102, %v101
  %v163 = vpack.c.bf16 %v104, %v103
  %v164 = vpack.c.bf16 %v106, %v105
  %v165 = vpack.c.bf16 %v108, %v107
  %v166 = vpack.c.bf16 %v110, %v109
  %v167 = vpack.c.bf16 %v112, %v111
  %v168 = vpack.c.bf16 %v114, %v113
  %v169 = vpack.c.bf16 %v116, %v115
  %v170 = vpack.c.bf16 %v118, %v117
  %v171 = vpack.c.bf16 %v120, %v119
  %v172 = vpack.c.bf16 %v122, %v121
  %v173 = vpack.c.bf16 %v124, %v123
  %v174 = vpack.c.bf16 %v126, %v125
  %v175 = vpack.c.bf16 %v128, %v127
  %v176 = vpack.c.bf16 %v130, %v129
  %v177 = vpack.c.bf16 %v132, %v131
  %v178 = vpack.c.bf16 %v134, %v133
  %v179 = vpack.c.bf16 %v136, %v135
  %v180 = vpack.c.bf16 %v138, %v137
  %v181 = vpack.c.bf16 %v140, %v139
  %v182 = vpack.c.bf16 %v142, %v141
  %v183 = vpack.c.bf16 %v144, %v143
  %v184 = vpack.c.bf16 %v146, %v145
  %v185 = vpack.c.bf16 %v148, %v147
  %v186 = vpack.c.bf16 %v150, %v149
  %v187 = vpack.c.bf16 %v152, %v151
  %v188 = vpack.c.bf16 %v154, %v153
  %v189 = vpack.c.bf16 %v156, %v155
  %v190 = vpack.c.bf16 %v158, %v157
  %v191 = vld [vmem:[%s3] sm:$0xf]
  %v192 = vld [vmem:[%s3 + $0x4] sm:$0xf]
  %v193 = vld [vmem:[%s3 + $0x8] sm:$0xf]
  %v194 = vld [vmem:[%s3 + $0xc] sm:$0xf]
  %v199 = vunpack.c.l.b16 %v191
  %v200 = vunpack.c.l.b16 %v192
  %v201 = vunpack.c.l.b16 %v193
  %v202 = vunpack.c.l.b16 %v194
  %v203 = vpack.c.b16 %v200, %v199
  %v204 = vpack.c.b16 %v202, %v201
  %vm207 = vcmask 261120
  %v209 = vsel %vm207, %v159, 0
  %v212 = vsel %vm207, %v160, 0
  %v215 = vsel %vm207, %v161, 0
  %v218 = vsel %vm207, %v162, 0
  %v221 = vsel %vm207, %v163, 0
  %v224 = vsel %vm207, %v164, 0
  %v227 = vsel %vm207, %v165, 0
  %v230 = vsel %vm207, %v166, 0
  %v233 = vsel %vm207, %v167, 0
  %v236 = vsel %vm207, %v168, 0
  %v239 = vsel %vm207, %v169, 0
  %v242 = vsel %vm207, %v170, 0
  %v245 = vsel %vm207, %v171, 0
  %v248 = vsel %vm207, %v172, 0
  %v251 = vsel %vm207, %v173, 0
  %v254 = vsel %vm207, %v174, 0
  %v257 = vsel %vm207, %v175, 0
  %v260 = vsel %vm207, %v176, 0
  %v263 = vsel %vm207, %v177, 0
  %v266 = vsel %vm207, %v178, 0
  %v269 = vsel %vm207, %v179, 0
  %v272 = vsel %vm207, %v180, 0
  %v275 = vsel %vm207, %v181, 0
  %v278 = vsel %vm207, %v182, 0
  %v281 = vsel %vm207, %v183, 0
  %v284 = vsel %vm207, %v184, 0
  %v287 = vsel %vm207, %v185, 0
  %v290 = vsel %vm207, %v186, 0
  %v293 = vsel %vm207, %v187, 0
  %v296 = vsel %vm207, %v188, 0
  %v299 = vsel %vm207, %v189, 0
  %v302 = vsel %vm207, %v190, 0
  %304 = vmatprep.subr.bf16.mxu0 0
  %305 = vmatpush1.bf16.msra.mxu0 0
  %306 = vmatprep.subr.bf16.mxu0 0
  %307 = vmatpush1.bf16.msra.mxu0 0
  %308 = vmatprep.subr.bf16.mxu0 0
  %309 = vmatpush1.bf16.msra.mxu0 0
  %310 = vmatprep.subr.bf16.mxu0 0
  %311 = vmatpush1.bf16.msra.mxu0 0
  %312 = vmatprep.subr.bf16.mxu0 0
  %313 = vmatpush1.bf16.msra.mxu0 0
  %314 = vmatprep.subr.bf16.mxu0 0
  %315 = vmatpush1.bf16.msra.mxu0 0
  %316 = vmatprep.subr.bf16.mxu0 0
  %317 = vmatpush1.bf16.msra.mxu0 %v204
  %318 = vmatprep.subr.bf16.mxu0 0
  %319 = vmatpush1.bf16.msra.mxu0 %v203
  %320 = vmatprep.subr.bf16.mxu0 0
  %321 = vmatpush2.bf16.msra.mxu0 0
  %322 = vmatprep.subr.bf16.mxu0 0
  %323 = vmatpush2.bf16.msra.mxu0 0
  %324 = vmatprep.subr.bf16.mxu0 0
  %325 = vmatpush2.bf16.msra.mxu0 0
  %326 = vmatprep.subr.bf16.mxu0 0
  %327 = vmatpush2.bf16.msra.mxu0 0
  %328 = vmatprep.subr.bf16.mxu0 0
  %329 = vmatpush2.bf16.msra.mxu0 0
  %330 = vmatprep.subr.bf16.mxu0 0
  %331 = vmatpush2.bf16.msra.mxu0 0
  %332 = vmatprep.subr.bf16.mxu0 0
  %333 = vmatpush2.bf16.msra.mxu0 0
  %334 = vmatprep.subr.bf16.mxu0 0
  %335 = vmatpush2.bf16.msra.mxu0 0
  %336 = vmatprep.mubr.bf16.mxu0 0
  %337 = vmatmul.mubr.bf16.gmra.mxu0 %v209
  %v338 = vpop.f32.mrf.mxu0
  %v339 = vadd.f32 0.0, %v338
  %v340 = vpop.f32.mrf.mxu0
  %v341 = vpop.f32.mrf.mxu0
  %v342 = vadd.f32 0.0, %v341
  %v343 = vpop.f32.mrf.mxu0
  %344 = vmatprep.mubr.bf16.mxu0 0
  %345 = vmatmul.mubr.bf16.gmra.mxu0 %v212
  %v346 = vpop.f32.mrf.mxu0
  %v347 = vadd.f32 0.0, %v346
  %v348 = vpop.f32.mrf.mxu0
  %v349 = vpop.f32.mrf.mxu0
  %v350 = vadd.f32 0.0, %v349
  %v351 = vpop.f32.mrf.mxu0
  %352 = vmatprep.mubr.bf16.mxu0 0
  %353 = vmatmul.mubr.bf16.gmra.mxu0 %v215
  %v354 = vpop.f32.mrf.mxu0
  %v355 = vadd.f32 0.0, %v354
  %v356 = vpop.f32.mrf.mxu0
  %v357 = vpop.f32.mrf.mxu0
  %v358 = vadd.f32 0.0, %v357
  %v359 = vpop.f32.mrf.mxu0
  %360 = vmatprep.mubr.bf16.mxu0 0
  %361 = vmatmul.mubr.bf16.gmra.mxu0 %v218
  %v362 = vpop.f32.mrf.mxu0
  %v363 = vadd.f32 0.0, %v362
  %v364 = vpop.f32.mrf.mxu0
  %v365 = vpop.f32.mrf.mxu0
  %v366 = vadd.f32 0.0, %v365
  %v367 = vpop.f32.mrf.mxu0
  %368 = vmatprep.mubr.bf16.mxu0 0
  %369 = vmatmul.mubr.bf16.gmra.mxu0 %v221
  %v370 = vpop.f32.mrf.mxu0
  %v371 = vadd.f32 0.0, %v370
  %v372 = vpop.f32.mrf.mxu0
  %v373 = vpop.f32.mrf.mxu0
  %v374 = vadd.f32 0.0, %v373
  %v375 = vpop.f32.mrf.mxu0
  %376 = vmatprep.mubr.bf16.mxu0 0
  %377 = vmatmul.mubr.bf16.gmra.mxu0 %v224
  %v378 = vpop.f32.mrf.mxu0
  %v379 = vadd.f32 0.0, %v378
  %v380 = vpop.f32.mrf.mxu0
  %v381 = vpop.f32.mrf.mxu0
  %v382 = vadd.f32 0.0, %v381
  %v383 = vpop.f32.mrf.mxu0
  %384 = vmatprep.mubr.bf16.mxu0 0
  %385 = vmatmul.mubr.bf16.gmra.mxu0 %v227
  %v386 = vpop.f32.mrf.mxu0
  %v387 = vadd.f32 0.0, %v386
  %v388 = vpop.f32.mrf.mxu0
  %v389 = vpop.f32.mrf.mxu0
  %v390 = vadd.f32 0.0, %v389
  %v391 = vpop.f32.mrf.mxu0
  %392 = vmatprep.mubr.bf16.mxu0 0
  %393 = vmatmul.mubr.bf16.gmra.mxu0 %v230
  %v394 = vpop.f32.mrf.mxu0
  %v395 = vadd.f32 0.0, %v394
  %v396 = vpop.f32.mrf.mxu0
  %v397 = vpop.f32.mrf.mxu0
  %v398 = vadd.f32 0.0, %v397
  %v399 = vpop.f32.mrf.mxu0
  %400 = vmatprep.mubr.bf16.mxu0 0
  %401 = vmatmul.mubr.bf16.gmra.mxu0 %v233
  %v402 = vpop.f32.mrf.mxu0
  %v403 = vadd.f32 0.0, %v402
  %v404 = vpop.f32.mrf.mxu0
  %v405 = vpop.f32.mrf.mxu0
  %v406 = vadd.f32 0.0, %v405
  %v407 = vpop.f32.mrf.mxu0
  %408 = vmatprep.mubr.bf16.mxu0 0
  %409 = vmatmul.mubr.bf16.gmra.mxu0 %v236
  %v410 = vpop.f32.mrf.mxu0
  %v411 = vadd.f32 0.0, %v410
  %v412 = vpop.f32.mrf.mxu0
  %v413 = vpop.f32.mrf.mxu0
  %v414 = vadd.f32 0.0, %v413
  %v415 = vpop.f32.mrf.mxu0
  %416 = vmatprep.mubr.bf16.mxu0 0
  %417 = vmatmul.mubr.bf16.gmra.mxu0 %v239
  %v418 = vpop.f32.mrf.mxu0
  %v419 = vadd.f32 0.0, %v418
  %v420 = vpop.f32.mrf.mxu0
  %v421 = vpop.f32.mrf.mxu0
  %v422 = vadd.f32 0.0, %v421
  %v423 = vpop.f32.mrf.mxu0
  %424 = vmatprep.mubr.bf16.mxu0 0
  %425 = vmatmul.mubr.bf16.gmra.mxu0 %v242
  %v426 = vpop.f32.mrf.mxu0
  %v427 = vadd.f32 0.0, %v426
  %v428 = vpop.f32.mrf.mxu0
  %v429 = vpop.f32.mrf.mxu0
  %v430 = vadd.f32 0.0, %v429
  %v431 = vpop.f32.mrf.mxu0
  %432 = vmatprep.mubr.bf16.mxu0 0
  %433 = vmatmul.mubr.bf16.gmra.mxu0 %v245
  %v434 = vpop.f32.mrf.mxu0
  %v435 = vadd.f32 0.0, %v434
  %v436 = vpop.f32.mrf.mxu0
  %v437 = vpop.f32.mrf.mxu0
  %v438 = vadd.f32 0.0, %v437
  %v439 = vpop.f32.mrf.mxu0
  %440 = vmatprep.mubr.bf16.mxu0 0
  %441 = vmatmul.mubr.bf16.gmra.mxu0 %v248
  %v442 = vpop.f32.mrf.mxu0
  %v443 = vadd.f32 0.0, %v442
  %v444 = vpop.f32.mrf.mxu0
  %v445 = vpop.f32.mrf.mxu0
  %v446 = vadd.f32 0.0, %v445
  %v447 = vpop.f32.mrf.mxu0
  %448 = vmatprep.mubr.bf16.mxu0 0
  %449 = vmatmul.mubr.bf16.gmra.mxu0 %v251
  %v450 = vpop.f32.mrf.mxu0
  %v451 = vadd.f32 0.0, %v450
  %v452 = vpop.f32.mrf.mxu0
  %v453 = vpop.f32.mrf.mxu0
  %v454 = vadd.f32 0.0, %v453
  %v455 = vpop.f32.mrf.mxu0
  %456 = vmatprep.mubr.bf16.mxu0 0
  %457 = vmatmul.mubr.bf16.gmra.mxu0 %v254
  %v458 = vpop.f32.mrf.mxu0
  %v459 = vadd.f32 0.0, %v458
  %v460 = vpop.f32.mrf.mxu0
  %v461 = vpop.f32.mrf.mxu0
  %v462 = vadd.f32 0.0, %v461
  %v463 = vpop.f32.mrf.mxu0
  %464 = vmatprep.mubr.bf16.mxu0 0
  %465 = vmatmul.mubr.bf16.gmra.mxu0 %v257
  %v466 = vpop.f32.mrf.mxu0
  %v467 = vadd.f32 0.0, %v466
  %v468 = vpop.f32.mrf.mxu0
  %v469 = vpop.f32.mrf.mxu0
  %v470 = vadd.f32 0.0, %v469
  %v471 = vpop.f32.mrf.mxu0
  %472 = vmatprep.mubr.bf16.mxu0 0
  %473 = vmatmul.mubr.bf16.gmra.mxu0 %v260
  %v474 = vpop.f32.mrf.mxu0
  %v475 = vadd.f32 0.0, %v474
  %v476 = vpop.f32.mrf.mxu0
  %v477 = vpop.f32.mrf.mxu0
  %v478 = vadd.f32 0.0, %v477
  %v479 = vpop.f32.mrf.mxu0
  %480 = vmatprep.mubr.bf16.mxu0 0
  %481 = vmatmul.mubr.bf16.gmra.mxu0 %v263
  %v482 = vpop.f32.mrf.mxu0
  %v483 = vadd.f32 0.0, %v482
  %v484 = vpop.f32.mrf.mxu0
  %v485 = vpop.f32.mrf.mxu0
  %v486 = vadd.f32 0.0, %v485
  %v487 = vpop.f32.mrf.mxu0
  %488 = vmatprep.mubr.bf16.mxu0 0
  %489 = vmatmul.mubr.bf16.gmra.mxu0 %v266
  %v490 = vpop.f32.mrf.mxu0
  %v491 = vadd.f32 0.0, %v490
  %v492 = vpop.f32.mrf.mxu0
  %v493 = vpop.f32.mrf.mxu0
  %v494 = vadd.f32 0.0, %v493
  %v495 = vpop.f32.mrf.mxu0
  %496 = vmatprep.mubr.bf16.mxu0 0
  %497 = vmatmul.mubr.bf16.gmra.mxu0 %v269
  %v498 = vpop.f32.mrf.mxu0
  %v499 = vadd.f32 0.0, %v498
  %v500 = vpop.f32.mrf.mxu0
  %v501 = vpop.f32.mrf.mxu0
  %v502 = vadd.f32 0.0, %v501
  %v503 = vpop.f32.mrf.mxu0
  %504 = vmatprep.mubr.bf16.mxu0 0
  %505 = vmatmul.mubr.bf16.gmra.mxu0 %v272
  %v506 = vpop.f32.mrf.mxu0
  %v507 = vadd.f32 0.0, %v506
  %v508 = vpop.f32.mrf.mxu0
  %v509 = vpop.f32.mrf.mxu0
  %v510 = vadd.f32 0.0, %v509
  %v511 = vpop.f32.mrf.mxu0
  %512 = vmatprep.mubr.bf16.mxu0 0
  %513 = vmatmul.mubr.bf16.gmra.mxu0 %v275
  %v514 = vpop.f32.mrf.mxu0
  %v515 = vadd.f32 0.0, %v514
  %v516 = vpop.f32.mrf.mxu0
  %v517 = vpop.f32.mrf.mxu0
  %v518 = vadd.f32 0.0, %v517
  %v519 = vpop.f32.mrf.mxu0
  %520 = vmatprep.mubr.bf16.mxu0 0
  %521 = vmatmul.mubr.bf16.gmra.mxu0 %v278
  %v522 = vpop.f32.mrf.mxu0
  %v523 = vadd.f32 0.0, %v522
  %v524 = vpop.f32.mrf.mxu0
  %v525 = vpop.f32.mrf.mxu0
  %v526 = vadd.f32 0.0, %v525
  %v527 = vpop.f32.mrf.mxu0
  %528 = vmatprep.mubr.bf16.mxu0 0
  %529 = vmatmul.mubr.bf16.gmra.mxu0 %v281
  %v530 = vpop.f32.mrf.mxu0
  %v531 = vadd.f32 0.0, %v530
  %v532 = vpop.f32.mrf.mxu0
  %v533 = vpop.f32.mrf.mxu0
  %v534 = vadd.f32 0.0, %v533
  %v535 = vpop.f32.mrf.mxu0
  %536 = vmatprep.mubr.bf16.mxu0 0
  %537 = vmatmul.mubr.bf16.gmra.mxu0 %v284
  %v538 = vpop.f32.mrf.mxu0
  %v539 = vadd.f32 0.0, %v538
  %v540 = vpop.f32.mrf.mxu0
  %v541 = vpop.f32.mrf.mxu0
  %v542 = vadd.f32 0.0, %v541
  %v543 = vpop.f32.mrf.mxu0
  %544 = vmatprep.mubr.bf16.mxu0 0
  %545 = vmatmul.mubr.bf16.gmra.mxu0 %v287
  %v546 = vpop.f32.mrf.mxu0
  %v547 = vadd.f32 0.0, %v546
  %v548 = vpop.f32.mrf.mxu0
  %v549 = vpop.f32.mrf.mxu0
  %v550 = vadd.f32 0.0, %v549
  %v551 = vpop.f32.mrf.mxu0
  %552 = vmatprep.mubr.bf16.mxu0 0
  %553 = vmatmul.mubr.bf16.gmra.mxu0 %v290
  %v554 = vpop.f32.mrf.mxu0
  %v555 = vadd.f32 0.0, %v554
  %v556 = vpop.f32.mrf.mxu0
  %v557 = vpop.f32.mrf.mxu0
  %v558 = vadd.f32 0.0, %v557
  %v559 = vpop.f32.mrf.mxu0
  %560 = vmatprep.mubr.bf16.mxu0 0
  %561 = vmatmul.mubr.bf16.gmra.mxu0 %v293
  %v562 = vpop.f32.mrf.mxu0
  %v563 = vadd.f32 0.0, %v562
  %v564 = vpop.f32.mrf.mxu0
  %v565 = vpop.f32.mrf.mxu0
  %v566 = vadd.f32 0.0, %v565
  %v567 = vpop.f32.mrf.mxu0
  %568 = vmatprep.mubr.bf16.mxu0 0
  %569 = vmatmul.mubr.bf16.gmra.mxu0 %v296
  %v570 = vpop.f32.mrf.mxu0
  %v571 = vadd.f32 0.0, %v570
  %v572 = vpop.f32.mrf.mxu0
  %v573 = vpop.f32.mrf.mxu0
  %v574 = vadd.f32 0.0, %v573
  %v575 = vpop.f32.mrf.mxu0
  %576 = vmatprep.mubr.bf16.mxu0 0
  %577 = vmatmul.mubr.bf16.gmra.mxu0 %v299
  %v578 = vpop.f32.mrf.mxu0
  %v579 = vadd.f32 0.0, %v578
  %v580 = vpop.f32.mrf.mxu0
  %v581 = vpop.f32.mrf.mxu0
  %v582 = vadd.f32 0.0, %v581
  %v583 = vpop.f32.mrf.mxu0
  %584 = vmatprep.mubr.bf16.mxu0 0
  %585 = vmatmul.mubr.bf16.gmra.mxu0 %v302
  %v586 = vpop.f32.mrf.mxu0
  %v587 = vadd.f32 0.0, %v586
  %v588 = vpop.f32.mrf.mxu0
  %v589 = vpop.f32.mrf.mxu0
  %v590 = vadd.f32 0.0, %v589
  %v591 = vpop.f32.mrf.mxu0
  %592 = vdwg.mxu0
  %v657 = vunpack.c.l.b16 %v27
  %v658 = vunpack.c.l.b16 %v28
  %v659 = vunpack.c.l.b16 %v29
  %v660 = vunpack.c.l.b16 %v30
  %v661 = vunpack.c.l.b16 %v31
  %v662 = vunpack.c.l.b16 %v32
  %v663 = vunpack.c.l.b16 %v33
  %v664 = vunpack.c.l.b16 %v34
  %v665 = vunpack.c.l.b16 %v35
  %v666 = vunpack.c.l.b16 %v36
  %v667 = vunpack.c.l.b16 %v37
  %v668 = vunpack.c.l.b16 %v38
  %v669 = vunpack.c.l.b16 %v39
  %v670 = vunpack.c.l.b16 %v40
  %v671 = vunpack.c.l.b16 %v41
  %v672 = vunpack.c.l.b16 %v42
  %v673 = vunpack.c.l.b16 %v43
  %v674 = vunpack.c.l.b16 %v44
  %v675 = vunpack.c.l.b16 %v45
  %v676 = vunpack.c.l.b16 %v46
  %v677 = vunpack.c.l.b16 %v47
  %v678 = vunpack.c.l.b16 %v48
  %v679 = vunpack.c.l.b16 %v49
  %v680 = vunpack.c.l.b16 %v50
  %v681 = vunpack.c.l.b16 %v51
  %v682 = vunpack.c.l.b16 %v52
  %v683 = vunpack.c.l.b16 %v53
  %v684 = vunpack.c.l.b16 %v54
  %v685 = vunpack.c.l.b16 %v55
  %v686 = vunpack.c.l.b16 %v56
  %v687 = vunpack.c.l.b16 %v57
  %v688 = vunpack.c.l.b16 %v58
  %v689 = vunpack.c.l.b16 %v59
  %v690 = vunpack.c.l.b16 %v60
  %v691 = vunpack.c.l.b16 %v61
  %v692 = vunpack.c.l.b16 %v62
  %v693 = vunpack.c.l.b16 %v63
  %v694 = vunpack.c.l.b16 %v64
  %v695 = vunpack.c.l.b16 %v65
  %v696 = vunpack.c.l.b16 %v66
  %v697 = vunpack.c.l.b16 %v67
  %v698 = vunpack.c.l.b16 %v68
  %v699 = vunpack.c.l.b16 %v69
  %v700 = vunpack.c.l.b16 %v70
  %v701 = vunpack.c.l.b16 %v71
  %v702 = vunpack.c.l.b16 %v72
  %v703 = vunpack.c.l.b16 %v73
  %v704 = vunpack.c.l.b16 %v74
  %v705 = vunpack.c.l.b16 %v75
  %v706 = vunpack.c.l.b16 %v76
  %v707 = vunpack.c.l.b16 %v77
  %v708 = vunpack.c.l.b16 %v78
  %v709 = vunpack.c.l.b16 %v79
  %v710 = vunpack.c.l.b16 %v80
  %v711 = vunpack.c.l.b16 %v81
  %v712 = vunpack.c.l.b16 %v82
  %v713 = vunpack.c.l.b16 %v83
  %v714 = vunpack.c.l.b16 %v84
  %v715 = vunpack.c.l.b16 %v85
  %v716 = vunpack.c.l.b16 %v86
  %v717 = vunpack.c.l.b16 %v87
  %v718 = vunpack.c.l.b16 %v88
  %v719 = vunpack.c.l.b16 %v89
  %v720 = vunpack.c.l.b16 %v90
  %v721 = vpack.c.b16 %v658, %v657
  %v722 = vpack.c.b16 %v660, %v659
  %v723 = vpack.c.b16 %v662, %v661
  %v724 = vpack.c.b16 %v664, %v663
  %v725 = vpack.c.b16 %v666, %v665
  %v726 = vpack.c.b16 %v668, %v667
  %v727 = vpack.c.b16 %v670, %v669
  %v728 = vpack.c.b16 %v672, %v671
  %v729 = vpack.c.b16 %v674, %v673
  %v730 = vpack.c.b16 %v676, %v675
  %v731 = vpack.c.b16 %v678, %v677
  %v732 = vpack.c.b16 %v680, %v679
  %v733 = vpack.c.b16 %v682, %v681
  %v734 = vpack.c.b16 %v684, %v683
  %v735 = vpack.c.b16 %v686, %v685
  %v736 = vpack.c.b16 %v688, %v687
  %v737 = vpack.c.b16 %v690, %v689
  %v738 = vpack.c.b16 %v692, %v691
  %v739 = vpack.c.b16 %v694, %v693
  %v740 = vpack.c.b16 %v696, %v695
  %v741 = vpack.c.b16 %v698, %v697
  %v742 = vpack.c.b16 %v700, %v699
  %v743 = vpack.c.b16 %v702, %v701
  %v744 = vpack.c.b16 %v704, %v703
  %v745 = vpack.c.b16 %v706, %v705
  %v746 = vpack.c.b16 %v708, %v707
  %v747 = vpack.c.b16 %v710, %v709
  %v748 = vpack.c.b16 %v712, %v711
  %v749 = vpack.c.b16 %v714, %v713
  %v750 = vpack.c.b16 %v716, %v715
  %v751 = vpack.c.b16 %v718, %v717
  %v752 = vpack.c.b16 %v720, %v719
  %v757 = vunpack.c.l.b16 %v91
  %v758 = vunpack.c.l.b16 %v92
  %v759 = vunpack.c.l.b16 %v93
  %v760 = vunpack.c.l.b16 %v94
  %v761 = vpack.c.b16 %v758, %v757
  %v762 = vpack.c.b16 %v760, %v759
  %v766 = vsel %vm207, %v721, 0
  %v769 = vsel %vm207, %v722, 0
  %v772 = vsel %vm207, %v723, 0
  %v775 = vsel %vm207, %v724, 0
  %v778 = vsel %vm207, %v725, 0
  %v781 = vsel %vm207, %v726, 0
  %v784 = vsel %vm207, %v727, 0
  %v787 = vsel %vm207, %v728, 0
  %v790 = vsel %vm207, %v729, 0
  %v793 = vsel %vm207, %v730, 0
  %v796 = vsel %vm207, %v731, 0
  %v799 = vsel %vm207, %v732, 0
  %v802 = vsel %vm207, %v733, 0
  %v805 = vsel %vm207, %v734, 0
  %v808 = vsel %vm207, %v735, 0
  %v811 = vsel %vm207, %v736, 0
  %v814 = vsel %vm207, %v737, 0
  %v817 = vsel %vm207, %v738, 0
  %v820 = vsel %vm207, %v739, 0
  %v823 = vsel %vm207, %v740, 0
  %v826 = vsel %vm207, %v741, 0
  %v829 = vsel %vm207, %v742, 0
  %v832 = vsel %vm207, %v743, 0
  %v835 = vsel %vm207, %v744, 0
  %v838 = vsel %vm207, %v745, 0
  %v841 = vsel %vm207, %v746, 0
  %v844 = vsel %vm207, %v747, 0
  %v847 = vsel %vm207, %v748, 0
  %v850 = vsel %vm207, %v749, 0
  %v853 = vsel %vm207, %v750, 0
  %v856 = vsel %vm207, %v751, 0
  %v859 = vsel %vm207, %v752, 0
  %861 = vmatprep.subr.bf16.mxu0 0
  %862 = vmatpush1.bf16.msra.mxu0 0
  %863 = vmatprep.subr.bf16.mxu0 0
  %864 = vmatpush1.bf16.msra.mxu0 0
  %865 = vmatprep.subr.bf16.mxu0 0
  %866 = vmatpush1.bf16.msra.mxu0 0
  %867 = vmatprep.subr.bf16.mxu0 0
  %868 = vmatpush1.bf16.msra.mxu0 0
  %869 = vmatprep.subr.bf16.mxu0 0
  %870 = vmatpush1.bf16.msra.mxu0 0
  %871 = vmatprep.subr.bf16.mxu0 0
  %872 = vmatpush1.bf16.msra.mxu0 0
  %873 = vmatprep.subr.bf16.mxu0 0
  %874 = vmatpush1.bf16.msra.mxu0 %v762
  %875 = vmatprep.subr.bf16.mxu0 0
  %876 = vmatpush1.bf16.msra.mxu0 %v761
  %877 = vmatprep.subr.bf16.mxu0 0
  %878 = vmatpush2.bf16.msra.mxu0 0
  %879 = vmatprep.subr.bf16.mxu0 0
  %880 = vmatpush2.bf16.msra.mxu0 0
  %881 = vmatprep.subr.bf16.mxu0 0
  %882 = vmatpush2.bf16.msra.mxu0 0
  %883 = vmatprep.subr.bf16.mxu0 0
  %884 = vmatpush2.bf16.msra.mxu0 0
  %885 = vmatprep.subr.bf16.mxu0 0
  %886 = vmatpush2.bf16.msra.mxu0 0
  %887 = vmatprep.subr.bf16.mxu0 0
  %888 = vmatpush2.bf16.msra.mxu0 0
  %889 = vmatprep.subr.bf16.mxu0 0
  %890 = vmatpush2.bf16.msra.mxu0 0
  %891 = vmatprep.subr.bf16.mxu0 0
  %892 = vmatpush2.bf16.msra.mxu0 0
  %893 = vmatprep.mubr.bf16.mxu0 0
  %894 = vmatmul.mubr.bf16.gmra.mxu0 %v766
  %v895 = vpop.f32.mrf.mxu0
  %v896 = vadd.f32 %v339, %v895
  %v897 = vpop.f32.mrf.mxu0
  %v898 = vpop.f32.mrf.mxu0
  %v899 = vadd.f32 %v342, %v898
  %v900 = vpop.f32.mrf.mxu0
  %901 = vmatprep.mubr.bf16.mxu0 0
  %902 = vmatmul.mubr.bf16.gmra.mxu0 %v769
  %v903 = vpop.f32.mrf.mxu0
  %v904 = vadd.f32 %v347, %v903
  %v905 = vpop.f32.mrf.mxu0
  %v906 = vpop.f32.mrf.mxu0
  %v907 = vadd.f32 %v350, %v906
  %v908 = vpop.f32.mrf.mxu0
  %909 = vmatprep.mubr.bf16.mxu0 0
  %910 = vmatmul.mubr.bf16.gmra.mxu0 %v772
  %v911 = vpop.f32.mrf.mxu0
  %v912 = vadd.f32 %v355, %v911
  %v913 = vpop.f32.mrf.mxu0
  %v914 = vpop.f32.mrf.mxu0
  %v915 = vadd.f32 %v358, %v914
  %v916 = vpop.f32.mrf.mxu0
  %917 = vmatprep.mubr.bf16.mxu0 0
  %918 = vmatmul.mubr.bf16.gmra.mxu0 %v775
  %v919 = vpop.f32.mrf.mxu0
  %v920 = vadd.f32 %v363, %v919
  %v921 = vpop.f32.mrf.mxu0
  %v922 = vpop.f32.mrf.mxu0
  %v923 = vadd.f32 %v366, %v922
  %v924 = vpop.f32.mrf.mxu0
  %925 = vmatprep.mubr.bf16.mxu0 0
  %926 = vmatmul.mubr.bf16.gmra.mxu0 %v778
  %v927 = vpop.f32.mrf.mxu0
  %v928 = vadd.f32 %v371, %v927
  %v929 = vpop.f32.mrf.mxu0
  %v930 = vpop.f32.mrf.mxu0
  %v931 = vadd.f32 %v374, %v930
  %v932 = vpop.f32.mrf.mxu0
  %933 = vmatprep.mubr.bf16.mxu0 0
  %934 = vmatmul.mubr.bf16.gmra.mxu0 %v781
  %v935 = vpop.f32.mrf.mxu0
  %v936 = vadd.f32 %v379, %v935
  %v937 = vpop.f32.mrf.mxu0
  %v938 = vpop.f32.mrf.mxu0
  %v939 = vadd.f32 %v382, %v938
  %v940 = vpop.f32.mrf.mxu0
  %941 = vmatprep.mubr.bf16.mxu0 0
  %942 = vmatmul.mubr.bf16.gmra.mxu0 %v784
  %v943 = vpop.f32.mrf.mxu0
  %v944 = vadd.f32 %v387, %v943
  %v945 = vpop.f32.mrf.mxu0
  %v946 = vpop.f32.mrf.mxu0
  %v947 = vadd.f32 %v390, %v946
  %v948 = vpop.f32.mrf.mxu0
  %949 = vmatprep.mubr.bf16.mxu0 0
  %950 = vmatmul.mubr.bf16.gmra.mxu0 %v787
  %v951 = vpop.f32.mrf.mxu0
  %v952 = vadd.f32 %v395, %v951
  %v953 = vpop.f32.mrf.mxu0
  %v954 = vpop.f32.mrf.mxu0
  %v955 = vadd.f32 %v398, %v954
  %v956 = vpop.f32.mrf.mxu0
  %957 = vmatprep.mubr.bf16.mxu0 0
  %958 = vmatmul.mubr.bf16.gmra.mxu0 %v790
  %v959 = vpop.f32.mrf.mxu0
  %v960 = vadd.f32 %v403, %v959
  %v961 = vpop.f32.mrf.mxu0
  %v962 = vpop.f32.mrf.mxu0
  %v963 = vadd.f32 %v406, %v962
  %v964 = vpop.f32.mrf.mxu0
  %965 = vmatprep.mubr.bf16.mxu0 0
  %966 = vmatmul.mubr.bf16.gmra.mxu0 %v793
  %v967 = vpop.f32.mrf.mxu0
  %v968 = vadd.f32 %v411, %v967
  %v969 = vpop.f32.mrf.mxu0
  %v970 = vpop.f32.mrf.mxu0
  %v971 = vadd.f32 %v414, %v970
  %v972 = vpop.f32.mrf.mxu0
  %973 = vmatprep.mubr.bf16.mxu0 0
  %974 = vmatmul.mubr.bf16.gmra.mxu0 %v796
  %v975 = vpop.f32.mrf.mxu0
  %v976 = vadd.f32 %v419, %v975
  %v977 = vpop.f32.mrf.mxu0
  %v978 = vpop.f32.mrf.mxu0
  %v979 = vadd.f32 %v422, %v978
  %v980 = vpop.f32.mrf.mxu0
  %981 = vmatprep.mubr.bf16.mxu0 0
  %982 = vmatmul.mubr.bf16.gmra.mxu0 %v799
  %v983 = vpop.f32.mrf.mxu0
  %v984 = vadd.f32 %v427, %v983
  %v985 = vpop.f32.mrf.mxu0
  %v986 = vpop.f32.mrf.mxu0
  %v987 = vadd.f32 %v430, %v986
  %v988 = vpop.f32.mrf.mxu0
  %989 = vmatprep.mubr.bf16.mxu0 0
  %990 = vmatmul.mubr.bf16.gmra.mxu0 %v802
  %v991 = vpop.f32.mrf.mxu0
  %v992 = vadd.f32 %v435, %v991
  %v993 = vpop.f32.mrf.mxu0
  %v994 = vpop.f32.mrf.mxu0
  %v995 = vadd.f32 %v438, %v994
  %v996 = vpop.f32.mrf.mxu0
  %997 = vmatprep.mubr.bf16.mxu0 0
  %998 = vmatmul.mubr.bf16.gmra.mxu0 %v805
  %v999 = vpop.f32.mrf.mxu0
  %v1000 = vadd.f32 %v443, %v999
  %v1001 = vpop.f32.mrf.mxu0
  %v1002 = vpop.f32.mrf.mxu0
  %v1003 = vadd.f32 %v446, %v1002
  %v1004 = vpop.f32.mrf.mxu0
  %1005 = vmatprep.mubr.bf16.mxu0 0
  %1006 = vmatmul.mubr.bf16.gmra.mxu0 %v808
  %v1007 = vpop.f32.mrf.mxu0
  %v1008 = vadd.f32 %v451, %v1007
  %v1009 = vpop.f32.mrf.mxu0
  %v1010 = vpop.f32.mrf.mxu0
  %v1011 = vadd.f32 %v454, %v1010
  %v1012 = vpop.f32.mrf.mxu0
  %1013 = vmatprep.mubr.bf16.mxu0 0
  %1014 = vmatmul.mubr.bf16.gmra.mxu0 %v811
  %v1015 = vpop.f32.mrf.mxu0
  %v1016 = vadd.f32 %v459, %v1015
  %v1017 = vpop.f32.mrf.mxu0
  %v1018 = vpop.f32.mrf.mxu0
  %v1019 = vadd.f32 %v462, %v1018
  %v1020 = vpop.f32.mrf.mxu0
  %1021 = vmatprep.mubr.bf16.mxu0 0
  %1022 = vmatmul.mubr.bf16.gmra.mxu0 %v814
  %v1023 = vpop.f32.mrf.mxu0
  %v1024 = vadd.f32 %v467, %v1023
  %v1025 = vpop.f32.mrf.mxu0
  %v1026 = vpop.f32.mrf.mxu0
  %v1027 = vadd.f32 %v470, %v1026
  %v1028 = vpop.f32.mrf.mxu0
  %1029 = vmatprep.mubr.bf16.mxu0 0
  %1030 = vmatmul.mubr.bf16.gmra.mxu0 %v817
  %v1031 = vpop.f32.mrf.mxu0
  %v1032 = vadd.f32 %v475, %v1031
  %v1033 = vpop.f32.mrf.mxu0
  %v1034 = vpop.f32.mrf.mxu0
  %v1035 = vadd.f32 %v478, %v1034
  %v1036 = vpop.f32.mrf.mxu0
  %1037 = vmatprep.mubr.bf16.mxu0 0
  %1038 = vmatmul.mubr.bf16.gmra.mxu0 %v820
  %v1039 = vpop.f32.mrf.mxu0
  %v1040 = vadd.f32 %v483, %v1039
  %v1041 = vpop.f32.mrf.mxu0
  %v1042 = vpop.f32.mrf.mxu0
  %v1043 = vadd.f32 %v486, %v1042
  %v1044 = vpop.f32.mrf.mxu0
  %1045 = vmatprep.mubr.bf16.mxu0 0
  %1046 = vmatmul.mubr.bf16.gmra.mxu0 %v823
  %v1047 = vpop.f32.mrf.mxu0
  %v1048 = vadd.f32 %v491, %v1047
  %v1049 = vpop.f32.mrf.mxu0
  %v1050 = vpop.f32.mrf.mxu0
  %v1051 = vadd.f32 %v494, %v1050
  %v1052 = vpop.f32.mrf.mxu0
  %1053 = vmatprep.mubr.bf16.mxu0 0
  %1054 = vmatmul.mubr.bf16.gmra.mxu0 %v826
  %v1055 = vpop.f32.mrf.mxu0
  %v1056 = vadd.f32 %v499, %v1055
  %v1057 = vpop.f32.mrf.mxu0
  %v1058 = vpop.f32.mrf.mxu0
  %v1059 = vadd.f32 %v502, %v1058
  %v1060 = vpop.f32.mrf.mxu0
  %1061 = vmatprep.mubr.bf16.mxu0 0
  %1062 = vmatmul.mubr.bf16.gmra.mxu0 %v829
  %v1063 = vpop.f32.mrf.mxu0
  %v1064 = vadd.f32 %v507, %v1063
  %v1065 = vpop.f32.mrf.mxu0
  %v1066 = vpop.f32.mrf.mxu0
  %v1067 = vadd.f32 %v510, %v1066
  %v1068 = vpop.f32.mrf.mxu0
  %1069 = vmatprep.mubr.bf16.mxu0 0
  %1070 = vmatmul.mubr.bf16.gmra.mxu0 %v832
  %v1071 = vpop.f32.mrf.mxu0
  %v1072 = vadd.f32 %v515, %v1071
  %v1073 = vpop.f32.mrf.mxu0
  %v1074 = vpop.f32.mrf.mxu0
  %v1075 = vadd.f32 %v518, %v1074
  %v1076 = vpop.f32.mrf.mxu0
  %1077 = vmatprep.mubr.bf16.mxu0 0
  %1078 = vmatmul.mubr.bf16.gmra.mxu0 %v835
  %v1079 = vpop.f32.mrf.mxu0
  %v1080 = vadd.f32 %v523, %v1079
  %v1081 = vpop.f32.mrf.mxu0
  %v1082 = vpop.f32.mrf.mxu0
  %v1083 = vadd.f32 %v526, %v1082
  %v1084 = vpop.f32.mrf.mxu0
  %1085 = vmatprep.mubr.bf16.mxu0 0
  %1086 = vmatmul.mubr.bf16.gmra.mxu0 %v838
  %v1087 = vpop.f32.mrf.mxu0
  %v1088 = vadd.f32 %v531, %v1087
  %v1089 = vpop.f32.mrf.mxu0
  %v1090 = vpop.f32.mrf.mxu0
  %v1091 = vadd.f32 %v534, %v1090
  %v1092 = vpop.f32.mrf.mxu0
  %1093 = vmatprep.mubr.bf16.mxu0 0
  %1094 = vmatmul.mubr.bf16.gmra.mxu0 %v841
  %v1095 = vpop.f32.mrf.mxu0
  %v1096 = vadd.f32 %v539, %v1095
  %v1097 = vpop.f32.mrf.mxu0
  %v1098 = vpop.f32.mrf.mxu0
  %v1099 = vadd.f32 %v542, %v1098
  %v1100 = vpop.f32.mrf.mxu0
  %1101 = vmatprep.mubr.bf16.mxu0 0
  %1102 = vmatmul.mubr.bf16.gmra.mxu0 %v844
  %v1103 = vpop.f32.mrf.mxu0
  %v1104 = vadd.f32 %v547, %v1103
  %v1105 = vpop.f32.mrf.mxu0
  %v1106 = vpop.f32.mrf.mxu0
  %v1107 = vadd.f32 %v550, %v1106
  %v1108 = vpop.f32.mrf.mxu0
  %1109 = vmatprep.mubr.bf16.mxu0 0
  %1110 = vmatmul.mubr.bf16.gmra.mxu0 %v847
  %v1111 = vpop.f32.mrf.mxu0
  %v1112 = vadd.f32 %v555, %v1111
  %v1113 = vpop.f32.mrf.mxu0
  %v1114 = vpop.f32.mrf.mxu0
  %v1115 = vadd.f32 %v558, %v1114
  %v1116 = vpop.f32.mrf.mxu0
  %1117 = vmatprep.mubr.bf16.mxu0 0
  %1118 = vmatmul.mubr.bf16.gmra.mxu0 %v850
  %v1119 = vpop.f32.mrf.mxu0
  %v1120 = vadd.f32 %v563, %v1119
  %v1121 = vpop.f32.mrf.mxu0
  %v1122 = vpop.f32.mrf.mxu0
  %v1123 = vadd.f32 %v566, %v1122
  %v1124 = vpop.f32.mrf.mxu0
  %1125 = vmatprep.mubr.bf16.mxu0 0
  %1126 = vmatmul.mubr.bf16.gmra.mxu0 %v853
  %v1127 = vpop.f32.mrf.mxu0
  %v1128 = vadd.f32 %v571, %v1127
  %v1129 = vpop.f32.mrf.mxu0
  %v1130 = vpop.f32.mrf.mxu0
  %v1131 = vadd.f32 %v574, %v1130
  %v1132 = vpop.f32.mrf.mxu0
  %1133 = vmatprep.mubr.bf16.mxu0 0
  %1134 = vmatmul.mubr.bf16.gmra.mxu0 %v856
  %v1135 = vpop.f32.mrf.mxu0
  %v1136 = vadd.f32 %v579, %v1135
  %v1137 = vpop.f32.mrf.mxu0
  %v1138 = vpop.f32.mrf.mxu0
  %v1139 = vadd.f32 %v582, %v1138
  %v1140 = vpop.f32.mrf.mxu0
  %1141 = vmatprep.mubr.bf16.mxu0 0
  %1142 = vmatmul.mubr.bf16.gmra.mxu0 %v859
  %v1143 = vpop.f32.mrf.mxu0
  %v1144 = vadd.f32 %v587, %v1143
  %v1145 = vpop.f32.mrf.mxu0
  %v1146 = vpop.f32.mrf.mxu0
  %v1147 = vadd.f32 %v590, %v1146
  %v1148 = vpop.f32.mrf.mxu0
  %1149 = vdwg.mxu0
  %v1150 = vld [vmem:[%s4] sm:$0x1]
  %v1152 = vlaneseq
  %v1153 = vshrl.u32 %v1152, 7
  %v1154 = vsub.s32 0, %v1153
  %v1155 = vrot.slane %v1150, %v1154
  %v1157 = vadd.f32 %v896, %v1155
  %v1158 = vadd.f32 %v899, %v1155
  %v1159 = vadd.f32 %v904, %v1155
  %v1160 = vadd.f32 %v907, %v1155
  %v1161 = vadd.f32 %v912, %v1155
  %v1162 = vadd.f32 %v915, %v1155
  %v1163 = vadd.f32 %v920, %v1155
  %v1164 = vadd.f32 %v923, %v1155
  %v1165 = vadd.f32 %v928, %v1155
  %v1166 = vadd.f32 %v931, %v1155
  %v1167 = vadd.f32 %v936, %v1155
  %v1168 = vadd.f32 %v939, %v1155
  %v1169 = vadd.f32 %v944, %v1155
  %v1170 = vadd.f32 %v947, %v1155
  %v1171 = vadd.f32 %v952, %v1155
  %v1172 = vadd.f32 %v955, %v1155
  %v1173 = vadd.f32 %v960, %v1155
  %v1174 = vadd.f32 %v963, %v1155
  %v1175 = vadd.f32 %v968, %v1155
  %v1176 = vadd.f32 %v971, %v1155
  %v1177 = vadd.f32 %v976, %v1155
  %v1178 = vadd.f32 %v979, %v1155
  %v1179 = vadd.f32 %v984, %v1155
  %v1180 = vadd.f32 %v987, %v1155
  %v1181 = vadd.f32 %v992, %v1155
  %v1182 = vadd.f32 %v995, %v1155
  %v1183 = vadd.f32 %v1000, %v1155
  %v1184 = vadd.f32 %v1003, %v1155
  %v1185 = vadd.f32 %v1008, %v1155
  %v1186 = vadd.f32 %v1011, %v1155
  %v1187 = vadd.f32 %v1016, %v1155
  %v1188 = vadd.f32 %v1019, %v1155
  %v1189 = vadd.f32 %v1024, %v1155
  %v1190 = vadd.f32 %v1027, %v1155
  %v1191 = vadd.f32 %v1032, %v1155
  %v1192 = vadd.f32 %v1035, %v1155
  %v1193 = vadd.f32 %v1040, %v1155
  %v1194 = vadd.f32 %v1043, %v1155
  %v1195 = vadd.f32 %v1048, %v1155
  %v1196 = vadd.f32 %v1051, %v1155
  %v1197 = vadd.f32 %v1056, %v1155
  %v1198 = vadd.f32 %v1059, %v1155
  %v1199 = vadd.f32 %v1064, %v1155
  %v1200 = vadd.f32 %v1067, %v1155
  %v1201 = vadd.f32 %v1072, %v1155
  %v1202 = vadd.f32 %v1075, %v1155
  %v1203 = vadd.f32 %v1080, %v1155
  %v1204 = vadd.f32 %v1083, %v1155
  %v1205 = vadd.f32 %v1088, %v1155
  %v1206 = vadd.f32 %v1091, %v1155
  %v1207 = vadd.f32 %v1096, %v1155
  %v1208 = vadd.f32 %v1099, %v1155
  %v1209 = vadd.f32 %v1104, %v1155
  %v1210 = vadd.f32 %v1107, %v1155
  %v1211 = vadd.f32 %v1112, %v1155
  %v1212 = vadd.f32 %v1115, %v1155
  %v1213 = vadd.f32 %v1120, %v1155
  %v1214 = vadd.f32 %v1123, %v1155
  %v1215 = vadd.f32 %v1128, %v1155
  %v1216 = vadd.f32 %v1131, %v1155
  %v1217 = vadd.f32 %v1136, %v1155
  %v1218 = vadd.f32 %v1139, %v1155
  %v1219 = vadd.f32 %v1144, %v1155
  %v1220 = vadd.f32 %v1147, %v1155
  %vm1221 = vcmp.ge.f32.partialorder %v1157, 0.0
  %vm1222 = vcmp.ge.f32.partialorder %v1158, 0.0
  %vm1223 = vcmp.ge.f32.partialorder %v1159, 0.0
  %vm1224 = vcmp.ge.f32.partialorder %v1160, 0.0
  %vm1225 = vcmp.ge.f32.partialorder %v1161, 0.0
  %vm1226 = vcmp.ge.f32.partialorder %v1162, 0.0
  %vm1227 = vcmp.ge.f32.partialorder %v1163, 0.0
  %vm1228 = vcmp.ge.f32.partialorder %v1164, 0.0
  %vm1229 = vcmp.ge.f32.partialorder %v1165, 0.0
  %vm1230 = vcmp.ge.f32.partialorder %v1166, 0.0
  %vm1231 = vcmp.ge.f32.partialorder %v1167, 0.0
  %vm1232 = vcmp.ge.f32.partialorder %v1168, 0.0
  %vm1233 = vcmp.ge.f32.partialorder %v1169, 0.0
  %vm1234 = vcmp.ge.f32.partialorder %v1170, 0.0
  %vm1235 = vcmp.ge.f32.partialorder %v1171, 0.0
  %vm1236 = vcmp.ge.f32.partialorder %v1172, 0.0
  %vm1237 = vcmp.ge.f32.partialorder %v1173, 0.0
  %vm1238 = vcmp.ge.f32.partialorder %v1174, 0.0
  %vm1239 = vcmp.ge.f32.partialorder %v1175, 0.0
  %vm1240 = vcmp.ge.f32.partialorder %v1176, 0.0
  %vm1241 = vcmp.ge.f32.partialorder %v1177, 0.0
  %vm1242 = vcmp.ge.f32.partialorder %v1178, 0.0
  %vm1243 = vcmp.ge.f32.partialorder %v1179, 0.0
  %vm1244 = vcmp.ge.f32.partialorder %v1180, 0.0
  %vm1245 = vcmp.ge.f32.partialorder %v1181, 0.0
  %vm1246 = vcmp.ge.f32.partialorder %v1182, 0.0
  %vm1247 = vcmp.ge.f32.partialorder %v1183, 0.0
  %vm1248 = vcmp.ge.f32.partialorder %v1184, 0.0
  %vm1249 = vcmp.ge.f32.partialorder %v1185, 0.0
  %vm1250 = vcmp.ge.f32.partialorder %v1186, 0.0
  %vm1251 = vcmp.ge.f32.partialorder %v1187, 0.0
  %vm1252 = vcmp.ge.f32.partialorder %v1188, 0.0
  %vm1253 = vcmp.ge.f32.partialorder %v1189, 0.0
  %vm1254 = vcmp.ge.f32.partialorder %v1190, 0.0
  %vm1255 = vcmp.ge.f32.partialorder %v1191, 0.0
  %vm1256 = vcmp.ge.f32.partialorder %v1192, 0.0
  %vm1257 = vcmp.ge.f32.partialorder %v1193, 0.0
  %vm1258 = vcmp.ge.f32.partialorder %v1194, 0.0
  %vm1259 = vcmp.ge.f32.partialorder %v1195, 0.0
  %vm1260 = vcmp.ge.f32.partialorder %v1196, 0.0
  %vm1261 = vcmp.ge.f32.partialorder %v1197, 0.0
  %vm1262 = vcmp.ge.f32.partialorder %v1198, 0.0
  %vm1263 = vcmp.ge.f32.partialorder %v1199, 0.0
  %vm1264 = vcmp.ge.f32.partialorder %v1200, 0.0
  %vm1265 = vcmp.ge.f32.partialorder %v1201, 0.0
  %vm1266 = vcmp.ge.f32.partialorder %v1202, 0.0
  %vm1267 = vcmp.ge.f32.partialorder %v1203, 0.0
  %vm1268 = vcmp.ge.f32.partialorder %v1204, 0.0
  %vm1269 = vcmp.ge.f32.partialorder %v1205, 0.0
  %vm1270 = vcmp.ge.f32.partialorder %v1206, 0.0
  %vm1271 = vcmp.ge.f32.partialorder %v1207, 0.0
  %vm1272 = vcmp.ge.f32.partialorder %v1208, 0.0
  %vm1273 = vcmp.ge.f32.partialorder %v1209, 0.0
  %vm1274 = vcmp.ge.f32.partialorder %v1210, 0.0
  %vm1275 = vcmp.ge.f32.partialorder %v1211, 0.0
  %vm1276 = vcmp.ge.f32.partialorder %v1212, 0.0
  %vm1277 = vcmp.ge.f32.partialorder %v1213, 0.0
  %vm1278 = vcmp.ge.f32.partialorder %v1214, 0.0
  %vm1279 = vcmp.ge.f32.partialorder %v1215, 0.0
  %vm1280 = vcmp.ge.f32.partialorder %v1216, 0.0
  %vm1281 = vcmp.ge.f32.partialorder %v1217, 0.0
  %vm1282 = vcmp.ge.f32.partialorder %v1218, 0.0
  %vm1283 = vcmp.ge.f32.partialorder %v1219, 0.0
  %vm1284 = vcmp.ge.f32.partialorder %v1220, 0.0
  %v1285 = vmul.f32 %v1157, 0.1
  %v1286 = vmul.f32 %v1158, 0.1
  %v1287 = vmul.f32 %v1159, 0.1
  %v1288 = vmul.f32 %v1160, 0.1
  %v1289 = vmul.f32 %v1161, 0.1
  %v1290 = vmul.f32 %v1162, 0.1
  %v1291 = vmul.f32 %v1163, 0.1
  %v1292 = vmul.f32 %v1164, 0.1
  %v1293 = vmul.f32 %v1165, 0.1
  %v1294 = vmul.f32 %v1166, 0.1
  %v1295 = vmul.f32 %v1167, 0.1
  %v1296 = vmul.f32 %v1168, 0.1
  %v1297 = vmul.f32 %v1169, 0.1
  %v1298 = vmul.f32 %v1170, 0.1
  %v1299 = vmul.f32 %v1171, 0.1
  %v1300 = vmul.f32 %v1172, 0.1
  %v1301 = vmul.f32 %v1173, 0.1
  %v1302 = vmul.f32 %v1174, 0.1
  %v1303 = vmul.f32 %v1175, 0.1
  %v1304 = vmul.f32 %v1176, 0.1
  %v1305 = vmul.f32 %v1177, 0.1
  %v1306 = vmul.f32 %v1178, 0.1
  %v1307 = vmul.f32 %v1179, 0.1
  %v1308 = vmul.f32 %v1180, 0.1
  %v1309 = vmul.f32 %v1181, 0.1
  %v1310 = vmul.f32 %v1182, 0.1
  %v1311 = vmul.f32 %v1183, 0.1
  %v1312 = vmul.f32 %v1184, 0.1
  %v1313 = vmul.f32 %v1185, 0.1
  %v1314 = vmul.f32 %v1186, 0.1
  %v1315 = vmul.f32 %v1187, 0.1
  %v1316 = vmul.f32 %v1188, 0.1
  %v1317 = vmul.f32 %v1189, 0.1
  %v1318 = vmul.f32 %v1190, 0.1
  %v1319 = vmul.f32 %v1191, 0.1
  %v1320 = vmul.f32 %v1192, 0.1
  %v1321 = vmul.f32 %v1193, 0.1
  %v1322 = vmul.f32 %v1194, 0.1
  %v1323 = vmul.f32 %v1195, 0.1
  %v1324 = vmul.f32 %v1196, 0.1
  %v1325 = vmul.f32 %v1197, 0.1
  %v1326 = vmul.f32 %v1198, 0.1
  %v1327 = vmul.f32 %v1199, 0.1
  %v1328 = vmul.f32 %v1200, 0.1
  %v1329 = vmul.f32 %v1201, 0.1
  %v1330 = vmul.f32 %v1202, 0.1
  %v1331 = vmul.f32 %v1203, 0.1
  %v1332 = vmul.f32 %v1204, 0.1
  %v1333 = vmul.f32 %v1205, 0.1
  %v1334 = vmul.f32 %v1206, 0.1
  %v1335 = vmul.f32 %v1207, 0.1
  %v1336 = vmul.f32 %v1208, 0.1
  %v1337 = vmul.f32 %v1209, 0.1
  %v1338 = vmul.f32 %v1210, 0.1
  %v1339 = vmul.f32 %v1211, 0.1
  %v1340 = vmul.f32 %v1212, 0.1
  %v1341 = vmul.f32 %v1213, 0.1
  %v1342 = vmul.f32 %v1214, 0.1
  %v1343 = vmul.f32 %v1215, 0.1
  %v1344 = vmul.f32 %v1216, 0.1
  %v1345 = vmul.f32 %v1217, 0.1
  %v1346 = vmul.f32 %v1218, 0.1
  %v1347 = vmul.f32 %v1219, 0.1
  %v1348 = vmul.f32 %v1220, 0.1
  %v1349 = vsel %vm1221, %v1157, %v1285
  %v1350 = vsel %vm1222, %v1158, %v1286
  %v1351 = vsel %vm1223, %v1159, %v1287
  %v1352 = vsel %vm1224, %v1160, %v1288
  %v1353 = vsel %vm1225, %v1161, %v1289
  %v1354 = vsel %vm1226, %v1162, %v1290
  %v1355 = vsel %vm1227, %v1163, %v1291
  %v1356 = vsel %vm1228, %v1164, %v1292
  %v1357 = vsel %vm1229, %v1165, %v1293
  %v1358 = vsel %vm1230, %v1166, %v1294
  %v1359 = vsel %vm1231, %v1167, %v1295
  %v1360 = vsel %vm1232, %v1168, %v1296
  %v1361 = vsel %vm1233, %v1169, %v1297
  %v1362 = vsel %vm1234, %v1170, %v1298
  %v1363 = vsel %vm1235, %v1171, %v1299
  %v1364 = vsel %vm1236, %v1172, %v1300
  %v1365 = vsel %vm1237, %v1173, %v1301
  %v1366 = vsel %vm1238, %v1174, %v1302
  %v1367 = vsel %vm1239, %v1175, %v1303
  %v1368 = vsel %vm1240, %v1176, %v1304
  %v1369 = vsel %vm1241, %v1177, %v1305
  %v1370 = vsel %vm1242, %v1178, %v1306
  %v1371 = vsel %vm1243, %v1179, %v1307
  %v1372 = vsel %vm1244, %v1180, %v1308
  %v1373 = vsel %vm1245, %v1181, %v1309
  %v1374 = vsel %vm1246, %v1182, %v1310
  %v1375 = vsel %vm1247, %v1183, %v1311
  %v1376 = vsel %vm1248, %v1184, %v1312
  %v1377 = vsel %vm1249, %v1185, %v1313
  %v1378 = vsel %vm1250, %v1186, %v1314
  %v1379 = vsel %vm1251, %v1187, %v1315
  %v1380 = vsel %vm1252, %v1188, %v1316
  %v1381 = vsel %vm1253, %v1189, %v1317
  %v1382 = vsel %vm1254, %v1190, %v1318
  %v1383 = vsel %vm1255, %v1191, %v1319
  %v1384 = vsel %vm1256, %v1192, %v1320
  %v1385 = vsel %vm1257, %v1193, %v1321
  %v1386 = vsel %vm1258, %v1194, %v1322
  %v1387 = vsel %vm1259, %v1195, %v1323
  %v1388 = vsel %vm1260, %v1196, %v1324
  %v1389 = vsel %vm1261, %v1197, %v1325
  %v1390 = vsel %vm1262, %v1198, %v1326
  %v1391 = vsel %vm1263, %v1199, %v1327
  %v1392 = vsel %vm1264, %v1200, %v1328
  %v1393 = vsel %vm1265, %v1201, %v1329
  %v1394 = vsel %vm1266, %v1202, %v1330
  %v1395 = vsel %vm1267, %v1203, %v1331
  %v1396 = vsel %vm1268, %v1204, %v1332
  %v1397 = vsel %vm1269, %v1205, %v1333
  %v1398 = vsel %vm1270, %v1206, %v1334
  %v1399 = vsel %vm1271, %v1207, %v1335
  %v1400 = vsel %vm1272, %v1208, %v1336
  %v1401 = vsel %vm1273, %v1209, %v1337
  %v1402 = vsel %vm1274, %v1210, %v1338
  %v1403 = vsel %vm1275, %v1211, %v1339
  %v1404 = vsel %vm1276, %v1212, %v1340
  %v1405 = vsel %vm1277, %v1213, %v1341
  %v1406 = vsel %vm1278, %v1214, %v1342
  %v1407 = vsel %vm1279, %v1215, %v1343
  %v1408 = vsel %vm1280, %v1216, %v1344
  %v1409 = vsel %vm1281, %v1217, %v1345
  %v1410 = vsel %vm1282, %v1218, %v1346
  %v1411 = vsel %vm1283, %v1219, %v1347
  %v1412 = vsel %vm1284, %v1220, %v1348
  %v1413 = vpack.c.bf16 %v1350, %v1349
  %v1414 = vpack.c.bf16 %v1352, %v1351
  %v1415 = vpack.c.bf16 %v1354, %v1353
  %v1416 = vpack.c.bf16 %v1356, %v1355
  %v1417 = vpack.c.bf16 %v1358, %v1357
  %v1418 = vpack.c.bf16 %v1360, %v1359
  %v1419 = vpack.c.bf16 %v1362, %v1361
  %v1420 = vpack.c.bf16 %v1364, %v1363
  %v1421 = vpack.c.bf16 %v1366, %v1365
  %v1422 = vpack.c.bf16 %v1368, %v1367
  %v1423 = vpack.c.bf16 %v1370, %v1369
  %v1424 = vpack.c.bf16 %v1372, %v1371
  %v1425 = vpack.c.bf16 %v1374, %v1373
  %v1426 = vpack.c.bf16 %v1376, %v1375
  %v1427 = vpack.c.bf16 %v1378, %v1377
  %v1428 = vpack.c.bf16 %v1380, %v1379
  %v1429 = vpack.c.bf16 %v1382, %v1381
  %v1430 = vpack.c.bf16 %v1384, %v1383
  %v1431 = vpack.c.bf16 %v1386, %v1385
  %v1432 = vpack.c.bf16 %v1388, %v1387
  %v1433 = vpack.c.bf16 %v1390, %v1389
  %v1434 = vpack.c.bf16 %v1392, %v1391
  %v1435 = vpack.c.bf16 %v1394, %v1393
  %v1436 = vpack.c.bf16 %v1396, %v1395
  %v1437 = vpack.c.bf16 %v1398, %v1397
  %v1438 = vpack.c.bf16 %v1400, %v1399
  %v1439 = vpack.c.bf16 %v1402, %v1401
  %v1440 = vpack.c.bf16 %v1404, %v1403
  %v1441 = vpack.c.bf16 %v1406, %v1405
  %v1442 = vpack.c.bf16 %v1408, %v1407
  %v1443 = vpack.c.bf16 %v1410, %v1409
  %v1444 = vpack.c.bf16 %v1412, %v1411
  %v1445 = vld [vmem:[%s5] sm:$0xf]
  %v1446 = vld [vmem:[%s5 + $0x4] sm:$0xf]
  %v1447 = vld [vmem:[%s6] sm:$0x1]
  %v1449 = vlaneseq
  %v1450 = vshrl.u32 %v1449, 7
  %v1451 = vsub.s32 0, %v1450
  %v1452 = vrot.slane %v1447, %v1451
  %v1456 = vunpack.c.l.b16 %v1445
  %v1457 = vunpack.c.l.b16 %v1446
  %v1458 = vpack.c.b16 %v1457, %v1456
  %vm1460 = vcmask 130048
  %v1462 = vsel %vm1460, %v1413, 0
  %v1465 = vsel %vm1460, %v1414, 0
  %v1468 = vsel %vm1460, %v1415, 0
  %v1471 = vsel %vm1460, %v1416, 0
  %v1474 = vsel %vm1460, %v1417, 0
  %v1477 = vsel %vm1460, %v1418, 0
  %v1480 = vsel %vm1460, %v1419, 0
  %v1483 = vsel %vm1460, %v1420, 0
  %v1486 = vsel %vm1460, %v1421, 0
  %v1489 = vsel %vm1460, %v1422, 0
  %v1492 = vsel %vm1460, %v1423, 0
  %v1495 = vsel %vm1460, %v1424, 0
  %v1498 = vsel %vm1460, %v1425, 0
  %v1501 = vsel %vm1460, %v1426, 0
  %v1504 = vsel %vm1460, %v1427, 0
  %v1507 = vsel %vm1460, %v1428, 0
  %v1510 = vsel %vm1460, %v1429, 0
  %v1513 = vsel %vm1460, %v1430, 0
  %v1516 = vsel %vm1460, %v1431, 0
  %v1519 = vsel %vm1460, %v1432, 0
  %v1522 = vsel %vm1460, %v1433, 0
  %v1525 = vsel %vm1460, %v1434, 0
  %v1528 = vsel %vm1460, %v1435, 0
  %v1531 = vsel %vm1460, %v1436, 0
  %v1534 = vsel %vm1460, %v1437, 0
  %v1537 = vsel %vm1460, %v1438, 0
  %v1540 = vsel %vm1460, %v1439, 0
  %v1543 = vsel %vm1460, %v1440, 0
  %v1546 = vsel %vm1460, %v1441, 0
  %v1549 = vsel %vm1460, %v1442, 0
  %v1552 = vsel %vm1460, %v1443, 0
  %v1555 = vsel %vm1460, %v1444, 0
  %1557 = vmatprep.subr.bf16.mxu0 0
  %1558 = vmatpush1.bf16.msra.mxu0 0
  %1559 = vmatprep.subr.bf16.mxu0 0
  %1560 = vmatpush1.bf16.msra.mxu0 0
  %1561 = vmatprep.subr.bf16.mxu0 0
  %1562 = vmatpush1.bf16.msra.mxu0 0
  %1563 = vmatprep.subr.bf16.mxu0 0
  %1564 = vmatpush1.bf16.msra.mxu0 0
  %1565 = vmatprep.subr.bf16.mxu0 0
  %1566 = vmatpush1.bf16.msra.mxu0 0
  %1567 = vmatprep.subr.bf16.mxu0 0
  %1568 = vmatpush1.bf16.msra.mxu0 0
  %1569 = vmatprep.subr.bf16.mxu0 0
  %1570 = vmatpush1.bf16.msra.mxu0 0
  %1571 = vmatprep.subr.bf16.mxu0 0
  %1572 = vmatpush1.bf16.msra.mxu0 %v1458
  %1573 = vmatprep.subr.bf16.mxu0 0
  %1574 = vmatpush2.bf16.msra.mxu0 0
  %1575 = vmatprep.subr.bf16.mxu0 0
  %1576 = vmatpush2.bf16.msra.mxu0 0
  %1577 = vmatprep.subr.bf16.mxu0 0
  %1578 = vmatpush2.bf16.msra.mxu0 0
  %1579 = vmatprep.subr.bf16.mxu0 0
  %1580 = vmatpush2.bf16.msra.mxu0 0
  %1581 = vmatprep.subr.bf16.mxu0 0
  %1582 = vmatpush2.bf16.msra.mxu0 0
  %1583 = vmatprep.subr.bf16.mxu0 0
  %1584 = vmatpush2.bf16.msra.mxu0 0
  %1585 = vmatprep.subr.bf16.mxu0 0
  %1586 = vmatpush2.bf16.msra.mxu0 0
  %1587 = vmatprep.subr.bf16.mxu0 0
  %1588 = vmatpush2.bf16.msra.mxu0 0
  %1589 = vmatprep.mubr.bf16.mxu0 0
  %1590 = vmatmul.mubr.bf16.gmra.mxu0 %v1462
  %v1591 = vpop.f32.mrf.mxu0
  %v1592 = vadd.f32 %v1452, %v1591
  %v1593 = vpop.f32.mrf.mxu0
  %v1594 = vpop.f32.mrf.mxu0
  %v1595 = vadd.f32 %v1452, %v1594
  %v1596 = vpop.f32.mrf.mxu0
  %1597 = vmatprep.mubr.bf16.mxu0 0
  %1598 = vmatmul.mubr.bf16.gmra.mxu0 %v1465
  %v1599 = vpop.f32.mrf.mxu0
  %v1600 = vadd.f32 %v1452, %v1599
  %v1601 = vpop.f32.mrf.mxu0
  %v1602 = vpop.f32.mrf.mxu0
  %v1603 = vadd.f32 %v1452, %v1602
  %v1604 = vpop.f32.mrf.mxu0
  %1605 = vmatprep.mubr.bf16.mxu0 0
  %1606 = vmatmul.mubr.bf16.gmra.mxu0 %v1468
  %v1607 = vpop.f32.mrf.mxu0
  %v1608 = vadd.f32 %v1452, %v1607
  %v1609 = vpop.f32.mrf.mxu0
  %v1610 = vpop.f32.mrf.mxu0
  %v1611 = vadd.f32 %v1452, %v1610
  %v1612 = vpop.f32.mrf.mxu0
  %1613 = vmatprep.mubr.bf16.mxu0 0
  %1614 = vmatmul.mubr.bf16.gmra.mxu0 %v1471
  %v1615 = vpop.f32.mrf.mxu0
  %v1616 = vadd.f32 %v1452, %v1615
  %v1617 = vpop.f32.mrf.mxu0
  %v1618 = vpop.f32.mrf.mxu0
  %v1619 = vadd.f32 %v1452, %v1618
  %v1620 = vpop.f32.mrf.mxu0
  %1621 = vmatprep.mubr.bf16.mxu0 0
  %1622 = vmatmul.mubr.bf16.gmra.mxu0 %v1474
  %v1623 = vpop.f32.mrf.mxu0
  %v1624 = vadd.f32 %v1452, %v1623
  %v1625 = vpop.f32.mrf.mxu0
  %v1626 = vpop.f32.mrf.mxu0
  %v1627 = vadd.f32 %v1452, %v1626
  %v1628 = vpop.f32.mrf.mxu0
  %1629 = vmatprep.mubr.bf16.mxu0 0
  %1630 = vmatmul.mubr.bf16.gmra.mxu0 %v1477
  %v1631 = vpop.f32.mrf.mxu0
  %v1632 = vadd.f32 %v1452, %v1631
  %v1633 = vpop.f32.mrf.mxu0
  %v1634 = vpop.f32.mrf.mxu0
  %v1635 = vadd.f32 %v1452, %v1634
  %v1636 = vpop.f32.mrf.mxu0
  %1637 = vmatprep.mubr.bf16.mxu0 0
  %1638 = vmatmul.mubr.bf16.gmra.mxu0 %v1480
  %v1639 = vpop.f32.mrf.mxu0
  %v1640 = vadd.f32 %v1452, %v1639
  %v1641 = vpop.f32.mrf.mxu0
  %v1642 = vpop.f32.mrf.mxu0
  %v1643 = vadd.f32 %v1452, %v1642
  %v1644 = vpop.f32.mrf.mxu0
  %1645 = vmatprep.mubr.bf16.mxu0 0
  %1646 = vmatmul.mubr.bf16.gmra.mxu0 %v1483
  %v1647 = vpop.f32.mrf.mxu0
  %v1648 = vadd.f32 %v1452, %v1647
  %v1649 = vpop.f32.mrf.mxu0
  %v1650 = vpop.f32.mrf.mxu0
  %v1651 = vadd.f32 %v1452, %v1650
  %v1652 = vpop.f32.mrf.mxu0
  %1653 = vmatprep.mubr.bf16.mxu0 0
  %1654 = vmatmul.mubr.bf16.gmra.mxu0 %v1486
  %v1655 = vpop.f32.mrf.mxu0
  %v1656 = vadd.f32 %v1452, %v1655
  %v1657 = vpop.f32.mrf.mxu0
  %v1658 = vpop.f32.mrf.mxu0
  %v1659 = vadd.f32 %v1452, %v1658
  %v1660 = vpop.f32.mrf.mxu0
  %1661 = vmatprep.mubr.bf16.mxu0 0
  %1662 = vmatmul.mubr.bf16.gmra.mxu0 %v1489
  %v1663 = vpop.f32.mrf.mxu0
  %v1664 = vadd.f32 %v1452, %v1663
  %v1665 = vpop.f32.mrf.mxu0
  %v1666 = vpop.f32.mrf.mxu0
  %v1667 = vadd.f32 %v1452, %v1666
  %v1668 = vpop.f32.mrf.mxu0
  %1669 = vmatprep.mubr.bf16.mxu0 0
  %1670 = vmatmul.mubr.bf16.gmra.mxu0 %v1492
  %v1671 = vpop.f32.mrf.mxu0
  %v1672 = vadd.f32 %v1452, %v1671
  %v1673 = vpop.f32.mrf.mxu0
  %v1674 = vpop.f32.mrf.mxu0
  %v1675 = vadd.f32 %v1452, %v1674
  %v1676 = vpop.f32.mrf.mxu0
  %1677 = vmatprep.mubr.bf16.mxu0 0
  %1678 = vmatmul.mubr.bf16.gmra.mxu0 %v1495
  %v1679 = vpop.f32.mrf.mxu0
  %v1680 = vadd.f32 %v1452, %v1679
  %v1681 = vpop.f32.mrf.mxu0
  %v1682 = vpop.f32.mrf.mxu0
  %v1683 = vadd.f32 %v1452, %v1682
  %v1684 = vpop.f32.mrf.mxu0
  %1685 = vmatprep.mubr.bf16.mxu0 0
  %1686 = vmatmul.mubr.bf16.gmra.mxu0 %v1498
  %v1687 = vpop.f32.mrf.mxu0
  %v1688 = vadd.f32 %v1452, %v1687
  %v1689 = vpop.f32.mrf.mxu0
  %v1690 = vpop.f32.mrf.mxu0
  %v1691 = vadd.f32 %v1452, %v1690
  %v1692 = vpop.f32.mrf.mxu0
  %1693 = vmatprep.mubr.bf16.mxu0 0
  %1694 = vmatmul.mubr.bf16.gmra.mxu0 %v1501
  %v1695 = vpop.f32.mrf.mxu0
  %v1696 = vadd.f32 %v1452, %v1695
  %v1697 = vpop.f32.mrf.mxu0
  %v1698 = vpop.f32.mrf.mxu0
  %v1699 = vadd.f32 %v1452, %v1698
  %v1700 = vpop.f32.mrf.mxu0
  %1701 = vmatprep.mubr.bf16.mxu0 0
  %1702 = vmatmul.mubr.bf16.gmra.mxu0 %v1504
  %v1703 = vpop.f32.mrf.mxu0
  %v1704 = vadd.f32 %v1452, %v1703
  %v1705 = vpop.f32.mrf.mxu0
  %v1706 = vpop.f32.mrf.mxu0
  %v1707 = vadd.f32 %v1452, %v1706
  %v1708 = vpop.f32.mrf.mxu0
  %1709 = vmatprep.mubr.bf16.mxu0 0
  %1710 = vmatmul.mubr.bf16.gmra.mxu0 %v1507
  %v1711 = vpop.f32.mrf.mxu0
  %v1712 = vadd.f32 %v1452, %v1711
  %v1713 = vpop.f32.mrf.mxu0
  %v1714 = vpop.f32.mrf.mxu0
  %v1715 = vadd.f32 %v1452, %v1714
  %v1716 = vpop.f32.mrf.mxu0
  %1717 = vmatprep.mubr.bf16.mxu0 0
  %1718 = vmatmul.mubr.bf16.gmra.mxu0 %v1510
  %v1719 = vpop.f32.mrf.mxu0
  %v1720 = vadd.f32 %v1452, %v1719
  %v1721 = vpop.f32.mrf.mxu0
  %v1722 = vpop.f32.mrf.mxu0
  %v1723 = vadd.f32 %v1452, %v1722
  %v1724 = vpop.f32.mrf.mxu0
  %1725 = vmatprep.mubr.bf16.mxu0 0
  %1726 = vmatmul.mubr.bf16.gmra.mxu0 %v1513
  %v1727 = vpop.f32.mrf.mxu0
  %v1728 = vadd.f32 %v1452, %v1727
  %v1729 = vpop.f32.mrf.mxu0
  %v1730 = vpop.f32.mrf.mxu0
  %v1731 = vadd.f32 %v1452, %v1730
  %v1732 = vpop.f32.mrf.mxu0
  %1733 = vmatprep.mubr.bf16.mxu0 0
  %1734 = vmatmul.mubr.bf16.gmra.mxu0 %v1516
  %v1735 = vpop.f32.mrf.mxu0
  %v1736 = vadd.f32 %v1452, %v1735
  %v1737 = vpop.f32.mrf.mxu0
  %v1738 = vpop.f32.mrf.mxu0
  %v1739 = vadd.f32 %v1452, %v1738
  %v1740 = vpop.f32.mrf.mxu0
  %1741 = vmatprep.mubr.bf16.mxu0 0
  %1742 = vmatmul.mubr.bf16.gmra.mxu0 %v1519
  %v1743 = vpop.f32.mrf.mxu0
  %v1744 = vadd.f32 %v1452, %v1743
  %v1745 = vpop.f32.mrf.mxu0
  %v1746 = vpop.f32.mrf.mxu0
  %v1747 = vadd.f32 %v1452, %v1746
  %v1748 = vpop.f32.mrf.mxu0
  %1749 = vmatprep.mubr.bf16.mxu0 0
  %1750 = vmatmul.mubr.bf16.gmra.mxu0 %v1522
  %v1751 = vpop.f32.mrf.mxu0
  %v1752 = vadd.f32 %v1452, %v1751
  %v1753 = vpop.f32.mrf.mxu0
  %v1754 = vpop.f32.mrf.mxu0
  %v1755 = vadd.f32 %v1452, %v1754
  %v1756 = vpop.f32.mrf.mxu0
  %1757 = vmatprep.mubr.bf16.mxu0 0
  %1758 = vmatmul.mubr.bf16.gmra.mxu0 %v1525
  %v1759 = vpop.f32.mrf.mxu0
  %v1760 = vadd.f32 %v1452, %v1759
  %v1761 = vpop.f32.mrf.mxu0
  %v1762 = vpop.f32.mrf.mxu0
  %v1763 = vadd.f32 %v1452, %v1762
  %v1764 = vpop.f32.mrf.mxu0
  %1765 = vmatprep.mubr.bf16.mxu0 0
  %1766 = vmatmul.mubr.bf16.gmra.mxu0 %v1528
  %v1767 = vpop.f32.mrf.mxu0
  %v1768 = vadd.f32 %v1452, %v1767
  %v1769 = vpop.f32.mrf.mxu0
  %v1770 = vpop.f32.mrf.mxu0
  %v1771 = vadd.f32 %v1452, %v1770
  %v1772 = vpop.f32.mrf.mxu0
  %1773 = vmatprep.mubr.bf16.mxu0 0
  %1774 = vmatmul.mubr.bf16.gmra.mxu0 %v1531
  %v1775 = vpop.f32.mrf.mxu0
  %v1776 = vadd.f32 %v1452, %v1775
  %v1777 = vpop.f32.mrf.mxu0
  %v1778 = vpop.f32.mrf.mxu0
  %v1779 = vadd.f32 %v1452, %v1778
  %v1780 = vpop.f32.mrf.mxu0
  %1781 = vmatprep.mubr.bf16.mxu0 0
  %1782 = vmatmul.mubr.bf16.gmra.mxu0 %v1534
  %v1783 = vpop.f32.mrf.mxu0
  %v1784 = vadd.f32 %v1452, %v1783
  %v1785 = vpop.f32.mrf.mxu0
  %v1786 = vpop.f32.mrf.mxu0
  %v1787 = vadd.f32 %v1452, %v1786
  %v1788 = vpop.f32.mrf.mxu0
  %1789 = vmatprep.mubr.bf16.mxu0 0
  %1790 = vmatmul.mubr.bf16.gmra.mxu0 %v1537
  %v1791 = vpop.f32.mrf.mxu0
  %v1792 = vadd.f32 %v1452, %v1791
  %v1793 = vpop.f32.mrf.mxu0
  %v1794 = vpop.f32.mrf.mxu0
  %v1795 = vadd.f32 %v1452, %v1794
  %v1796 = vpop.f32.mrf.mxu0
  %1797 = vmatprep.mubr.bf16.mxu0 0
  %1798 = vmatmul.mubr.bf16.gmra.mxu0 %v1540
  %v1799 = vpop.f32.mrf.mxu0
  %v1800 = vadd.f32 %v1452, %v1799
  %v1801 = vpop.f32.mrf.mxu0
  %v1802 = vpop.f32.mrf.mxu0
  %v1803 = vadd.f32 %v1452, %v1802
  %v1804 = vpop.f32.mrf.mxu0
  %1805 = vmatprep.mubr.bf16.mxu0 0
  %1806 = vmatmul.mubr.bf16.gmra.mxu0 %v1543
  %v1807 = vpop.f32.mrf.mxu0
  %v1808 = vadd.f32 %v1452, %v1807
  %v1809 = vpop.f32.mrf.mxu0
  %v1810 = vpop.f32.mrf.mxu0
  %v1811 = vadd.f32 %v1452, %v1810
  %v1812 = vpop.f32.mrf.mxu0
  %1813 = vmatprep.mubr.bf16.mxu0 0
  %1814 = vmatmul.mubr.bf16.gmra.mxu0 %v1546
  %v1815 = vpop.f32.mrf.mxu0
  %v1816 = vadd.f32 %v1452, %v1815
  %v1817 = vpop.f32.mrf.mxu0
  %v1818 = vpop.f32.mrf.mxu0
  %v1819 = vadd.f32 %v1452, %v1818
  %v1820 = vpop.f32.mrf.mxu0
  %1821 = vmatprep.mubr.bf16.mxu0 0
  %1822 = vmatmul.mubr.bf16.gmra.mxu0 %v1549
  %v1823 = vpop.f32.mrf.mxu0
  %v1824 = vadd.f32 %v1452, %v1823
  %v1825 = vpop.f32.mrf.mxu0
  %v1826 = vpop.f32.mrf.mxu0
  %v1827 = vadd.f32 %v1452, %v1826
  %v1828 = vpop.f32.mrf.mxu0
  %1829 = vmatprep.mubr.bf16.mxu0 0
  %1830 = vmatmul.mubr.bf16.gmra.mxu0 %v1552
  %v1831 = vpop.f32.mrf.mxu0
  %v1832 = vadd.f32 %v1452, %v1831
  %v1833 = vpop.f32.mrf.mxu0
  %v1834 = vpop.f32.mrf.mxu0
  %v1835 = vadd.f32 %v1452, %v1834
  %v1836 = vpop.f32.mrf.mxu0
  %1837 = vmatprep.mubr.bf16.mxu0 0
  %1838 = vmatmul.mubr.bf16.gmra.mxu0 %v1555
  %v1839 = vpop.f32.mrf.mxu0
  %v1840 = vadd.f32 %v1452, %v1839
  %v1841 = vpop.f32.mrf.mxu0
  %v1842 = vpop.f32.mrf.mxu0
  %v1843 = vadd.f32 %v1452, %v1842
  %v1844 = vpop.f32.mrf.mxu0
  %1845 = vdwg.mxu0
  %vm1846 = vcmp.ge.f32.partialorder %v1592, 0.0
  %vm1847 = vcmp.ge.f32.partialorder %v1595, 0.0
  %vm1848 = vcmp.ge.f32.partialorder %v1600, 0.0
  %vm1849 = vcmp.ge.f32.partialorder %v1603, 0.0
  %vm1850 = vcmp.ge.f32.partialorder %v1608, 0.0
  %vm1851 = vcmp.ge.f32.partialorder %v1611, 0.0
  %vm1852 = vcmp.ge.f32.partialorder %v1616, 0.0
  %vm1853 = vcmp.ge.f32.partialorder %v1619, 0.0
  %vm1854 = vcmp.ge.f32.partialorder %v1624, 0.0
  %vm1855 = vcmp.ge.f32.partialorder %v1627, 0.0
  %vm1856 = vcmp.ge.f32.partialorder %v1632, 0.0
  %vm1857 = vcmp.ge.f32.partialorder %v1635, 0.0
  %vm1858 = vcmp.ge.f32.partialorder %v1640, 0.0
  %vm1859 = vcmp.ge.f32.partialorder %v1643, 0.0
  %vm1860 = vcmp.ge.f32.partialorder %v1648, 0.0
  %vm1861 = vcmp.ge.f32.partialorder %v1651, 0.0
  %vm1862 = vcmp.ge.f32.partialorder %v1656, 0.0
  %vm1863 = vcmp.ge.f32.partialorder %v1659, 0.0
  %vm1864 = vcmp.ge.f32.partialorder %v1664, 0.0
  %vm1865 = vcmp.ge.f32.partialorder %v1667, 0.0
  %vm1866 = vcmp.ge.f32.partialorder %v1672, 0.0
  %vm1867 = vcmp.ge.f32.partialorder %v1675, 0.0
  %vm1868 = vcmp.ge.f32.partialorder %v1680, 0.0
  %vm1869 = vcmp.ge.f32.partialorder %v1683, 0.0
  %vm1870 = vcmp.ge.f32.partialorder %v1688, 0.0
  %vm1871 = vcmp.ge.f32.partialorder %v1691, 0.0
  %vm1872 = vcmp.ge.f32.partialorder %v1696, 0.0
  %vm1873 = vcmp.ge.f32.partialorder %v1699, 0.0
  %vm1874 = vcmp.ge.f32.partialorder %v1704, 0.0
  %vm1875 = vcmp.ge.f32.partialorder %v1707, 0.0
  %vm1876 = vcmp.ge.f32.partialorder %v1712, 0.0
  %vm1877 = vcmp.ge.f32.partialorder %v1715, 0.0
  %vm1878 = vcmp.ge.f32.partialorder %v1720, 0.0
  %vm1879 = vcmp.ge.f32.partialorder %v1723, 0.0
  %vm1880 = vcmp.ge.f32.partialorder %v1728, 0.0
  %vm1881 = vcmp.ge.f32.partialorder %v1731, 0.0
  %vm1882 = vcmp.ge.f32.partialorder %v1736, 0.0
  %vm1883 = vcmp.ge.f32.partialorder %v1739, 0.0
  %vm1884 = vcmp.ge.f32.partialorder %v1744, 0.0
  %vm1885 = vcmp.ge.f32.partialorder %v1747, 0.0
  %vm1886 = vcmp.ge.f32.partialorder %v1752, 0.0
  %vm1887 = vcmp.ge.f32.partialorder %v1755, 0.0
  %vm1888 = vcmp.ge.f32.partialorder %v1760, 0.0
  %vm1889 = vcmp.ge.f32.partialorder %v1763, 0.0
  %vm1890 = vcmp.ge.f32.partialorder %v1768, 0.0
  %vm1891 = vcmp.ge.f32.partialorder %v1771, 0.0
  %vm1892 = vcmp.ge.f32.partialorder %v1776, 0.0
  %vm1893 = vcmp.ge.f32.partialorder %v1779, 0.0
  %vm1894 = vcmp.ge.f32.partialorder %v1784, 0.0
  %vm1895 = vcmp.ge.f32.partialorder %v1787, 0.0
  %vm1896 = vcmp.ge.f32.partialorder %v1792, 0.0
  %vm1897 = vcmp.ge.f32.partialorder %v1795, 0.0
  %vm1898 = vcmp.ge.f32.partialorder %v1800, 0.0
  %vm1899 = vcmp.ge.f32.partialorder %v1803, 0.0
  %vm1900 = vcmp.ge.f32.partialorder %v1808, 0.0
  %vm1901 = vcmp.ge.f32.partialorder %v1811, 0.0
  %vm1902 = vcmp.ge.f32.partialorder %v1816, 0.0
  %vm1903 = vcmp.ge.f32.partialorder %v1819, 0.0
  %vm1904 = vcmp.ge.f32.partialorder %v1824, 0.0
  %vm1905 = vcmp.ge.f32.partialorder %v1827, 0.0
  %vm1906 = vcmp.ge.f32.partialorder %v1832, 0.0
  %vm1907 = vcmp.ge.f32.partialorder %v1835, 0.0
  %vm1908 = vcmp.ge.f32.partialorder %v1840, 0.0
  %vm1909 = vcmp.ge.f32.partialorder %v1843, 0.0
  %v1910 = vmul.f32 %v1592, 0.1
  %v1911 = vmul.f32 %v1595, 0.1
  %v1912 = vmul.f32 %v1600, 0.1
  %v1913 = vmul.f32 %v1603, 0.1
  %v1914 = vmul.f32 %v1608, 0.1
  %v1915 = vmul.f32 %v1611, 0.1
  %v1916 = vmul.f32 %v1616, 0.1
  %v1917 = vmul.f32 %v1619, 0.1
  %v1918 = vmul.f32 %v1624, 0.1
  %v1919 = vmul.f32 %v1627, 0.1
  %v1920 = vmul.f32 %v1632, 0.1
  %v1921 = vmul.f32 %v1635, 0.1
  %v1922 = vmul.f32 %v1640, 0.1
  %v1923 = vmul.f32 %v1643, 0.1
  %v1924 = vmul.f32 %v1648, 0.1
  %v1925 = vmul.f32 %v1651, 0.1
  %v1926 = vmul.f32 %v1656, 0.1
  %v1927 = vmul.f32 %v1659, 0.1
  %v1928 = vmul.f32 %v1664, 0.1
  %v1929 = vmul.f32 %v1667, 0.1
  %v1930 = vmul.f32 %v1672, 0.1
  %v1931 = vmul.f32 %v1675, 0.1
  %v1932 = vmul.f32 %v1680, 0.1
  %v1933 = vmul.f32 %v1683, 0.1
  %v1934 = vmul.f32 %v1688, 0.1
  %v1935 = vmul.f32 %v1691, 0.1
  %v1936 = vmul.f32 %v1696, 0.1
  %v1937 = vmul.f32 %v1699, 0.1
  %v1938 = vmul.f32 %v1704, 0.1
  %v1939 = vmul.f32 %v1707, 0.1
  %v1940 = vmul.f32 %v1712, 0.1
  %v1941 = vmul.f32 %v1715, 0.1
  %v1942 = vmul.f32 %v1720, 0.1
  %v1943 = vmul.f32 %v1723, 0.1
  %v1944 = vmul.f32 %v1728, 0.1
  %v1945 = vmul.f32 %v1731, 0.1
  %v1946 = vmul.f32 %v1736, 0.1
  %v1947 = vmul.f32 %v1739, 0.1
  %v1948 = vmul.f32 %v1744, 0.1
  %v1949 = vmul.f32 %v1747, 0.1
  %v1950 = vmul.f32 %v1752, 0.1
  %v1951 = vmul.f32 %v1755, 0.1
  %v1952 = vmul.f32 %v1760, 0.1
  %v1953 = vmul.f32 %v1763, 0.1
  %v1954 = vmul.f32 %v1768, 0.1
  %v1955 = vmul.f32 %v1771, 0.1
  %v1956 = vmul.f32 %v1776, 0.1
  %v1957 = vmul.f32 %v1779, 0.1
  %v1958 = vmul.f32 %v1784, 0.1
  %v1959 = vmul.f32 %v1787, 0.1
  %v1960 = vmul.f32 %v1792, 0.1
  %v1961 = vmul.f32 %v1795, 0.1
  %v1962 = vmul.f32 %v1800, 0.1
  %v1963 = vmul.f32 %v1803, 0.1
  %v1964 = vmul.f32 %v1808, 0.1
  %v1965 = vmul.f32 %v1811, 0.1
  %v1966 = vmul.f32 %v1816, 0.1
  %v1967 = vmul.f32 %v1819, 0.1
  %v1968 = vmul.f32 %v1824, 0.1
  %v1969 = vmul.f32 %v1827, 0.1
  %v1970 = vmul.f32 %v1832, 0.1
  %v1971 = vmul.f32 %v1835, 0.1
  %v1972 = vmul.f32 %v1840, 0.1
  %v1973 = vmul.f32 %v1843, 0.1
  %v1974 = vsel %vm1846, %v1592, %v1910
  %v1975 = vsel %vm1847, %v1595, %v1911
  %v1976 = vsel %vm1848, %v1600, %v1912
  %v1977 = vsel %vm1849, %v1603, %v1913
  %v1978 = vsel %vm1850, %v1608, %v1914
  %v1979 = vsel %vm1851, %v1611, %v1915
  %v1980 = vsel %vm1852, %v1616, %v1916
  %v1981 = vsel %vm1853, %v1619, %v1917
  %v1982 = vsel %vm1854, %v1624, %v1918
  %v1983 = vsel %vm1855, %v1627, %v1919
  %v1984 = vsel %vm1856, %v1632, %v1920
  %v1985 = vsel %vm1857, %v1635, %v1921
  %v1986 = vsel %vm1858, %v1640, %v1922
  %v1987 = vsel %vm1859, %v1643, %v1923
  %v1988 = vsel %vm1860, %v1648, %v1924
  %v1989 = vsel %vm1861, %v1651, %v1925
  %v1990 = vsel %vm1862, %v1656, %v1926
  %v1991 = vsel %vm1863, %v1659, %v1927
  %v1992 = vsel %vm1864, %v1664, %v1928
  %v1993 = vsel %vm1865, %v1667, %v1929
  %v1994 = vsel %vm1866, %v1672, %v1930
  %v1995 = vsel %vm1867, %v1675, %v1931
  %v1996 = vsel %vm1868, %v1680, %v1932
  %v1997 = vsel %vm1869, %v1683, %v1933
  %v1998 = vsel %vm1870, %v1688, %v1934
  %v1999 = vsel %vm1871, %v1691, %v1935
  %v2000 = vsel %vm1872, %v1696, %v1936
  %v2001 = vsel %vm1873, %v1699, %v1937
  %v2002 = vsel %vm1874, %v1704, %v1938
  %v2003 = vsel %vm1875, %v1707, %v1939
  %v2004 = vsel %vm1876, %v1712, %v1940
  %v2005 = vsel %vm1877, %v1715, %v1941
  %v2006 = vsel %vm1878, %v1720, %v1942
  %v2007 = vsel %vm1879, %v1723, %v1943
  %v2008 = vsel %vm1880, %v1728, %v1944
  %v2009 = vsel %vm1881, %v1731, %v1945
  %v2010 = vsel %vm1882, %v1736, %v1946
  %v2011 = vsel %vm1883, %v1739, %v1947
  %v2012 = vsel %vm1884, %v1744, %v1948
  %v2013 = vsel %vm1885, %v1747, %v1949
  %v2014 = vsel %vm1886, %v1752, %v1950
  %v2015 = vsel %vm1887, %v1755, %v1951
  %v2016 = vsel %vm1888, %v1760, %v1952
  %v2017 = vsel %vm1889, %v1763, %v1953
  %v2018 = vsel %vm1890, %v1768, %v1954
  %v2019 = vsel %vm1891, %v1771, %v1955
  %v2020 = vsel %vm1892, %v1776, %v1956
  %v2021 = vsel %vm1893, %v1779, %v1957
  %v2022 = vsel %vm1894, %v1784, %v1958
  %v2023 = vsel %vm1895, %v1787, %v1959
  %v2024 = vsel %vm1896, %v1792, %v1960
  %v2025 = vsel %vm1897, %v1795, %v1961
  %v2026 = vsel %vm1898, %v1800, %v1962
  %v2027 = vsel %vm1899, %v1803, %v1963
  %v2028 = vsel %vm1900, %v1808, %v1964
  %v2029 = vsel %vm1901, %v1811, %v1965
  %v2030 = vsel %vm1902, %v1816, %v1966
  %v2031 = vsel %vm1903, %v1819, %v1967
  %v2032 = vsel %vm1904, %v1824, %v1968
  %v2033 = vsel %vm1905, %v1827, %v1969
  %v2034 = vsel %vm1906, %v1832, %v1970
  %v2035 = vsel %vm1907, %v1835, %v1971
  %v2036 = vsel %vm1908, %v1840, %v1972
  %v2037 = vsel %vm1909, %v1843, %v1973
  %2038 = vst.msk [vmem:[%s7] sm:$0xff] %vm1460, %v1974
  %2039 = vst.msk [vmem:[%s7 + $0x8] sm:$0xff] %vm1460, %v1975
  %2040 = vst.msk [vmem:[%s7 + $0x10] sm:$0xff] %vm1460, %v1976
  %2041 = vst.msk [vmem:[%s7 + $0x18] sm:$0xff] %vm1460, %v1977
  %2042 = vst.msk [vmem:[%s7 + $0x20] sm:$0xff] %vm1460, %v1978
  %2043 = vst.msk [vmem:[%s7 + $0x28] sm:$0xff] %vm1460, %v1979
  %2044 = vst.msk [vmem:[%s7 + $0x30] sm:$0xff] %vm1460, %v1980
  %2045 = vst.msk [vmem:[%s7 + $0x38] sm:$0xff] %vm1460, %v1981
  %2046 = vst.msk [vmem:[%s7 + $0x40] sm:$0xff] %vm1460, %v1982
  %2047 = vst.msk [vmem:[%s7 + $0x48] sm:$0xff] %vm1460, %v1983
  %2048 = vst.msk [vmem:[%s7 + $0x50] sm:$0xff] %vm1460, %v1984
  %2049 = vst.msk [vmem:[%s7 + $0x58] sm:$0xff] %vm1460, %v1985
  %2050 = vst.msk [vmem:[%s7 + $0x60] sm:$0xff] %vm1460, %v1986
  %2051 = vst.msk [vmem:[%s7 + $0x68] sm:$0xff] %vm1460, %v1987
  %2052 = vst.msk [vmem:[%s7 + $0x70] sm:$0xff] %vm1460, %v1988
  %2053 = vst.msk [vmem:[%s7 + $0x78] sm:$0xff] %vm1460, %v1989
  %2054 = vst.msk [vmem:[%s7 + $0x80] sm:$0xff] %vm1460, %v1990
  %2055 = vst.msk [vmem:[%s7 + $0x88] sm:$0xff] %vm1460, %v1991
  %2056 = vst.msk [vmem:[%s7 + $0x90] sm:$0xff] %vm1460, %v1992
  %2057 = vst.msk [vmem:[%s7 + $0x98] sm:$0xff] %vm1460, %v1993
  %2058 = vst.msk [vmem:[%s7 + $0xa0] sm:$0xff] %vm1460, %v1994
  %2059 = vst.msk [vmem:[%s7 + $0xa8] sm:$0xff] %vm1460, %v1995
  %2060 = vst.msk [vmem:[%s7 + $0xb0] sm:$0xff] %vm1460, %v1996
  %2061 = vst.msk [vmem:[%s7 + $0xb8] sm:$0xff] %vm1460, %v1997
  %2062 = vst.msk [vmem:[%s7 + $0xc0] sm:$0xff] %vm1460, %v1998
  %2063 = vst.msk [vmem:[%s7 + $0xc8] sm:$0xff] %vm1460, %v1999
  %2064 = vst.msk [vmem:[%s7 + $0xd0] sm:$0xff] %vm1460, %v2000
  %2065 = vst.msk [vmem:[%s7 + $0xd8] sm:$0xff] %vm1460, %v2001
  %2066 = vst.msk [vmem:[%s7 + $0xe0] sm:$0xff] %vm1460, %v2002
  %2067 = vst.msk [vmem:[%s7 + $0xe8] sm:$0xff] %vm1460, %v2003
  %2068 = vst.msk [vmem:[%s7 + $0xf0] sm:$0xff] %vm1460, %v2004
  %2069 = vst.msk [vmem:[%s7 + $0xf8] sm:$0xff] %vm1460, %v2005
  %2070 = vst.msk [vmem:[%s7 + $0x100] sm:$0xff] %vm1460, %v2006
  %2071 = vst.msk [vmem:[%s7 + $0x108] sm:$0xff] %vm1460, %v2007
  %2072 = vst.msk [vmem:[%s7 + $0x110] sm:$0xff] %vm1460, %v2008
  %2073 = vst.msk [vmem:[%s7 + $0x118] sm:$0xff] %vm1460, %v2009
  %2074 = vst.msk [vmem:[%s7 + $0x120] sm:$0xff] %vm1460, %v2010
  %2075 = vst.msk [vmem:[%s7 + $0x128] sm:$0xff] %vm1460, %v2011
  %2076 = vst.msk [vmem:[%s7 + $0x130] sm:$0xff] %vm1460, %v2012
  %2077 = vst.msk [vmem:[%s7 + $0x138] sm:$0xff] %vm1460, %v2013
  %2078 = vst.msk [vmem:[%s7 + $0x140] sm:$0xff] %vm1460, %v2014
  %2079 = vst.msk [vmem:[%s7 + $0x148] sm:$0xff] %vm1460, %v2015
  %2080 = vst.msk [vmem:[%s7 + $0x150] sm:$0xff] %vm1460, %v2016
  %2081 = vst.msk [vmem:[%s7 + $0x158] sm:$0xff] %vm1460, %v2017
  %2082 = vst.msk [vmem:[%s7 + $0x160] sm:$0xff] %vm1460, %v2018
  %2083 = vst.msk [vmem:[%s7 + $0x168] sm:$0xff] %vm1460, %v2019
  %2084 = vst.msk [vmem:[%s7 + $0x170] sm:$0xff] %vm1460, %v2020
  %2085 = vst.msk [vmem:[%s7 + $0x178] sm:$0xff] %vm1460, %v2021
  %2086 = vst.msk [vmem:[%s7 + $0x180] sm:$0xff] %vm1460, %v2022
  %2087 = vst.msk [vmem:[%s7 + $0x188] sm:$0xff] %vm1460, %v2023
  %2088 = vst.msk [vmem:[%s7 + $0x190] sm:$0xff] %vm1460, %v2024
  %2089 = vst.msk [vmem:[%s7 + $0x198] sm:$0xff] %vm1460, %v2025
  %2090 = vst.msk [vmem:[%s7 + $0x1a0] sm:$0xff] %vm1460, %v2026
  %2091 = vst.msk [vmem:[%s7 + $0x1a8] sm:$0xff] %vm1460, %v2027
  %2092 = vst.msk [vmem:[%s7 + $0x1b0] sm:$0xff] %vm1460, %v2028
  %2093 = vst.msk [vmem:[%s7 + $0x1b8] sm:$0xff] %vm1460, %v2029
  %2094 = vst.msk [vmem:[%s7 + $0x1c0] sm:$0xff] %vm1460, %v2030
  %2095 = vst.msk [vmem:[%s7 + $0x1c8] sm:$0xff] %vm1460, %v2031
  %2096 = vst.msk [vmem:[%s7 + $0x1d0] sm:$0xff] %vm1460, %v2032
  %2097 = vst.msk [vmem:[%s7 + $0x1d8] sm:$0xff] %vm1460, %v2033
  %2098 = vst.msk [vmem:[%s7 + $0x1e0] sm:$0xff] %vm1460, %v2034
  %2099 = vst.msk [vmem:[%s7 + $0x1e8] sm:$0xff] %vm1460, %v2035
  %2100 = vst.msk [vmem:[%s7 + $0x1f0] sm:$0xff] %vm1460, %v2036
  %2101 = vst.msk [vmem:[%s7 + $0x1f8] sm:$0xff] %vm1460, %v2037
  // Predicated region
  $region30: #{up_forward.4} parent=0 // pred_check
    _
  $region31: #{up_forward.4} parent=0 // pred_check_branch
    %2103 = sbr.rel (0) target = $region33
  $region32: #{up_forward.4} parent=0 // pred_region
    _
  $region33: #{up_forward.4} parent=0 // pred_fallthru
    _
  // Predicated region
  $region34: #{up_forward.4} parent=0 // pred_check
    _
  $region35: #{up_forward.4} parent=0 // pred_check_branch
    %2105 = sbr.rel (0) target = $region37
  $region36: #{up_forward.4} parent=0 // pred_region
    _
  $region37: #{up_forward.4} parent=0 // pred_fallthru
    _

// kernel: up_forward.3
$region0: #{up_forward.3}
  #allocation0 [shape = 'u32[]', space=smem, size = 0x4, offset = 0x4, fixed_abs, tag = 'smem constant byte address 0x4 - core index']
  #allocation1 [shape = 'u32[144,128]{1,0:T(1,128)}', space=vmem, size = 0x12000, scoped, tag = 'internal scratch']
  %s0 = inlined_call_operand.vmem [shape: f32[2,10,10,32], index: 0, kind: input, shape index: {}]
  %s1 = inlined_call_operand.vmem [shape: bf16[4,128,32], index: 1, kind: input, shape index: {}]
  %s2 = inlined_call_operand.vmem [shape: f32[1,32], index: 2, kind: input, shape index: {}]
  %s3 = inlined_call_operand.vmem [shape: f32[1,32], index: 3, kind: input, shape index: {}]
  %s4 = inlined_call_operand.vmem [shape: f32[1,32], index: 4, kind: input, shape index: {}]
  %s5 = inlined_call_operand.vmem [shape: bf16[2,4,64,32], index: 5, kind: output, shape index: {}]
  %s6 = sld [smem:[#allocation0]]
  $region53: #{up_forward.3} parent=0
    _
  %s8 = ssub.s32 1, %s6
  %s9 = scalar_select 0, %s8, %s6
  loop: start=0, step=1, limit=4
  $region2: #{up_forward.3} parent=0 // loop_pre_header
    _
  $region3: #{up_forward.3} parent=0 // loop_header
    %s11 = sphi 0, %s15
    %p12 = scmp.ge.s32.totalorder %s11, 4
    %s21 = sphi 0, %s23
    %s24 = sphi 0, %s21
    %s25 = sphi 0, %s24
    %s41 = sphi 0, %s25
    %s45 = sphi 0, %s45
    %s47 = sphi 0, %s45
    %s48 = sphi 0, %s47
    %s62 = sphi 0, %s48
    %s66 = sphi 0, %s66
    %s68 = sphi 0, %s66
    %s69 = sphi 0, %s68
    %s83 = sphi 0, %s69
    %s87 = sphi 0, %s87
    %s89 = sphi 0, %s87
    %s90 = sphi 0, %s89
    %s104 = sphi 0, %s90
    %s108 = sphi 0, %s108
    %s110 = sphi 0, %s108
    %s111 = sphi 0, %s110
    %s125 = sphi 0, %s111
    %s131 = sphi 0, %s133
    %s134 = sphi 0, %s131
    %s135 = sphi 0, %s134
    %s151 = sphi 0, %s135
  $region4: #{up_forward.3} parent=0 // loop_header_branch
    %14 = sbr.rel (%p12) target = $region8
  $region5: #{up_forward.3} parent=0 // loop_body
    %s16 = ssub.s32 %s11, 1
    %s17 = ssub.s32 %s11, 2
    %s18 = sadd.s32 %s11, 1
    %s19 = ssub.s32 %s11, %s18
    %p20 = scmp.eq.s32.totalorder %s19, 0
    %s22 = sadd.s32 %s21, 1
    %s23 = scalar_select %p20, %s21, %s22
    %p26 = pneg %p20
    %p27 = scmp.eq.s32.totalorder %s11, 1
    %p28 = por %p26, %p27
    %p29 = scmp.ne.s32.totalorder %s21, %s24
    %p30 = scmp.eq.s32.totalorder %s11, 0
    %p31 = por %p29, %p30
    %p32 = scmp.ne.s32.totalorder %s21, %s24
    %p33 = scmp.eq.s32.totalorder %s16, 1
    %p34 = por %p32, %p33
    %p35 = scmp.ne.s32.totalorder %s24, %s25
    %p36 = scmp.eq.s32.totalorder %s16, 0
    %p37 = por %p35, %p36
    %p38 = scmp.ne.s32.totalorder %s24, %s25
    %p39 = scmp.eq.s32.totalorder %s17, 1
    %p40 = por %p38, %p39
    %p42 = scmp.ne.s32.totalorder %s25, %s41
    %p43 = scmp.eq.s32.totalorder %s17, 0
    %p44 = por %p42, %p43
    %s46 = sadd.s32 %s45, 1
    %p49 = scmp.eq.s32.totalorder %s11, 1
    %p50 = scmp.ne.s32.totalorder %s45, %s47
    %p51 = scmp.eq.s32.totalorder %s11, 0
    %p52 = por %p50, %p51
    %p53 = scmp.ne.s32.totalorder %s45, %s47
    %p54 = scmp.eq.s32.totalorder %s16, 1
    %p55 = por %p53, %p54
    %p56 = scmp.ne.s32.totalorder %s47, %s48
    %p57 = scmp.eq.s32.totalorder %s16, 0
    %p58 = por %p56, %p57
    %p59 = scmp.ne.s32.totalorder %s47, %s48
    %p60 = scmp.eq.s32.totalorder %s17, 1
    %p61 = por %p59, %p60
    %p63 = scmp.ne.s32.totalorder %s48, %s62
    %p64 = scmp.eq.s32.totalorder %s17, 0
    %p65 = por %p63, %p64
    %s67 = sadd.s32 %s66, 1
    %p70 = scmp.eq.s32.totalorder %s11, 1
    %p71 = scmp.ne.s32.totalorder %s66, %s68
    %p72 = scmp.eq.s32.totalorder %s11, 0
    %p73 = por %p71, %p72
    %p74 = scmp.ne.s32.totalorder %s66, %s68
    %p75 = scmp.eq.s32.totalorder %s16, 1
    %p76 = por %p74, %p75
    %p77 = scmp.ne.s32.totalorder %s68, %s69
    %p78 = scmp.eq.s32.totalorder %s16, 0
    %p79 = por %p77, %p78
    %p80 = scmp.ne.s32.totalorder %s68, %s69
    %p81 = scmp.eq.s32.totalorder %s17, 1
    %p82 = por %p80, %p81
    %p84 = scmp.ne.s32.totalorder %s69, %s83
    %p85 = scmp.eq.s32.totalorder %s17, 0
    %p86 = por %p84, %p85
    %s88 = sadd.s32 %s87, 1
    %p91 = scmp.eq.s32.totalorder %s11, 1
    %p92 = scmp.ne.s32.totalorder %s87, %s89
    %p93 = scmp.eq.s32.totalorder %s11, 0
    %p94 = por %p92, %p93
    %p95 = scmp.ne.s32.totalorder %s87, %s89
    %p96 = scmp.eq.s32.totalorder %s16, 1
    %p97 = por %p95, %p96
    %p98 = scmp.ne.s32.totalorder %s89, %s90
    %p99 = scmp.eq.s32.totalorder %s16, 0
    %p100 = por %p98, %p99
    %p101 = scmp.ne.s32.totalorder %s89, %s90
    %p102 = scmp.eq.s32.totalorder %s17, 1
    %p103 = por %p101, %p102
    %p105 = scmp.ne.s32.totalorder %s90, %s104
    %p106 = scmp.eq.s32.totalorder %s17, 0
    %p107 = por %p105, %p106
    %s109 = sadd.s32 %s108, 1
    %p112 = scmp.eq.s32.totalorder %s11, 1
    %p113 = scmp.ne.s32.totalorder %s108, %s110
    %p114 = scmp.eq.s32.totalorder %s11, 0
    %p115 = por %p113, %p114
    %p116 = scmp.ne.s32.totalorder %s108, %s110
    %p117 = scmp.eq.s32.totalorder %s16, 1
    %p118 = por %p116, %p117
    %p119 = scmp.ne.s32.totalorder %s110, %s111
    %p120 = scmp.eq.s32.totalorder %s16, 0
    %p121 = por %p119, %p120
    %p122 = scmp.ne.s32.totalorder %s110, %s111
    %p123 = scmp.eq.s32.totalorder %s17, 1
    %p124 = por %p122, %p123
    %p126 = scmp.ne.s32.totalorder %s111, %s125
    %p127 = scmp.eq.s32.totalorder %s17, 0
    %p128 = por %p126, %p127
    %s129 = ssub.s32 %s11, %s18
    %p130 = scmp.eq.s32.totalorder %s129, 0
    %s132 = sadd.s32 %s131, 1
    %s133 = scalar_select %p130, %s131, %s132
    %p136 = pneg %p130
    %p137 = scmp.eq.s32.totalorder %s11, 1
    %p138 = por %p136, %p137
    %p139 = scmp.ne.s32.totalorder %s131, %s134
    %p140 = scmp.eq.s32.totalorder %s11, 0
    %p141 = por %p139, %p140
    %p142 = scmp.ne.s32.totalorder %s131, %s134
    %p143 = scmp.eq.s32.totalorder %s16, 1
    %p144 = por %p142, %p143
    %p145 = scmp.ne.s32.totalorder %s134, %s135
    %p146 = scmp.eq.s32.totalorder %s16, 0
    %p147 = por %p145, %p146
    %p148 = scmp.ne.s32.totalorder %s134, %s135
    %p149 = scmp.eq.s32.totalorder %s17, 1
    %p150 = por %p148, %p149
    %p152 = scmp.ne.s32.totalorder %s135, %s151
    %p153 = scmp.eq.s32.totalorder %s17, 0
    %p154 = por %p152, %p153
    %p155 = scmp.le.s32.totalorder 1, %s11
    %p156 = scmp.lt.s32.totalorder %s11, 3
    %p157 = pnand %p155, %p156
    %p158 = pneg %p157
    // Predicated region
    $region9: #{up_forward.3} parent=5 // pred_check
      _
    $region10: #{up_forward.3} parent=5 // pred_check_branch
      %160 = sbr.rel (%p157) target = $region12
    $region11: #{up_forward.3} parent=5 // pred_region
      %s161 = ssub.s32 %s11, 1
      // Predicated region
      $region13: #{up_forward.3} parent=11 // pred_check
        %p162 = pneg %p58
      $region14: #{up_forward.3} parent=11 // pred_check_branch
        %164 = sbr.rel (%p162) target = $region16
      $region15: #{up_forward.3} parent=11 // pred_region
        _
      $region16: #{up_forward.3} parent=11 // pred_fallthru
        _
      // Predicated region
      $region17: #{up_forward.3} parent=11 // pred_check
        %p165 = pneg %p79
      $region18: #{up_forward.3} parent=11 // pred_check_branch
        %167 = sbr.rel (%p165) target = $region20
      $region19: #{up_forward.3} parent=11 // pred_region
        _
      $region20: #{up_forward.3} parent=11 // pred_fallthru
        _
      // Predicated region
      $region21: #{up_forward.3} parent=11 // pred_check
        %p168 = pneg %p100
      $region22: #{up_forward.3} parent=11 // pred_check_branch
        %170 = sbr.rel (%p168) target = $region24
      $region23: #{up_forward.3} parent=11 // pred_region
        _
      $region24: #{up_forward.3} parent=11 // pred_fallthru
        _
      // Predicated region
      $region25: #{up_forward.3} parent=11 // pred_check
        %p171 = pneg %p121
      $region26: #{up_forward.3} parent=11 // pred_check_branch
        %173 = sbr.rel (%p171) target = $region28
      $region27: #{up_forward.3} parent=11 // pred_region
        _
      $region28: #{up_forward.3} parent=11 // pred_fallthru
        _
    $region12: #{up_forward.3} parent=5 // pred_fallthru
      _
    %p174 = scmp.lt.s32.totalorder %s11, 2
    // Predicated region
    $region29: #{up_forward.3} parent=5 // pred_check
      %p175 = pneg %p174
    $region30: #{up_forward.3} parent=5 // pred_check_branch
      %177 = sbr.rel (%p175) target = $region32
    $region31: #{up_forward.3} parent=5 // pred_region
      // Predicated region
      $region33: #{up_forward.3} parent=31 // pred_check
        %p178 = pneg %p31
      $region34: #{up_forward.3} parent=31 // pred_check_branch
        %180 = sbr.rel (%p178) target = $region36
      $region35: #{up_forward.3} parent=31 // pred_region
        %p181 = scmp.lt.s32.totalorder %s11, 1
        %s182 = scalar_select %p181, %s11, 1
        %s183 = smul.addr %s182, 20
        %s184 = smul.addr %s183, 8
        %s185 = scalar_lea.vmem %s0, %s184
      $region36: #{up_forward.3} parent=31 // pred_fallthru
        _
    $region32: #{up_forward.3} parent=5 // pred_fallthru
      _
    %p186 = scmp.le.s32.totalorder 1, %s11
    %p187 = scmp.lt.s32.totalorder %s11, 3
    %p188 = pnand %p186, %p187
    %p189 = pneg %p188
    // Predicated region
    $region37: #{up_forward.3} parent=5 // pred_check
      _
    $region38: #{up_forward.3} parent=5 // pred_check_branch
      %191 = sbr.rel (%p188) target = $region40
    $region39: #{up_forward.3} parent=5 // pred_region
      %s192 = ssub.s32 %s11, 1
      %p193 = scmp.lt.s32.totalorder %s16, 1
      %s194 = scalar_select %p193, %s16, 1
      %s195 = smul.addr %s194, 20
      %s196 = smul.addr %s195, 8
      %s197 = scalar_lea.vmem %s0, %s196
      %p198 = pneg %p37
      %p199 = pneg %p34
      %p200 = pneg %p58
      %p201 = pneg %p55
      %p202 = pneg %p79
      %p203 = pneg %p76
      %p204 = pneg %p100
      %p205 = pneg %p97
      %p206 = pneg %p121
      %p207 = pneg %p118
      %p208 = pneg %p147
      %p209 = pneg %p144
      %p210 = scmp.lt.s32.totalorder %s16, 1
      %s211 = scalar_select %p210, %s16, 1
      %s212 = smul.addr %s211, 32
      %s213 = smul.addr %s212, 4
      %s214 = scalar_lea.vmem %s5, %s213
      %p215 = scmp.lt.s32.totalorder %s16, 1
      %s216 = scalar_select %p215, %s16, 1
      %s217 = smul.addr %s216, 20
      %s218 = smul.addr %s217, 8
      %s219 = scalar_lea.vmem %s0, %s218
      %p220 = scmp.lt.s32.totalorder %s16, 1
      %s221 = scalar_select %p220, %s16, 1
      %s222 = smul.addr %s221, 32
      %s223 = smul.addr %s222, 4
      %s224 = scalar_lea.vmem %s5, %s223
      %v226 = vld [vmem:[%s219] sm:$0xff]
      %v227 = vld [vmem:[%s219 + $0x10] sm:$0xff]
      %v228 = vld [vmem:[%s219 + $0x20] sm:$0xff]
      %v229 = vld [vmem:[%s219 + $0x30] sm:$0xff]
      %v230 = vld [vmem:[%s219 + $0x40] sm:$0xff]
      %v231 = vld [vmem:[%s219 + $0x50] sm:$0xff]
      %v232 = vld [vmem:[%s219 + $0x60] sm:$0xff]
      %v233 = vld [vmem:[%s219 + $0x70] sm:$0xff]
      %v234 = vld [vmem:[%s219 + $0x1] sm:$0xff]
      %v235 = vld [vmem:[%s219 + $0x11] sm:$0xff]
      %v236 = vld [vmem:[%s219 + $0x21] sm:$0xff]
      %v237 = vld [vmem:[%s219 + $0x31] sm:$0xff]
      %v238 = vld [vmem:[%s219 + $0x41] sm:$0xff]
      %v239 = vld [vmem:[%s219 + $0x51] sm:$0xff]
      %v240 = vld [vmem:[%s219 + $0x61] sm:$0xff]
      %v241 = vld [vmem:[%s219 + $0x71] sm:$0xff]
      %s242 = scalar_lea.vmem %s219, 16
      %v243 = vld [vmem:[%s242] sm:$0xff]
      %v244 = vld [vmem:[%s242 + $0x10] sm:$0xff]
      %v245 = vld [vmem:[%s242 + $0x20] sm:$0xff]
      %v246 = vld [vmem:[%s242 + $0x30] sm:$0xff]
      %v247 = vld [vmem:[%s242 + $0x40] sm:$0xff]
      %v248 = vld [vmem:[%s242 + $0x50] sm:$0xff]
      %v249 = vld [vmem:[%s242 + $0x60] sm:$0xff]
      %v250 = vld [vmem:[%s242 + $0x70] sm:$0xff]
      %v251 = vld [vmem:[%s242 + $0x1] sm:$0xff]
      %v252 = vld [vmem:[%s242 + $0x11] sm:$0xff]
      %v253 = vld [vmem:[%s242 + $0x21] sm:$0xff]
      %v254 = vld [vmem:[%s242 + $0x31] sm:$0xff]
      %v255 = vld [vmem:[%s242 + $0x41] sm:$0xff]
      %v256 = vld [vmem:[%s242 + $0x51] sm:$0xff]
      %v257 = vld [vmem:[%s242 + $0x61] sm:$0xff]
      %v258 = vld [vmem:[%s242 + $0x71] sm:$0xff]
      %267 = vrot.lane.b32.xlu0 %v234, 32
      %v268 = vpop.permute.xlu0 %267
      %269 = vrot.lane.b32.xlu0 %v235, 32
      %v270 = vpop.permute.xlu0 %269
      %271 = vrot.lane.b32.xlu0 %v236, 32
      %v272 = vpop.permute.xlu0 %271
      %273 = vrot.lane.b32.xlu0 %v237, 32
      %v274 = vpop.permute.xlu0 %273
      %275 = vrot.lane.b32.xlu0 %v238, 32
      %v276 = vpop.permute.xlu0 %275
      %277 = vrot.lane.b32.xlu0 %v239, 32
      %v278 = vpop.permute.xlu0 %277
      %279 = vrot.lane.b32.xlu0 %v240, 32
      %v280 = vpop.permute.xlu0 %279
      %281 = vrot.lane.b32.xlu0 %v241, 32
      %v282 = vpop.permute.xlu0 %281
      %299 = vrot.lane.b32.xlu0 %v243, 64
      %v300 = vpop.permute.xlu0 %299
      %301 = vrot.lane.b32.xlu0 %v244, 64
      %v302 = vpop.permute.xlu0 %301
      %303 = vrot.lane.b32.xlu0 %v245, 64
      %v304 = vpop.permute.xlu0 %303
      %305 = vrot.lane.b32.xlu0 %v246, 64
      %v306 = vpop.permute.xlu0 %305
      %307 = vrot.lane.b32.xlu0 %v247, 64
      %v308 = vpop.permute.xlu0 %307
      %309 = vrot.lane.b32.xlu0 %v248, 64
      %v310 = vpop.permute.xlu0 %309
      %311 = vrot.lane.b32.xlu0 %v249, 64
      %v312 = vpop.permute.xlu0 %311
      %313 = vrot.lane.b32.xlu0 %v250, 64
      %v314 = vpop.permute.xlu0 %313
      %331 = vrot.lane.b32.xlu0 %v251, 96
      %v332 = vpop.permute.xlu0 %331
      %333 = vrot.lane.b32.xlu0 %v252, 96
      %v334 = vpop.permute.xlu0 %333
      %335 = vrot.lane.b32.xlu0 %v253, 96
      %v336 = vpop.permute.xlu0 %335
      %337 = vrot.lane.b32.xlu0 %v254, 96
      %v338 = vpop.permute.xlu0 %337
      %339 = vrot.lane.b32.xlu0 %v255, 96
      %v340 = vpop.permute.xlu0 %339
      %341 = vrot.lane.b32.xlu0 %v256, 96
      %v342 = vpop.permute.xlu0 %341
      %343 = vrot.lane.b32.xlu0 %v257, 96
      %v344 = vpop.permute.xlu0 %343
      %345 = vrot.lane.b32.xlu0 %v258, 96
      %v346 = vpop.permute.xlu0 %345
      %vm355 = vcmask 261120
      %v356 = vsel %vm355, %v226, %v268
      %v357 = vsel %vm355, %v227, %v270
      %v358 = vsel %vm355, %v228, %v272
      %v359 = vsel %vm355, %v229, %v274
      %v360 = vsel %vm355, %v230, %v276
      %v361 = vsel %vm355, %v231, %v278
      %v362 = vsel %vm355, %v232, %v280
      %v363 = vsel %vm355, %v233, %v282
      %vm364 = vcmask 523264
      %v365 = vsel %vm364, %v356, %v300
      %v366 = vsel %vm364, %v357, %v302
      %v367 = vsel %vm364, %v358, %v304
      %v368 = vsel %vm364, %v359, %v306
      %v369 = vsel %vm364, %v360, %v308
      %v370 = vsel %vm364, %v361, %v310
      %v371 = vsel %vm364, %v362, %v312
      %v372 = vsel %vm364, %v363, %v314
      %vm373 = vcmask 785408
      %v374 = vsel %vm373, %v365, %v332
      %v375 = vsel %vm373, %v366, %v334
      %v376 = vsel %vm373, %v367, %v336
      %v377 = vsel %vm373, %v368, %v338
      %v378 = vsel %vm373, %v369, %v340
      %v379 = vsel %vm373, %v370, %v342
      %v380 = vsel %vm373, %v371, %v344
      %v381 = vsel %vm373, %v372, %v346
      %v382 = vpack.c.bf16 %v375, %v374
      %v383 = vpack.c.bf16 %v377, %v376
      %v384 = vpack.c.bf16 %v379, %v378
      %v385 = vpack.c.bf16 %v381, %v380
      %v386 = vld [vmem:[%s1] sm:$0xf]
      %v387 = vld [vmem:[%s1 + $0x4] sm:$0xf]
      %v388 = vld [vmem:[%s1 + $0x8] sm:$0xf]
      %v389 = vld [vmem:[%s1 + $0xc] sm:$0xf]
      %v390 = vld [vmem:[%s1 + $0x10] sm:$0xf]
      %v391 = vld [vmem:[%s1 + $0x14] sm:$0xf]
      %v392 = vld [vmem:[%s1 + $0x18] sm:$0xf]
      %v393 = vld [vmem:[%s1 + $0x1c] sm:$0xf]
      %v394 = vld [vmem:[%s1 + $0x20] sm:$0xf]
      %v395 = vld [vmem:[%s1 + $0x24] sm:$0xf]
      %v396 = vld [vmem:[%s1 + $0x28] sm:$0xf]
      %v397 = vld [vmem:[%s1 + $0x2c] sm:$0xf]
      %v398 = vld [vmem:[%s1 + $0x30] sm:$0xf]
      %v399 = vld [vmem:[%s1 + $0x34] sm:$0xf]
      %v400 = vld [vmem:[%s1 + $0x38] sm:$0xf]
      %v401 = vld [vmem:[%s1 + $0x3c] sm:$0xf]
      %v402 = vld [vmem:[%s2] sm:$0x1]
      %v404 = vlaneseq
      %v405 = vshrl.u32 %v404, 7
      %v406 = vsub.s32 0, %v405
      %v407 = vrot.slane %v402, %v406
      %v425 = vunpack.c.l.b16 %v386
      %v426 = vunpack.c.l.b16 %v387
      %v427 = vunpack.c.l.b16 %v388
      %v428 = vunpack.c.l.b16 %v389
      %v429 = vunpack.c.l.b16 %v390
      %v430 = vunpack.c.l.b16 %v391
      %v431 = vunpack.c.l.b16 %v392
      %v432 = vunpack.c.l.b16 %v393
      %v433 = vunpack.c.l.b16 %v394
      %v434 = vunpack.c.l.b16 %v395
      %v435 = vunpack.c.l.b16 %v396
      %v436 = vunpack.c.l.b16 %v397
      %v437 = vunpack.c.l.b16 %v398
      %v438 = vunpack.c.l.b16 %v399
      %v439 = vunpack.c.l.b16 %v400
      %v440 = vunpack.c.l.b16 %v401
      %v441 = vpack.c.b16 %v426, %v425
      %v442 = vpack.c.b16 %v428, %v427
      %v443 = vpack.c.b16 %v430, %v429
      %v444 = vpack.c.b16 %v432, %v431
      %v445 = vpack.c.b16 %v434, %v433
      %v446 = vpack.c.b16 %v436, %v435
      %v447 = vpack.c.b16 %v438, %v437
      %v448 = vpack.c.b16 %v440, %v439
      %457 = vmatprep.subr.bf16.mxu0 0
      %458 = vmatpush1.bf16.msra.mxu0 %v448
      %459 = vmatprep.subr.bf16.mxu0 0
      %460 = vmatpush1.bf16.msra.mxu0 %v447
      %461 = vmatprep.subr.bf16.mxu0 0
      %462 = vmatpush1.bf16.msra.mxu0 %v446
      %463 = vmatprep.subr.bf16.mxu0 0
      %464 = vmatpush1.bf16.msra.mxu0 %v445
      %465 = vmatprep.subr.bf16.mxu0 0
      %466 = vmatpush1.bf16.msra.mxu0 %v444
      %467 = vmatprep.subr.bf16.mxu0 0
      %468 = vmatpush1.bf16.msra.mxu0 %v443
      %469 = vmatprep.subr.bf16.mxu0 0
      %470 = vmatpush1.bf16.msra.mxu0 %v442
      %471 = vmatprep.subr.bf16.mxu0 0
      %472 = vmatpush1.bf16.msra.mxu0 %v441
      %473 = vmatprep.subr.bf16.mxu0 0
      %474 = vmatpush2.bf16.msra.mxu0 0
      %475 = vmatprep.subr.bf16.mxu0 0
      %476 = vmatpush2.bf16.msra.mxu0 0
      %477 = vmatprep.subr.bf16.mxu0 0
      %478 = vmatpush2.bf16.msra.mxu0 0
      %479 = vmatprep.subr.bf16.mxu0 0
      %480 = vmatpush2.bf16.msra.mxu0 0
      %481 = vmatprep.subr.bf16.mxu0 0
      %482 = vmatpush2.bf16.msra.mxu0 0
      %483 = vmatprep.subr.bf16.mxu0 0
      %484 = vmatpush2.bf16.msra.mxu0 0
      %485 = vmatprep.subr.bf16.mxu0 0
      %486 = vmatpush2.bf16.msra.mxu0 0
      %487 = vmatprep.subr.bf16.mxu0 0
      %488 = vmatpush2.bf16.msra.mxu0 0
      %489 = vmatprep.mubr.bf16.mxu0 0
      %490 = vmatmul.mubr.bf16.gmra.mxu0 %v382
      %v491 = vpop.f32.mrf.mxu0
      %v492 = vadd.f32 %v407, %v491
      %v493 = vpop.f32.mrf.mxu0
      %v494 = vpop.f32.mrf.mxu0
      %v495 = vadd.f32 %v407, %v494
      %v496 = vpop.f32.mrf.mxu0
      %497 = vmatprep.mubr.bf16.mxu0 0
      %498 = vmatmul.mubr.bf16.gmra.mxu0 %v383
      %v499 = vpop.f32.mrf.mxu0
      %v500 = vadd.f32 %v407, %v499
      %v501 = vpop.f32.mrf.mxu0
      %v502 = vpop.f32.mrf.mxu0
      %v503 = vadd.f32 %v407, %v502
      %v504 = vpop.f32.mrf.mxu0
      %505 = vmatprep.mubr.bf16.mxu0 0
      %506 = vmatmul.mubr.bf16.gmra.mxu0 %v384
      %v507 = vpop.f32.mrf.mxu0
      %v508 = vadd.f32 %v407, %v507
      %v509 = vpop.f32.mrf.mxu0
      %v510 = vpop.f32.mrf.mxu0
      %v511 = vadd.f32 %v407, %v510
      %v512 = vpop.f32.mrf.mxu0
      %513 = vmatprep.mubr.bf16.mxu0 0
      %514 = vmatmul.mubr.bf16.gmra.mxu0 %v385
      %v515 = vpop.f32.mrf.mxu0
      %v516 = vadd.f32 %v407, %v515
      %v517 = vpop.f32.mrf.mxu0
      %v518 = vpop.f32.mrf.mxu0
      %v519 = vadd.f32 %v407, %v518
      %v520 = vpop.f32.mrf.mxu0
      %521 = vdwg.mxu0
      %v522 = vld [vmem:[%s219 + $0x2] sm:$0xff]
      %v523 = vld [vmem:[%s219 + $0x12] sm:$0xff]
      %v524 = vld [vmem:[%s219 + $0x22] sm:$0xff]
      %v525 = vld [vmem:[%s219 + $0x32] sm:$0xff]
      %v526 = vld [vmem:[%s219 + $0x42] sm:$0xff]
      %v527 = vld [vmem:[%s219 + $0x52] sm:$0xff]
      %v528 = vld [vmem:[%s219 + $0x62] sm:$0xff]
      %v529 = vld [vmem:[%s219 + $0x72] sm:$0xff]
      %v530 = vld [vmem:[%s242 + $0x2] sm:$0xff]
      %v531 = vld [vmem:[%s242 + $0x12] sm:$0xff]
      %v532 = vld [vmem:[%s242 + $0x22] sm:$0xff]
      %v533 = vld [vmem:[%s242 + $0x32] sm:$0xff]
      %v534 = vld [vmem:[%s242 + $0x42] sm:$0xff]
      %v535 = vld [vmem:[%s242 + $0x52] sm:$0xff]
      %v536 = vld [vmem:[%s242 + $0x62] sm:$0xff]
      %v537 = vld [vmem:[%s242 + $0x72] sm:$0xff]
      %546 = vrot.lane.b32.xlu0 %v522, 32
      %v547 = vpop.permute.xlu0 %546
      %548 = vrot.lane.b32.xlu0 %v523, 32
      %v549 = vpop.permute.xlu0 %548
      %550 = vrot.lane.b32.xlu0 %v524, 32
      %v551 = vpop.permute.xlu0 %550
      %552 = vrot.lane.b32.xlu0 %v525, 32
      %v553 = vpop.permute.xlu0 %552
      %554 = vrot.lane.b32.xlu0 %v526, 32
      %v555 = vpop.permute.xlu0 %554
      %556 = vrot.lane.b32.xlu0 %v527, 32
      %v557 = vpop.permute.xlu0 %556
      %558 = vrot.lane.b32.xlu0 %v528, 32
      %v559 = vpop.permute.xlu0 %558
      %560 = vrot.lane.b32.xlu0 %v529, 32
      %v561 = vpop.permute.xlu0 %560
      %570 = vrot.lane.b32.xlu0 %v251, 64
      %v571 = vpop.permute.xlu0 %570
      %572 = vrot.lane.b32.xlu0 %v252, 64
      %v573 = vpop.permute.xlu0 %572
      %574 = vrot.lane.b32.xlu0 %v253, 64
      %v575 = vpop.permute.xlu0 %574
      %576 = vrot.lane.b32.xlu0 %v254, 64
      %v577 = vpop.permute.xlu0 %576
      %578 = vrot.lane.b32.xlu0 %v255, 64
      %v579 = vpop.permute.xlu0 %578
      %580 = vrot.lane.b32.xlu0 %v256, 64
      %v581 = vpop.permute.xlu0 %580
      %582 = vrot.lane.b32.xlu0 %v257, 64
      %v583 = vpop.permute.xlu0 %582
      %584 = vrot.lane.b32.xlu0 %v258, 64
      %v585 = vpop.permute.xlu0 %584
      %602 = vrot.lane.b32.xlu0 %v530, 96
      %v603 = vpop.permute.xlu0 %602
      %604 = vrot.lane.b32.xlu0 %v531, 96
      %v605 = vpop.permute.xlu0 %604
      %606 = vrot.lane.b32.xlu0 %v532, 96
      %v607 = vpop.permute.xlu0 %606
      %608 = vrot.lane.b32.xlu0 %v533, 96
      %v609 = vpop.permute.xlu0 %608
      %610 = vrot.lane.b32.xlu0 %v534, 96
      %v611 = vpop.permute.xlu0 %610
      %612 = vrot.lane.b32.xlu0 %v535, 96
      %v613 = vpop.permute.xlu0 %612
      %614 = vrot.lane.b32.xlu0 %v536, 96
      %v615 = vpop.permute.xlu0 %614
      %616 = vrot.lane.b32.xlu0 %v537, 96
      %v617 = vpop.permute.xlu0 %616
      %v626 = vsel %vm355, %v234, %v547
      %v627 = vsel %vm355, %v235, %v549
      %v628 = vsel %vm355, %v236, %v551
      %v629 = vsel %vm355, %v237, %v553
      %v630 = vsel %vm355, %v238, %v555
      %v631 = vsel %vm355, %v239, %v557
      %v632 = vsel %vm355, %v240, %v559
      %v633 = vsel %vm355, %v241, %v561
      %v634 = vsel %vm364, %v626, %v571
      %v635 = vsel %vm364, %v627, %v573
      %v636 = vsel %vm364, %v628, %v575
      %v637 = vsel %vm364, %v629, %v577
      %v638 = vsel %vm364, %v630, %v579
      %v639 = vsel %vm364, %v631, %v581
      %v640 = vsel %vm364, %v632, %v583
      %v641 = vsel %vm364, %v633, %v585
      %v642 = vsel %vm373, %v634, %v603
      %v643 = vsel %vm373, %v635, %v605
      %v644 = vsel %vm373, %v636, %v607
      %v645 = vsel %vm373, %v637, %v609
      %v646 = vsel %vm373, %v638, %v611
      %v647 = vsel %vm373, %v639, %v613
      %v648 = vsel %vm373, %v640, %v615
      %v649 = vsel %vm373, %v641, %v617
      %v650 = vpack.c.bf16 %v643, %v642
      %v651 = vpack.c.bf16 %v645, %v644
      %v652 = vpack.c.bf16 %v647, %v646
      %v653 = vpack.c.bf16 %v649, %v648
      %s654 = scalar_lea.vmem %s1, 64
      %v655 = vld [vmem:[%s654] sm:$0xf]
      %v656 = vld [vmem:[%s654 + $0x4] sm:$0xf]
      %v657 = vld [vmem:[%s654 + $0x8] sm:$0xf]
      %v658 = vld [vmem:[%s654 + $0xc] sm:$0xf]
      %v659 = vld [vmem:[%s654 + $0x10] sm:$0xf]
      %v660 = vld [vmem:[%s654 + $0x14] sm:$0xf]
      %v661 = vld [vmem:[%s654 + $0x18] sm:$0xf]
      %v662 = vld [vmem:[%s654 + $0x1c] sm:$0xf]
      %v663 = vld [vmem:[%s654 + $0x20] sm:$0xf]
      %v664 = vld [vmem:[%s654 + $0x24] sm:$0xf]
      %v665 = vld [vmem:[%s654 + $0x28] sm:$0xf]
      %v666 = vld [vmem:[%s654 + $0x2c] sm:$0xf]
      %v667 = vld [vmem:[%s654 + $0x30] sm:$0xf]
      %v668 = vld [vmem:[%s654 + $0x34] sm:$0xf]
      %v669 = vld [vmem:[%s654 + $0x38] sm:$0xf]
      %v670 = vld [vmem:[%s654 + $0x3c] sm:$0xf]
      %v687 = vunpack.c.l.b16 %v655
      %v688 = vunpack.c.l.b16 %v656
      %v689 = vunpack.c.l.b16 %v657
      %v690 = vunpack.c.l.b16 %v658
      %v691 = vunpack.c.l.b16 %v659
      %v692 = vunpack.c.l.b16 %v660
      %v693 = vunpack.c.l.b16 %v661
      %v694 = vunpack.c.l.b16 %v662
      %v695 = vunpack.c.l.b16 %v663
      %v696 = vunpack.c.l.b16 %v664
      %v697 = vunpack.c.l.b16 %v665
      %v698 = vunpack.c.l.b16 %v666
      %v699 = vunpack.c.l.b16 %v667
      %v700 = vunpack.c.l.b16 %v668
      %v701 = vunpack.c.l.b16 %v669
      %v702 = vunpack.c.l.b16 %v670
      %v703 = vpack.c.b16 %v688, %v687
      %v704 = vpack.c.b16 %v690, %v689
      %v705 = vpack.c.b16 %v692, %v691
      %v706 = vpack.c.b16 %v694, %v693
      %v707 = vpack.c.b16 %v696, %v695
      %v708 = vpack.c.b16 %v698, %v697
      %v709 = vpack.c.b16 %v700, %v699
      %v710 = vpack.c.b16 %v702, %v701
      %719 = vmatprep.subr.bf16.mxu0 0
      %720 = vmatpush1.bf16.msra.mxu0 %v710
      %721 = vmatprep.subr.bf16.mxu0 0
      %722 = vmatpush1.bf16.msra.mxu0 %v709
      %723 = vmatprep.subr.bf16.mxu0 0
      %724 = vmatpush1.bf16.msra.mxu0 %v708
      %725 = vmatprep.subr.bf16.mxu0 0
      %726 = vmatpush1.bf16.msra.mxu0 %v707
      %727 = vmatprep.subr.bf16.mxu0 0
      %728 = vmatpush1.bf16.msra.mxu0 %v706
      %729 = vmatprep.subr.bf16.mxu0 0
      %730 = vmatpush1.bf16.msra.mxu0 %v705
      %731 = vmatprep.subr.bf16.mxu0 0
      %732 = vmatpush1.bf16.msra.mxu0 %v704
      %733 = vmatprep.subr.bf16.mxu0 0
      %734 = vmatpush1.bf16.msra.mxu0 %v703
      %735 = vmatprep.subr.bf16.mxu0 0
      %736 = vmatpush2.bf16.msra.mxu0 0
      %737 = vmatprep.subr.bf16.mxu0 0
      %738 = vmatpush2.bf16.msra.mxu0 0
      %739 = vmatprep.subr.bf16.mxu0 0
      %740 = vmatpush2.bf16.msra.mxu0 0
      %741 = vmatprep.subr.bf16.mxu0 0
      %742 = vmatpush2.bf16.msra.mxu0 0
      %743 = vmatprep.subr.bf16.mxu0 0
      %744 = vmatpush2.bf16.msra.mxu0 0
      %745 = vmatprep.subr.bf16.mxu0 0
      %746 = vmatpush2.bf16.msra.mxu0 0
      %747 = vmatprep.subr.bf16.mxu0 0
      %748 = vmatpush2.bf16.msra.mxu0 0
      %749 = vmatprep.subr.bf16.mxu0 0
      %750 = vmatpush2.bf16.msra.mxu0 0
      %751 = vmatprep.mubr.bf16.mxu0 0
      %752 = vmatmul.mubr.bf16.gmra.mxu0 %v650
      %v753 = vpop.f32.mrf.mxu0
      %v754 = vadd.f32 %v407, %v753
      %v755 = vpop.f32.mrf.mxu0
      %v756 = vpop.f32.mrf.mxu0
      %v757 = vadd.f32 %v407, %v756
      %v758 = vpop.f32.mrf.mxu0
      %759 = vmatprep.mubr.bf16.mxu0 0
      %760 = vmatmul.mubr.bf16.gmra.mxu0 %v651
      %v761 = vpop.f32.mrf.mxu0
      %v762 = vadd.f32 %v407, %v761
      %v763 = vpop.f32.mrf.mxu0
      %v764 = vpop.f32.mrf.mxu0
      %v765 = vadd.f32 %v407, %v764
      %v766 = vpop.f32.mrf.mxu0
      %767 = vmatprep.mubr.bf16.mxu0 0
      %768 = vmatmul.mubr.bf16.gmra.mxu0 %v652
      %v769 = vpop.f32.mrf.mxu0
      %v770 = vadd.f32 %v407, %v769
      %v771 = vpop.f32.mrf.mxu0
      %v772 = vpop.f32.mrf.mxu0
      %v773 = vadd.f32 %v407, %v772
      %v774 = vpop.f32.mrf.mxu0
      %775 = vmatprep.mubr.bf16.mxu0 0
      %776 = vmatmul.mubr.bf16.gmra.mxu0 %v653
      %v777 = vpop.f32.mrf.mxu0
      %v778 = vadd.f32 %v407, %v777
      %v779 = vpop.f32.mrf.mxu0
      %v780 = vpop.f32.mrf.mxu0
      %v781 = vadd.f32 %v407, %v780
      %v782 = vpop.f32.mrf.mxu0
      %783 = vdwg.mxu0
      %s784 = scalar_lea.vmem %s219, 32
      %v785 = vld [vmem:[%s784] sm:$0xff]
      %v786 = vld [vmem:[%s784 + $0x10] sm:$0xff]
      %v787 = vld [vmem:[%s784 + $0x20] sm:$0xff]
      %v788 = vld [vmem:[%s784 + $0x30] sm:$0xff]
      %v789 = vld [vmem:[%s784 + $0x40] sm:$0xff]
      %v790 = vld [vmem:[%s784 + $0x50] sm:$0xff]
      %v791 = vld [vmem:[%s784 + $0x60] sm:$0xff]
      %v792 = vld [vmem:[%s784 + $0x70] sm:$0xff]
      %v793 = vld [vmem:[%s784 + $0x1] sm:$0xff]
      %v794 = vld [vmem:[%s784 + $0x11] sm:$0xff]
      %v795 = vld [vmem:[%s784 + $0x21] sm:$0xff]
      %v796 = vld [vmem:[%s784 + $0x31] sm:$0xff]
      %v797 = vld [vmem:[%s784 + $0x41] sm:$0xff]
      %v798 = vld [vmem:[%s784 + $0x51] sm:$0xff]
      %v799 = vld [vmem:[%s784 + $0x61] sm:$0xff]
      %v800 = vld [vmem:[%s784 + $0x71] sm:$0xff]
      %801 = vrot.lane.b32.xlu0 %v251, 32
      %v802 = vpop.permute.xlu0 %801
      %803 = vrot.lane.b32.xlu0 %v252, 32
      %v804 = vpop.permute.xlu0 %803
      %805 = vrot.lane.b32.xlu0 %v253, 32
      %v806 = vpop.permute.xlu0 %805
      %807 = vrot.lane.b32.xlu0 %v254, 32
      %v808 = vpop.permute.xlu0 %807
      %809 = vrot.lane.b32.xlu0 %v255, 32
      %v810 = vpop.permute.xlu0 %809
      %811 = vrot.lane.b32.xlu0 %v256, 32
      %v812 = vpop.permute.xlu0 %811
      %813 = vrot.lane.b32.xlu0 %v257, 32
      %v814 = vpop.permute.xlu0 %813
      %815 = vrot.lane.b32.xlu0 %v258, 32
      %v816 = vpop.permute.xlu0 %815
      %833 = vrot.lane.b32.xlu0 %v785, 64
      %v834 = vpop.permute.xlu0 %833
      %835 = vrot.lane.b32.xlu0 %v786, 64
      %v836 = vpop.permute.xlu0 %835
      %837 = vrot.lane.b32.xlu0 %v787, 64
      %v838 = vpop.permute.xlu0 %837
      %839 = vrot.lane.b32.xlu0 %v788, 64
      %v840 = vpop.permute.xlu0 %839
      %841 = vrot.lane.b32.xlu0 %v789, 64
      %v842 = vpop.permute.xlu0 %841
      %843 = vrot.lane.b32.xlu0 %v790, 64
      %v844 = vpop.permute.xlu0 %843
      %845 = vrot.lane.b32.xlu0 %v791, 64
      %v846 = vpop.permute.xlu0 %845
      %847 = vrot.lane.b32.xlu0 %v792, 64
      %v848 = vpop.permute.xlu0 %847
      %865 = vrot.lane.b32.xlu0 %v793, 96
      %v866 = vpop.permute.xlu0 %865
      %867 = vrot.lane.b32.xlu0 %v794, 96
      %v868 = vpop.permute.xlu0 %867
      %869 = vrot.lane.b32.xlu0 %v795, 96
      %v870 = vpop.permute.xlu0 %869
      %871 = vrot.lane.b32.xlu0 %v796, 96
      %v872 = vpop.permute.xlu0 %871
      %873 = vrot.lane.b32.xlu0 %v797, 96
      %v874 = vpop.permute.xlu0 %873
      %875 = vrot.lane.b32.xlu0 %v798, 96
      %v876 = vpop.permute.xlu0 %875
      %877 = vrot.lane.b32.xlu0 %v799, 96
      %v878 = vpop.permute.xlu0 %877
      %879 = vrot.lane.b32.xlu0 %v800, 96
      %v880 = vpop.permute.xlu0 %879
      %v889 = vsel %vm355, %v243, %v802
      %v890 = vsel %vm355, %v244, %v804
      %v891 = vsel %vm355, %v245, %v806
      %v892 = vsel %vm355, %v246, %v808
      %v893 = vsel %vm355, %v247, %v810
      %v894 = vsel %vm355, %v248, %v812
      %v895 = vsel %vm355, %v249, %v814
      %v896 = vsel %vm355, %v250, %v816
      %v897 = vsel %vm364, %v889, %v834
      %v898 = vsel %vm364, %v890, %v836
      %v899 = vsel %vm364, %v891, %v838
      %v900 = vsel %vm364, %v892, %v840
      %v901 = vsel %vm364, %v893, %v842
      %v902 = vsel %vm364, %v894, %v844
      %v903 = vsel %vm364, %v895, %v846
      %v904 = vsel %vm364, %v896, %v848
      %v905 = vsel %vm373, %v897, %v866
      %v906 = vsel %vm373, %v898, %v868
      %v907 = vsel %vm373, %v899, %v870
      %v908 = vsel %vm373, %v900, %v872
      %v909 = vsel %vm373, %v901, %v874
      %v910 = vsel %vm373, %v902, %v876
      %v911 = vsel %vm373, %v903, %v878
      %v912 = vsel %vm373, %v904, %v880
      %v913 = vpack.c.bf16 %v906, %v905
      %v914 = vpack.c.bf16 %v908, %v907
      %v915 = vpack.c.bf16 %v910, %v909
      %v916 = vpack.c.bf16 %v912, %v911
      %s917 = scalar_lea.vmem %s1, 128
      %v918 = vld [vmem:[%s917] sm:$0xf]
      %v919 = vld [vmem:[%s917 + $0x4] sm:$0xf]
      %v920 = vld [vmem:[%s917 + $0x8] sm:$0xf]
      %v921 = vld [vmem:[%s917 + $0xc] sm:$0xf]
      %v922 = vld [vmem:[%s917 + $0x10] sm:$0xf]
      %v923 = vld [vmem:[%s917 + $0x14] sm:$0xf]
      %v924 = vld [vmem:[%s917 + $0x18] sm:$0xf]
      %v925 = vld [vmem:[%s917 + $0x1c] sm:$0xf]
      %v926 = vld [vmem:[%s917 + $0x20] sm:$0xf]
      %v927 = vld [vmem:[%s917 + $0x24] sm:$0xf]
      %v928 = vld [vmem:[%s917 + $0x28] sm:$0xf]
      %v929 = vld [vmem:[%s917 + $0x2c] sm:$0xf]
      %v930 = vld [vmem:[%s917 + $0x30] sm:$0xf]
      %v931 = vld [vmem:[%s917 + $0x34] sm:$0xf]
      %v932 = vld [vmem:[%s917 + $0x38] sm:$0xf]
      %v933 = vld [vmem:[%s917 + $0x3c] sm:$0xf]
      %v950 = vunpack.c.l.b16 %v918
      %v951 = vunpack.c.l.b16 %v919
      %v952 = vunpack.c.l.b16 %v920
      %v953 = vunpack.c.l.b16 %v921
      %v954 = vunpack.c.l.b16 %v922
      %v955 = vunpack.c.l.b16 %v923
      %v956 = vunpack.c.l.b16 %v924
      %v957 = vunpack.c.l.b16 %v925
      %v958 = vunpack.c.l.b16 %v926
      %v959 = vunpack.c.l.b16 %v927
      %v960 = vunpack.c.l.b16 %v928
      %v961 = vunpack.c.l.b16 %v929
      %v962 = vunpack.c.l.b16 %v930
      %v963 = vunpack.c.l.b16 %v931
      %v964 = vunpack.c.l.b16 %v932
      %v965 = vunpack.c.l.b16 %v933
      %v966 = vpack.c.b16 %v951, %v950
      %v967 = vpack.c.b16 %v953, %v952
      %v968 = vpack.c.b16 %v955, %v954
      %v969 = vpack.c.b16 %v957, %v956
      %v970 = vpack.c.b16 %v959, %v958
      %v971 = vpack.c.b16 %v961, %v960
      %v972 = vpack.c.b16 %v963, %v962
      %v973 = vpack.c.b16 %v965, %v964
      %982 = vmatprep.subr.bf16.mxu0 0
      %983 = vmatpush1.bf16.msra.mxu0 %v973
      %984 = vmatprep.subr.bf16.mxu0 0
      %985 = vmatpush1.bf16.msra.mxu0 %v972
      %986 = vmatprep.subr.bf16.mxu0 0
      %987 = vmatpush1.bf16.msra.mxu0 %v971
      %988 = vmatprep.subr.bf16.mxu0 0
      %989 = vmatpush1.bf16.msra.mxu0 %v970
      %990 = vmatprep.subr.bf16.mxu0 0
      %991 = vmatpush1.bf16.msra.mxu0 %v969
      %992 = vmatprep.subr.bf16.mxu0 0
      %993 = vmatpush1.bf16.msra.mxu0 %v968
      %994 = vmatprep.subr.bf16.mxu0 0
      %995 = vmatpush1.bf16.msra.mxu0 %v967
      %996 = vmatprep.subr.bf16.mxu0 0
      %997 = vmatpush1.bf16.msra.mxu0 %v966
      %998 = vmatprep.subr.bf16.mxu0 0
      %999 = vmatpush2.bf16.msra.mxu0 0
      %1000 = vmatprep.subr.bf16.mxu0 0
      %1001 = vmatpush2.bf16.msra.mxu0 0
      %1002 = vmatprep.subr.bf16.mxu0 0
      %1003 = vmatpush2.bf16.msra.mxu0 0
      %1004 = vmatprep.subr.bf16.mxu0 0
      %1005 = vmatpush2.bf16.msra.mxu0 0
      %1006 = vmatprep.subr.bf16.mxu0 0
      %1007 = vmatpush2.bf16.msra.mxu0 0
      %1008 = vmatprep.subr.bf16.mxu0 0
      %1009 = vmatpush2.bf16.msra.mxu0 0
      %1010 = vmatprep.subr.bf16.mxu0 0
      %1011 = vmatpush2.bf16.msra.mxu0 0
      %1012 = vmatprep.subr.bf16.mxu0 0
      %1013 = vmatpush2.bf16.msra.mxu0 0
      %1014 = vmatprep.mubr.bf16.mxu0 0
      %1015 = vmatmul.mubr.bf16.gmra.mxu0 %v913
      %v1016 = vpop.f32.mrf.mxu0
      %v1017 = vadd.f32 %v407, %v1016
      %v1018 = vpop.f32.mrf.mxu0
      %v1019 = vpop.f32.mrf.mxu0
      %v1020 = vadd.f32 %v407, %v1019
      %v1021 = vpop.f32.mrf.mxu0
      %1022 = vmatprep.mubr.bf16.mxu0 0
      %1023 = vmatmul.mubr.bf16.gmra.mxu0 %v914
      %v1024 = vpop.f32.mrf.mxu0
      %v1025 = vadd.f32 %v407, %v1024
      %v1026 = vpop.f32.mrf.mxu0
      %v1027 = vpop.f32.mrf.mxu0
      %v1028 = vadd.f32 %v407, %v1027
      %v1029 = vpop.f32.mrf.mxu0
      %1030 = vmatprep.mubr.bf16.mxu0 0
      %1031 = vmatmul.mubr.bf16.gmra.mxu0 %v915
      %v1032 = vpop.f32.mrf.mxu0
      %v1033 = vadd.f32 %v407, %v1032
      %v1034 = vpop.f32.mrf.mxu0
      %v1035 = vpop.f32.mrf.mxu0
      %v1036 = vadd.f32 %v407, %v1035
      %v1037 = vpop.f32.mrf.mxu0
      %1038 = vmatprep.mubr.bf16.mxu0 0
      %1039 = vmatmul.mubr.bf16.gmra.mxu0 %v916
      %v1040 = vpop.f32.mrf.mxu0
      %v1041 = vadd.f32 %v407, %v1040
      %v1042 = vpop.f32.mrf.mxu0
      %v1043 = vpop.f32.mrf.mxu0
      %v1044 = vadd.f32 %v407, %v1043
      %v1045 = vpop.f32.mrf.mxu0
      %1046 = vdwg.mxu0
      %v1047 = vld [vmem:[%s784 + $0x2] sm:$0xff]
      %v1048 = vld [vmem:[%s784 + $0x12] sm:$0xff]
      %v1049 = vld [vmem:[%s784 + $0x22] sm:$0xff]
      %v1050 = vld [vmem:[%s784 + $0x32] sm:$0xff]
      %v1051 = vld [vmem:[%s784 + $0x42] sm:$0xff]
      %v1052 = vld [vmem:[%s784 + $0x52] sm:$0xff]
      %v1053 = vld [vmem:[%s784 + $0x62] sm:$0xff]
      %v1054 = vld [vmem:[%s784 + $0x72] sm:$0xff]
      %1055 = vrot.lane.b32.xlu0 %v530, 32
      %v1056 = vpop.permute.xlu0 %1055
      %1057 = vrot.lane.b32.xlu0 %v531, 32
      %v1058 = vpop.permute.xlu0 %1057
      %1059 = vrot.lane.b32.xlu0 %v532, 32
      %v1060 = vpop.permute.xlu0 %1059
      %1061 = vrot.lane.b32.xlu0 %v533, 32
      %v1062 = vpop.permute.xlu0 %1061
      %1063 = vrot.lane.b32.xlu0 %v534, 32
      %v1064 = vpop.permute.xlu0 %1063
      %1065 = vrot.lane.b32.xlu0 %v535, 32
      %v1066 = vpop.permute.xlu0 %1065
      %1067 = vrot.lane.b32.xlu0 %v536, 32
      %v1068 = vpop.permute.xlu0 %1067
      %1069 = vrot.lane.b32.xlu0 %v537, 32
      %v1070 = vpop.permute.xlu0 %1069
      %1079 = vrot.lane.b32.xlu0 %v793, 64
      %v1080 = vpop.permute.xlu0 %1079
      %1081 = vrot.lane.b32.xlu0 %v794, 64
      %v1082 = vpop.permute.xlu0 %1081
      %1083 = vrot.lane.b32.xlu0 %v795, 64
      %v1084 = vpop.permute.xlu0 %1083
      %1085 = vrot.lane.b32.xlu0 %v796, 64
      %v1086 = vpop.permute.xlu0 %1085
      %1087 = vrot.lane.b32.xlu0 %v797, 64
      %v1088 = vpop.permute.xlu0 %1087
      %1089 = vrot.lane.b32.xlu0 %v798, 64
      %v1090 = vpop.permute.xlu0 %1089
      %1091 = vrot.lane.b32.xlu0 %v799, 64
      %v1092 = vpop.permute.xlu0 %1091
      %1093 = vrot.lane.b32.xlu0 %v800, 64
      %v1094 = vpop.permute.xlu0 %1093
      %1111 = vrot.lane.b32.xlu0 %v1047, 96
      %v1112 = vpop.permute.xlu0 %1111
      %1113 = vrot.lane.b32.xlu0 %v1048, 96
      %v1114 = vpop.permute.xlu0 %1113
      %1115 = vrot.lane.b32.xlu0 %v1049, 96
      %v1116 = vpop.permute.xlu0 %1115
      %1117 = vrot.lane.b32.xlu0 %v1050, 96
      %v1118 = vpop.permute.xlu0 %1117
      %1119 = vrot.lane.b32.xlu0 %v1051, 96
      %v1120 = vpop.permute.xlu0 %1119
      %1121 = vrot.lane.b32.xlu0 %v1052, 96
      %v1122 = vpop.permute.xlu0 %1121
      %1123 = vrot.lane.b32.xlu0 %v1053, 96
      %v1124 = vpop.permute.xlu0 %1123
      %1125 = vrot.lane.b32.xlu0 %v1054, 96
      %v1126 = vpop.permute.xlu0 %1125
      %v1135 = vsel %vm355, %v251, %v1056
      %v1136 = vsel %vm355, %v252, %v1058
      %v1137 = vsel %vm355, %v253, %v1060
      %v1138 = vsel %vm355, %v254, %v1062
      %v1139 = vsel %vm355, %v255, %v1064
      %v1140 = vsel %vm355, %v256, %v1066
      %v1141 = vsel %vm355, %v257, %v1068
      %v1142 = vsel %vm355, %v258, %v1070
      %v1143 = vsel %vm364, %v1135, %v1080
      %v1144 = vsel %vm364, %v1136, %v1082
      %v1145 = vsel %vm364, %v1137, %v1084
      %v1146 = vsel %vm364, %v1138, %v1086
      %v1147 = vsel %vm364, %v1139, %v1088
      %v1148 = vsel %vm364, %v1140, %v1090
      %v1149 = vsel %vm364, %v1141, %v1092
      %v1150 = vsel %vm364, %v1142, %v1094
      %v1151 = vsel %vm373, %v1143, %v1112
      %v1152 = vsel %vm373, %v1144, %v1114
      %v1153 = vsel %vm373, %v1145, %v1116
      %v1154 = vsel %vm373, %v1146, %v1118
      %v1155 = vsel %vm373, %v1147, %v1120
      %v1156 = vsel %vm373, %v1148, %v1122
      %v1157 = vsel %vm373, %v1149, %v1124
      %v1158 = vsel %vm373, %v1150, %v1126
      %v1159 = vpack.c.bf16 %v1152, %v1151
      %v1160 = vpack.c.bf16 %v1154, %v1153
      %v1161 = vpack.c.bf16 %v1156, %v1155
      %v1162 = vpack.c.bf16 %v1158, %v1157
      %s1163 = scalar_lea.vmem %s1, 192
      %v1164 = vld [vmem:[%s1163] sm:$0xf]
      %v1165 = vld [vmem:[%s1163 + $0x4] sm:$0xf]
      %v1166 = vld [vmem:[%s1163 + $0x8] sm:$0xf]
      %v1167 = vld [vmem:[%s1163 + $0xc] sm:$0xf]
      %v1168 = vld [vmem:[%s1163 + $0x10] sm:$0xf]
      %v1169 = vld [vmem:[%s1163 + $0x14] sm:$0xf]
      %v1170 = vld [vmem:[%s1163 + $0x18] sm:$0xf]
      %v1171 = vld [vmem:[%s1163 + $0x1c] sm:$0xf]
      %v1172 = vld [vmem:[%s1163 + $0x20] sm:$0xf]
      %v1173 = vld [vmem:[%s1163 + $0x24] sm:$0xf]
      %v1174 = vld [vmem:[%s1163 + $0x28] sm:$0xf]
      %v1175 = vld [vmem:[%s1163 + $0x2c] sm:$0xf]
      %v1176 = vld [vmem:[%s1163 + $0x30] sm:$0xf]
      %v1177 = vld [vmem:[%s1163 + $0x34] sm:$0xf]
      %v1178 = vld [vmem:[%s1163 + $0x38] sm:$0xf]
      %v1179 = vld [vmem:[%s1163 + $0x3c] sm:$0xf]
      %v1196 = vunpack.c.l.b16 %v1164
      %v1197 = vunpack.c.l.b16 %v1165
      %v1198 = vunpack.c.l.b16 %v1166
      %v1199 = vunpack.c.l.b16 %v1167
      %v1200 = vunpack.c.l.b16 %v1168
      %v1201 = vunpack.c.l.b16 %v1169
      %v1202 = vunpack.c.l.b16 %v1170
      %v1203 = vunpack.c.l.b16 %v1171
      %v1204 = vunpack.c.l.b16 %v1172
      %v1205 = vunpack.c.l.b16 %v1173
      %v1206 = vunpack.c.l.b16 %v1174
      %v1207 = vunpack.c.l.b16 %v1175
      %v1208 = vunpack.c.l.b16 %v1176
      %v1209 = vunpack.c.l.b16 %v1177
      %v1210 = vunpack.c.l.b16 %v1178
      %v1211 = vunpack.c.l.b16 %v1179
      %v1212 = vpack.c.b16 %v1197, %v1196
      %v1213 = vpack.c.b16 %v1199, %v1198
      %v1214 = vpack.c.b16 %v1201, %v1200
      %v1215 = vpack.c.b16 %v1203, %v1202
      %v1216 = vpack.c.b16 %v1205, %v1204
      %v1217 = vpack.c.b16 %v1207, %v1206
      %v1218 = vpack.c.b16 %v1209, %v1208
      %v1219 = vpack.c.b16 %v1211, %v1210
      %1228 = vmatprep.subr.bf16.mxu0 0
      %1229 = vmatpush1.bf16.msra.mxu0 %v1219
      %1230 = vmatprep.subr.bf16.mxu0 0
      %1231 = vmatpush1.bf16.msra.mxu0 %v1218
      %1232 = vmatprep.subr.bf16.mxu0 0
      %1233 = vmatpush1.bf16.msra.mxu0 %v1217
      %1234 = vmatprep.subr.bf16.mxu0 0
      %1235 = vmatpush1.bf16.msra.mxu0 %v1216
      %1236 = vmatprep.subr.bf16.mxu0 0
      %1237 = vmatpush1.bf16.msra.mxu0 %v1215
      %1238 = vmatprep.subr.bf16.mxu0 0
      %1239 = vmatpush1.bf16.msra.mxu0 %v1214
      %1240 = vmatprep.subr.bf16.mxu0 0
      %1241 = vmatpush1.bf16.msra.mxu0 %v1213
      %1242 = vmatprep.subr.bf16.mxu0 0
      %1243 = vmatpush1.bf16.msra.mxu0 %v1212
      %1244 = vmatprep.subr.bf16.mxu0 0
      %1245 = vmatpush2.bf16.msra.mxu0 0
      %1246 = vmatprep.subr.bf16.mxu0 0
      %1247 = vmatpush2.bf16.msra.mxu0 0
      %1248 = vmatprep.subr.bf16.mxu0 0
      %1249 = vmatpush2.bf16.msra.mxu0 0
      %1250 = vmatprep.subr.bf16.mxu0 0
      %1251 = vmatpush2.bf16.msra.mxu0 0
      %1252 = vmatprep.subr.bf16.mxu0 0
      %1253 = vmatpush2.bf16.msra.mxu0 0
      %1254 = vmatprep.subr.bf16.mxu0 0
      %1255 = vmatpush2.bf16.msra.mxu0 0
      %1256 = vmatprep.subr.bf16.mxu0 0
      %1257 = vmatpush2.bf16.msra.mxu0 0
      %1258 = vmatprep.subr.bf16.mxu0 0
      %1259 = vmatpush2.bf16.msra.mxu0 0
      %1260 = vmatprep.mubr.bf16.mxu0 0
      %1261 = vmatmul.mubr.bf16.gmra.mxu0 %v1159
      %v1262 = vpop.f32.mrf.mxu0
      %v1263 = vadd.f32 %v407, %v1262
      %v1264 = vpop.f32.mrf.mxu0
      %v1265 = vpop.f32.mrf.mxu0
      %v1266 = vadd.f32 %v407, %v1265
      %v1267 = vpop.f32.mrf.mxu0
      %1268 = vmatprep.mubr.bf16.mxu0 0
      %1269 = vmatmul.mubr.bf16.gmra.mxu0 %v1160
      %v1270 = vpop.f32.mrf.mxu0
      %v1271 = vadd.f32 %v407, %v1270
      %v1272 = vpop.f32.mrf.mxu0
      %v1273 = vpop.f32.mrf.mxu0
      %v1274 = vadd.f32 %v407, %v1273
      %v1275 = vpop.f32.mrf.mxu0
      %1276 = vmatprep.mubr.bf16.mxu0 0
      %1277 = vmatmul.mubr.bf16.gmra.mxu0 %v1161
      %v1278 = vpop.f32.mrf.mxu0
      %v1279 = vadd.f32 %v407, %v1278
      %v1280 = vpop.f32.mrf.mxu0
      %v1281 = vpop.f32.mrf.mxu0
      %v1282 = vadd.f32 %v407, %v1281
      %v1283 = vpop.f32.mrf.mxu0
      %1284 = vmatprep.mubr.bf16.mxu0 0
      %1285 = vmatmul.mubr.bf16.gmra.mxu0 %v1162
      %v1286 = vpop.f32.mrf.mxu0
      %v1287 = vadd.f32 %v407, %v1286
      %v1288 = vpop.f32.mrf.mxu0
      %v1289 = vpop.f32.mrf.mxu0
      %v1290 = vadd.f32 %v407, %v1289
      %v1291 = vpop.f32.mrf.mxu0
      %1292 = vdwg.mxu0
      %v1293 = vsel %vm355, %v492, 0.0
      %v1294 = vsel %vm355, %v495, 0.0
      %v1295 = vadd.f32 %v1293, %v1294
      %v1296 = vsel %vm355, %v500, 0.0
      %v1297 = vadd.f32 %v1295, %v1296
      %v1298 = vsel %vm355, %v503, 0.0
      %v1299 = vadd.f32 %v1297, %v1298
      %v1300 = vsel %vm355, %v508, 0.0
      %v1301 = vadd.f32 %v1299, %v1300
      %v1302 = vsel %vm355, %v511, 0.0
      %v1303 = vadd.f32 %v1301, %v1302
      %v1304 = vsel %vm355, %v516, 0.0
      %v1305 = vadd.f32 %v1303, %v1304
      %v1306 = vsel %vm355, %v519, 0.0
      %v1307 = vadd.f32 %v1305, %v1306
      %v1308 = vrot.slane %v1307, 4
      %v1309 = vadd.f32 %v1307, %v1308
      %v1310 = vrot.slane %v1309, 2
      %v1311 = vadd.f32 %v1309, %v1310
      %v1312 = vrot.slane %v1311, 1
      %v1313 = vadd.f32 %v1311, %v1312
      %v1314 = vmul.f32 %v492, %v492
      %v1315 = vmul.f32 %v495, %v495
      %v1316 = vmul.f32 %v500, %v500
      %v1317 = vmul.f32 %v503, %v503
      %v1318 = vmul.f32 %v508, %v508
      %v1319 = vmul.f32 %v511, %v511
      %v1320 = vmul.f32 %v516, %v516
      %v1321 = vmul.f32 %v519, %v519
      %v1322 = vsel %vm355, %v1314, 0.0
      %v1323 = vsel %vm355, %v1315, 0.0
      %v1324 = vadd.f32 %v1322, %v1323
      %v1325 = vsel %vm355, %v1316, 0.0
      %v1326 = vadd.f32 %v1324, %v1325
      %v1327 = vsel %vm355, %v1317, 0.0
      %v1328 = vadd.f32 %v1326, %v1327
      %v1329 = vsel %vm355, %v1318, 0.0
      %v1330 = vadd.f32 %v1328, %v1329
      %v1331 = vsel %vm355, %v1319, 0.0
      %v1332 = vadd.f32 %v1330, %v1331
      %v1333 = vsel %vm355, %v1320, 0.0
      %v1334 = vadd.f32 %v1332, %v1333
      %v1335 = vsel %vm355, %v1321, 0.0
      %v1336 = vadd.f32 %v1334, %v1335
      %v1337 = vrot.slane %v1336, 4
      %v1338 = vadd.f32 %v1336, %v1337
      %v1339 = vrot.slane %v1338, 2
      %v1340 = vadd.f32 %v1338, %v1339
      %v1341 = vrot.slane %v1340, 1
      %v1342 = vadd.f32 %v1340, %v1341
      %v1343 = vsel %vm355, %v754, 0.0
      %v1344 = vsel %vm355, %v757, 0.0
      %v1345 = vadd.f32 %v1343, %v1344
      %v1346 = vsel %vm355, %v762, 0.0
      %v1347 = vadd.f32 %v1345, %v1346
      %v1348 = vsel %vm355, %v765, 0.0
      %v1349 = vadd.f32 %v1347, %v1348
      %v1350 = vsel %vm355, %v770, 0.0
      %v1351 = vadd.f32 %v1349, %v1350
      %v1352 = vsel %vm355, %v773, 0.0
      %v1353 = vadd.f32 %v1351, %v1352
      %v1354 = vsel %vm355, %v778, 0.0
      %v1355 = vadd.f32 %v1353, %v1354
      %v1356 = vsel %vm355, %v781, 0.0
      %v1357 = vadd.f32 %v1355, %v1356
      %v1358 = vrot.slane %v1357, 4
      %v1359 = vadd.f32 %v1357, %v1358
      %v1360 = vrot.slane %v1359, 2
      %v1361 = vadd.f32 %v1359, %v1360
      %v1362 = vrot.slane %v1361, 1
      %v1363 = vadd.f32 %v1361, %v1362
      %v1364 = vadd.f32 %v1313, %v1363
      %v1365 = vmul.f32 %v754, %v754
      %v1366 = vmul.f32 %v757, %v757
      %v1367 = vmul.f32 %v762, %v762
      %v1368 = vmul.f32 %v765, %v765
      %v1369 = vmul.f32 %v770, %v770
      %v1370 = vmul.f32 %v773, %v773
      %v1371 = vmul.f32 %v778, %v778
      %v1372 = vmul.f32 %v781, %v781
      %v1373 = vsel %vm355, %v1365, 0.0
      %v1374 = vsel %vm355, %v1366, 0.0
      %v1375 = vadd.f32 %v1373, %v1374
      %v1376 = vsel %vm355, %v1367, 0.0
      %v1377 = vadd.f32 %v1375, %v1376
      %v1378 = vsel %vm355, %v1368, 0.0
      %v1379 = vadd.f32 %v1377, %v1378
      %v1380 = vsel %vm355, %v1369, 0.0
      %v1381 = vadd.f32 %v1379, %v1380
      %v1382 = vsel %vm355, %v1370, 0.0
      %v1383 = vadd.f32 %v1381, %v1382
      %v1384 = vsel %vm355, %v1371, 0.0
      %v1385 = vadd.f32 %v1383, %v1384
      %v1386 = vsel %vm355, %v1372, 0.0
      %v1387 = vadd.f32 %v1385, %v1386
      %v1388 = vrot.slane %v1387, 4
      %v1389 = vadd.f32 %v1387, %v1388
      %v1390 = vrot.slane %v1389, 2
      %v1391 = vadd.f32 %v1389, %v1390
      %v1392 = vrot.slane %v1391, 1
      %v1393 = vadd.f32 %v1391, %v1392
      %v1394 = vadd.f32 %v1342, %v1393
      %v1395 = vsel %vm355, %v1017, 0.0
      %v1396 = vsel %vm355, %v1020, 0.0
      %v1397 = vadd.f32 %v1395, %v1396
      %v1398 = vsel %vm355, %v1025, 0.0
      %v1399 = vadd.f32 %v1397, %v1398
      %v1400 = vsel %vm355, %v1028, 0.0
      %v1401 = vadd.f32 %v1399, %v1400
      %v1402 = vsel %vm355, %v1033, 0.0
      %v1403 = vadd.f32 %v1401, %v1402
      %v1404 = vsel %vm355, %v1036, 0.0
      %v1405 = vadd.f32 %v1403, %v1404
      %v1406 = vsel %vm355, %v1041, 0.0
      %v1407 = vadd.f32 %v1405, %v1406
      %v1408 = vsel %vm355, %v1044, 0.0
      %v1409 = vadd.f32 %v1407, %v1408
      %v1410 = vrot.slane %v1409, 4
      %v1411 = vadd.f32 %v1409, %v1410
      %v1412 = vrot.slane %v1411, 2
      %v1413 = vadd.f32 %v1411, %v1412
      %v1414 = vrot.slane %v1413, 1
      %v1415 = vadd.f32 %v1413, %v1414
      %v1416 = vadd.f32 %v1364, %v1415
      %v1417 = vmul.f32 %v1017, %v1017
      %v1418 = vmul.f32 %v1020, %v1020
      %v1419 = vmul.f32 %v1025, %v1025
      %v1420 = vmul.f32 %v1028, %v1028
      %v1421 = vmul.f32 %v1033, %v1033
      %v1422 = vmul.f32 %v1036, %v1036
      %v1423 = vmul.f32 %v1041, %v1041
      %v1424 = vmul.f32 %v1044, %v1044
      %v1425 = vsel %vm355, %v1417, 0.0
      %v1426 = vsel %vm355, %v1418, 0.0
      %v1427 = vadd.f32 %v1425, %v1426
      %v1428 = vsel %vm355, %v1419, 0.0
      %v1429 = vadd.f32 %v1427, %v1428
      %v1430 = vsel %vm355, %v1420, 0.0
      %v1431 = vadd.f32 %v1429, %v1430
      %v1432 = vsel %vm355, %v1421, 0.0
      %v1433 = vadd.f32 %v1431, %v1432
      %v1434 = vsel %vm355, %v1422, 0.0
      %v1435 = vadd.f32 %v1433, %v1434
      %v1436 = vsel %vm355, %v1423, 0.0
      %v1437 = vadd.f32 %v1435, %v1436
      %v1438 = vsel %vm355, %v1424, 0.0
      %v1439 = vadd.f32 %v1437, %v1438
      %v1440 = vrot.slane %v1439, 4
      %v1441 = vadd.f32 %v1439, %v1440
      %v1442 = vrot.slane %v1441, 2
      %v1443 = vadd.f32 %v1441, %v1442
      %v1444 = vrot.slane %v1443, 1
      %v1445 = vadd.f32 %v1443, %v1444
      %v1446 = vadd.f32 %v1394, %v1445
      %v1447 = vsel %vm355, %v1263, 0.0
      %v1448 = vsel %vm355, %v1266, 0.0
      %v1449 = vadd.f32 %v1447, %v1448
      %v1450 = vsel %vm355, %v1271, 0.0
      %v1451 = vadd.f32 %v1449, %v1450
      %v1452 = vsel %vm355, %v1274, 0.0
      %v1453 = vadd.f32 %v1451, %v1452
      %v1454 = vsel %vm355, %v1279, 0.0
      %v1455 = vadd.f32 %v1453, %v1454
      %v1456 = vsel %vm355, %v1282, 0.0
      %v1457 = vadd.f32 %v1455, %v1456
      %v1458 = vsel %vm355, %v1287, 0.0
      %v1459 = vadd.f32 %v1457, %v1458
      %v1460 = vsel %vm355, %v1290, 0.0
      %v1461 = vadd.f32 %v1459, %v1460
      %v1462 = vrot.slane %v1461, 4
      %v1463 = vadd.f32 %v1461, %v1462
      %v1464 = vrot.slane %v1463, 2
      %v1465 = vadd.f32 %v1463, %v1464
      %v1466 = vrot.slane %v1465, 1
      %v1467 = vadd.f32 %v1465, %v1466
      %v1468 = vadd.f32 %v1416, %v1467
      %v1469 = vmul.f32 %v1263, %v1263
      %v1470 = vmul.f32 %v1266, %v1266
      %v1471 = vmul.f32 %v1271, %v1271
      %v1472 = vmul.f32 %v1274, %v1274
      %v1473 = vmul.f32 %v1279, %v1279
      %v1474 = vmul.f32 %v1282, %v1282
      %v1475 = vmul.f32 %v1287, %v1287
      %v1476 = vmul.f32 %v1290, %v1290
      %v1477 = vsel %vm355, %v1469, 0.0
      %v1478 = vsel %vm355, %v1470, 0.0
      %v1479 = vadd.f32 %v1477, %v1478
      %v1480 = vsel %vm355, %v1471, 0.0
      %v1481 = vadd.f32 %v1479, %v1480
      %v1482 = vsel %vm355, %v1472, 0.0
      %v1483 = vadd.f32 %v1481, %v1482
      %v1484 = vsel %vm355, %v1473, 0.0
      %v1485 = vadd.f32 %v1483, %v1484
      %v1486 = vsel %vm355, %v1474, 0.0
      %v1487 = vadd.f32 %v1485, %v1486
      %v1488 = vsel %vm355, %v1475, 0.0
      %v1489 = vadd.f32 %v1487, %v1488
      %v1490 = vsel %vm355, %v1476, 0.0
      %v1491 = vadd.f32 %v1489, %v1490
      %v1492 = vrot.slane %v1491, 4
      %v1493 = vadd.f32 %v1491, %v1492
      %v1494 = vrot.slane %v1493, 2
      %v1495 = vadd.f32 %v1493, %v1494
      %v1496 = vrot.slane %v1495, 1
      %v1497 = vadd.f32 %v1495, %v1496
      %v1498 = vadd.f32 %v1446, %v1497
      %v1499 = vrcp.pop 256.0
      %v1500 = vmul.f32 %v1468, %v1499
      %v1501 = vmul.f32 %v1498, %v1499
      %v1502 = vmul.f32 %v1500, %v1500
      %v1503 = vsub.f32 %v1501, %v1502
      %v1504 = vmax.f32 %v1503, 0.0
      %v1505 = vadd.f32 %v1504, 1e-05
      %v1506 = vrsqrt.pop %v1505
      %v1507 = vld [vmem:[%s3] sm:$0x1]
      %v1508 = vmul.f32 %v1506, %v1507
      %v1509 = vld [vmem:[%s4] sm:$0x1]
      %v1510 = vmul.f32 %v1500, %v1508
      %v1511 = vsub.f32 %v1509, %v1510
      %v1512 = vlaneseq
      %v1513 = vshrl.u32 %v1512, 7
      %v1514 = vsub.s32 0, %v1513
      %v1515 = vrot.slane %v1508, %v1514
      %v1516 = vmul.f32 %v492, %v1515
      %v1517 = vmul.f32 %v495, %v1515
      %v1518 = vmul.f32 %v500, %v1515
      %v1519 = vmul.f32 %v503, %v1515
      %v1520 = vmul.f32 %v508, %v1515
      %v1521 = vmul.f32 %v511, %v1515
      %v1522 = vmul.f32 %v516, %v1515
      %v1523 = vmul.f32 %v519, %v1515
      %v1525 = vlaneseq
      %v1526 = vshrl.u32 %v1525, 7
      %v1527 = vsub.s32 0, %v1526
      %v1528 = vrot.slane %v1511, %v1527
      %v1530 = vadd.f32 %v1516, %v1528
      %v1531 = vadd.f32 %v1517, %v1528
      %v1532 = vadd.f32 %v1518, %v1528
      %v1533 = vadd.f32 %v1519, %v1528
      %v1534 = vadd.f32 %v1520, %v1528
      %v1535 = vadd.f32 %v1521, %v1528
      %v1536 = vadd.f32 %v1522, %v1528
      %v1537 = vadd.f32 %v1523, %v1528
      %vm1538 = vcmp.ge.f32.partialorder %v1530, 0.0
      %vm1539 = vcmp.ge.f32.partialorder %v1531, 0.0
      %vm1540 = vcmp.ge.f32.partialorder %v1532, 0.0
      %vm1541 = vcmp.ge.f32.partialorder %v1533, 0.0
      %vm1542 = vcmp.ge.f32.partialorder %v1534, 0.0
      %vm1543 = vcmp.ge.f32.partialorder %v1535, 0.0
      %vm1544 = vcmp.ge.f32.partialorder %v1536, 0.0
      %vm1545 = vcmp.ge.f32.partialorder %v1537, 0.0
      %v1546 = vmul.f32 %v1530, 0.1
      %v1547 = vmul.f32 %v1531, 0.1
      %v1548 = vmul.f32 %v1532, 0.1
      %v1549 = vmul.f32 %v1533, 0.1
      %v1550 = vmul.f32 %v1534, 0.1
      %v1551 = vmul.f32 %v1535, 0.1
      %v1552 = vmul.f32 %v1536, 0.1
      %v1553 = vmul.f32 %v1537, 0.1
      %v1554 = vsel %vm1538, %v1530, %v1546
      %v1555 = vsel %vm1539, %v1531, %v1547
      %v1556 = vsel %vm1540, %v1532, %v1548
      %v1557 = vsel %vm1541, %v1533, %v1549
      %v1558 = vsel %vm1542, %v1534, %v1550
      %v1559 = vsel %vm1543, %v1535, %v1551
      %v1560 = vsel %vm1544, %v1536, %v1552
      %v1561 = vsel %vm1545, %v1537, %v1553
      %v1562 = vpack.c.bf16 %v1555, %v1554
      %v1563 = vpack.c.bf16 %v1557, %v1556
      %v1564 = vpack.c.bf16 %v1559, %v1558
      %v1565 = vpack.c.bf16 %v1561, %v1560
      %v1570 = vunpack.c.l.b16 %v1562
      %v1571 = vunpack.c.h.b16 %v1562
      %v1572 = vunpack.c.l.b16 %v1563
      %v1573 = vunpack.c.h.b16 %v1563
      %v1574 = vunpack.c.l.b16 %v1564
      %v1575 = vunpack.c.h.b16 %v1564
      %v1576 = vunpack.c.l.b16 %v1565
      %v1577 = vunpack.c.h.b16 %v1565
      %v1578 = vpack.c.b16 %v1570, %v1570
      %v1579 = vpack.c.b16 %v1571, %v1571
      %v1580 = vpack.c.b16 %v1572, %v1572
      %v1581 = vpack.c.b16 %v1573, %v1573
      %v1582 = vpack.c.b16 %v1574, %v1574
      %v1583 = vpack.c.b16 %v1575, %v1575
      %v1584 = vpack.c.b16 %v1576, %v1576
      %v1585 = vpack.c.b16 %v1577, %v1577
      %vm1594 = vcmask 257024
      %1595 = vst.msk [vmem:[%s224] sm:$0xf] %vm1594, %v1578
      %1596 = vst.msk [vmem:[%s224 + $0x4] sm:$0xf] %vm1594, %v1579
      %1597 = vst.msk [vmem:[%s224 + $0x8] sm:$0xf] %vm1594, %v1580
      %1598 = vst.msk [vmem:[%s224 + $0xc] sm:$0xf] %vm1594, %v1581
      %1599 = vst.msk [vmem:[%s224 + $0x10] sm:$0xf] %vm1594, %v1582
      %1600 = vst.msk [vmem:[%s224 + $0x14] sm:$0xf] %vm1594, %v1583
      %1601 = vst.msk [vmem:[%s224 + $0x18] sm:$0xf] %vm1594, %v1584
      %1602 = vst.msk [vmem:[%s224 + $0x1c] sm:$0xf] %vm1594, %v1585
      %v1603 = vmul.f32 %v754, %v1515
      %v1604 = vmul.f32 %v757, %v1515
      %v1605 = vmul.f32 %v762, %v1515
      %v1606 = vmul.f32 %v765, %v1515
      %v1607 = vmul.f32 %v770, %v1515
      %v1608 = vmul.f32 %v773, %v1515
      %v1609 = vmul.f32 %v778, %v1515
      %v1610 = vmul.f32 %v781, %v1515
      %v1611 = vadd.f32 %v1603, %v1528
      %v1612 = vadd.f32 %v1604, %v1528
      %v1613 = vadd.f32 %v1605, %v1528
      %v1614 = vadd.f32 %v1606, %v1528
      %v1615 = vadd.f32 %v1607, %v1528
      %v1616 = vadd.f32 %v1608, %v1528
      %v1617 = vadd.f32 %v1609, %v1528
      %v1618 = vadd.f32 %v1610, %v1528
      %vm1619 = vcmp.ge.f32.partialorder %v1611, 0.0
      %vm1620 = vcmp.ge.f32.partialorder %v1612, 0.0
      %vm1621 = vcmp.ge.f32.partialorder %v1613, 0.0
      %vm1622 = vcmp.ge.f32.partialorder %v1614, 0.0
      %vm1623 = vcmp.ge.f32.partialorder %v1615, 0.0
      %vm1624 = vcmp.ge.f32.partialorder %v1616, 0.0
      %vm1625 = vcmp.ge.f32.partialorder %v1617, 0.0
      %vm1626 = vcmp.ge.f32.partialorder %v1618, 0.0
      %v1627 = vmul.f32 %v1611, 0.1
      %v1628 = vmul.f32 %v1612, 0.1
      %v1629 = vmul.f32 %v1613, 0.1
      %v1630 = vmul.f32 %v1614, 0.1
      %v1631 = vmul.f32 %v1615, 0.1
      %v1632 = vmul.f32 %v1616, 0.1
      %v1633 = vmul.f32 %v1617, 0.1
      %v1634 = vmul.f32 %v1618, 0.1
      %v1635 = vsel %vm1619, %v1611, %v1627
      %v1636 = vsel %vm1620, %v1612, %v1628
      %v1637 = vsel %vm1621, %v1613, %v1629
      %v1638 = vsel %vm1622, %v1614, %v1630
      %v1639 = vsel %vm1623, %v1615, %v1631
      %v1640 = vsel %vm1624, %v1616, %v1632
      %v1641 = vsel %vm1625, %v1617, %v1633
      %v1642 = vsel %vm1626, %v1618, %v1634
      %v1643 = vpack.c.bf16 %v1636, %v1635
      %v1644 = vpack.c.bf16 %v1638, %v1637
      %v1645 = vpack.c.bf16 %v1640, %v1639
      %v1646 = vpack.c.bf16 %v1642, %v1641
      %v1651 = vunpack.c.l.b16 %v1643
      %v1652 = vunpack.c.h.b16 %v1643
      %v1653 = vunpack.c.l.b16 %v1644
      %v1654 = vunpack.c.h.b16 %v1644
      %v1655 = vunpack.c.l.b16 %v1645
      %v1656 = vunpack.c.h.b16 %v1645
      %v1657 = vunpack.c.l.b16 %v1646
      %v1658 = vunpack.c.h.b16 %v1646
      %v1659 = vpack.c.b16 %v1651, %v1651
      %v1660 = vpack.c.b16 %v1652, %v1652
      %v1661 = vpack.c.b16 %v1653, %v1653
      %v1662 = vpack.c.b16 %v1654, %v1654
      %v1663 = vpack.c.b16 %v1655, %v1655
      %v1664 = vpack.c.b16 %v1656, %v1656
      %v1665 = vpack.c.b16 %v1657, %v1657
      %v1666 = vpack.c.b16 %v1658, %v1658
      %s1675 = scalar_lea.vmem %s224, 32
      %1676 = vst.msk [vmem:[%s1675] sm:$0xf] %vm1594, %v1659
      %1677 = vst.msk [vmem:[%s1675 + $0x4] sm:$0xf] %vm1594, %v1660
      %1678 = vst.msk [vmem:[%s1675 + $0x8] sm:$0xf] %vm1594, %v1661
      %1679 = vst.msk [vmem:[%s1675 + $0xc] sm:$0xf] %vm1594, %v1662
      %1680 = vst.msk [vmem:[%s1675 + $0x10] sm:$0xf] %vm1594, %v1663
      %1681 = vst.msk [vmem:[%s1675 + $0x14] sm:$0xf] %vm1594, %v1664
      %1682 = vst.msk [vmem:[%s1675 + $0x18] sm:$0xf] %vm1594, %v1665
      %1683 = vst.msk [vmem:[%s1675 + $0x1c] sm:$0xf] %vm1594, %v1666
      %v1684 = vmul.f32 %v1017, %v1515
      %v1685 = vmul.f32 %v1020, %v1515
      %v1686 = vmul.f32 %v1025, %v1515
      %v1687 = vmul.f32 %v1028, %v1515
      %v1688 = vmul.f32 %v1033, %v1515
      %v1689 = vmul.f32 %v1036, %v1515
      %v1690 = vmul.f32 %v1041, %v1515
      %v1691 = vmul.f32 %v1044, %v1515
      %v1692 = vadd.f32 %v1684, %v1528
      %v1693 = vadd.f32 %v1685, %v1528
      %v1694 = vadd.f32 %v1686, %v1528
      %v1695 = vadd.f32 %v1687, %v1528
      %v1696 = vadd.f32 %v1688, %v1528
      %v1697 = vadd.f32 %v1689, %v1528
      %v1698 = vadd.f32 %v1690, %v1528
      %v1699 = vadd.f32 %v1691, %v1528
      %vm1700 = vcmp.ge.f32.partialorder %v1692, 0.0
      %vm1701 = vcmp.ge.f32.partialorder %v1693, 0.0
      %vm1702 = vcmp.ge.f32.partialorder %v1694, 0.0
      %vm1703 = vcmp.ge.f32.partialorder %v1695, 0.0
      %vm1704 = vcmp.ge.f32.partialorder %v1696, 0.0
      %vm1705 = vcmp.ge.f32.partialorder %v1697, 0.0
      %vm1706 = vcmp.ge.f32.partialorder %v1698, 0.0
      %vm1707 = vcmp.ge.f32.partialorder %v1699, 0.0
      %v1708 = vmul.f32 %v1692, 0.1
      %v1709 = vmul.f32 %v1693, 0.1
      %v1710 = vmul.f32 %v1694, 0.1
      %v1711 = vmul.f32 %v1695, 0.1
      %v1712 = vmul.f32 %v1696, 0.1
      %v1713 = vmul.f32 %v1697, 0.1
      %v1714 = vmul.f32 %v1698, 0.1
      %v1715 = vmul.f32 %v1699, 0.1
      %v1716 = vsel %vm1700, %v1692, %v1708
      %v1717 = vsel %vm1701, %v1693, %v1709
      %v1718 = vsel %vm1702, %v1694, %v1710
      %v1719 = vsel %vm1703, %v1695, %v1711
      %v1720 = vsel %vm1704, %v1696, %v1712
      %v1721 = vsel %vm1705, %v1697, %v1713
      %v1722 = vsel %vm1706, %v1698, %v1714
      %v1723 = vsel %vm1707, %v1699, %v1715
      %v1724 = vpack.c.bf16 %v1717, %v1716
      %v1725 = vpack.c.bf16 %v1719, %v1718
      %v1726 = vpack.c.bf16 %v1721, %v1720
      %v1727 = vpack.c.bf16 %v1723, %v1722
      %v1732 = vunpack.c.l.b16 %v1724
      %v1733 = vunpack.c.h.b16 %v1724
      %v1734 = vunpack.c.l.b16 %v1725
      %v1735 = vunpack.c.h.b16 %v1725
      %v1736 = vunpack.c.l.b16 %v1726
      %v1737 = vunpack.c.h.b16 %v1726
      %v1738 = vunpack.c.l.b16 %v1727
      %v1739 = vunpack.c.h.b16 %v1727
      %v1740 = vpack.c.b16 %v1732, %v1732
      %v1741 = vpack.c.b16 %v1733, %v1733
      %v1742 = vpack.c.b16 %v1734, %v1734
      %v1743 = vpack.c.b16 %v1735, %v1735
      %v1744 = vpack.c.b16 %v1736, %v1736
      %v1745 = vpack.c.b16 %v1737, %v1737
      %v1746 = vpack.c.b16 %v1738, %v1738
      %v1747 = vpack.c.b16 %v1739, %v1739
      %s1756 = scalar_lea.vmem %s224, 64
      %1757 = vst.msk [vmem:[%s1756] sm:$0xf] %vm1594, %v1740
      %1758 = vst.msk [vmem:[%s1756 + $0x4] sm:$0xf] %vm1594, %v1741
      %1759 = vst.msk [vmem:[%s1756 + $0x8] sm:$0xf] %vm1594, %v1742
      %1760 = vst.msk [vmem:[%s1756 + $0xc] sm:$0xf] %vm1594, %v1743
      %1761 = vst.msk [vmem:[%s1756 + $0x10] sm:$0xf] %vm1594, %v1744
      %1762 = vst.msk [vmem:[%s1756 + $0x14] sm:$0xf] %vm1594, %v1745
      %1763 = vst.msk [vmem:[%s1756 + $0x18] sm:$0xf] %vm1594, %v1746
      %1764 = vst.msk [vmem:[%s1756 + $0x1c] sm:$0xf] %vm1594, %v1747
      %v1765 = vmul.f32 %v1263, %v1515
      %v1766 = vmul.f32 %v1266, %v1515
      %v1767 = vmul.f32 %v1271, %v1515
      %v1768 = vmul.f32 %v1274, %v1515
      %v1769 = vmul.f32 %v1279, %v1515
      %v1770 = vmul.f32 %v1282, %v1515
      %v1771 = vmul.f32 %v1287, %v1515
      %v1772 = vmul.f32 %v1290, %v1515
      %v1773 = vadd.f32 %v1765, %v1528
      %v1774 = vadd.f32 %v1766, %v1528
      %v1775 = vadd.f32 %v1767, %v1528
      %v1776 = vadd.f32 %v1768, %v1528
      %v1777 = vadd.f32 %v1769, %v1528
      %v1778 = vadd.f32 %v1770, %v1528
      %v1779 = vadd.f32 %v1771, %v1528
      %v1780 = vadd.f32 %v1772, %v1528
      %vm1781 = vcmp.ge.f32.partialorder %v1773, 0.0
      %vm1782 = vcmp.ge.f32.partialorder %v1774, 0.0
      %vm1783 = vcmp.ge.f32.partialorder %v1775, 0.0
      %vm1784 = vcmp.ge.f32.partialorder %v1776, 0.0
      %vm1785 = vcmp.ge.f32.partialorder %v1777, 0.0
      %vm1786 = vcmp.ge.f32.partialorder %v1778, 0.0
      %vm1787 = vcmp.ge.f32.partialorder %v1779, 0.0
      %vm1788 = vcmp.ge.f32.partialorder %v1780, 0.0
      %v1789 = vmul.f32 %v1773, 0.1
      %v1790 = vmul.f32 %v1774, 0.1
      %v1791 = vmul.f32 %v1775, 0.1
      %v1792 = vmul.f32 %v1776, 0.1
      %v1793 = vmul.f32 %v1777, 0.1
      %v1794 = vmul.f32 %v1778, 0.1
      %v1795 = vmul.f32 %v1779, 0.1
      %v1796 = vmul.f32 %v1780, 0.1
      %v1797 = vsel %vm1781, %v1773, %v1789
      %v1798 = vsel %vm1782, %v1774, %v1790
      %v1799 = vsel %vm1783, %v1775, %v1791
      %v1800 = vsel %vm1784, %v1776, %v1792
      %v1801 = vsel %vm1785, %v1777, %v1793
      %v1802 = vsel %vm1786, %v1778, %v1794
      %v1803 = vsel %vm1787, %v1779, %v1795
      %v1804 = vsel %vm1788, %v1780, %v1796
      %v1805 = vpack.c.bf16 %v1798, %v1797
      %v1806 = vpack.c.bf16 %v1800, %v1799
      %v1807 = vpack.c.bf16 %v1802, %v1801
      %v1808 = vpack.c.bf16 %v1804, %v1803
      %v1813 = vunpack.c.l.b16 %v1805
      %v1814 = vunpack.c.h.b16 %v1805
      %v1815 = vunpack.c.l.b16 %v1806
      %v1816 = vunpack.c.h.b16 %v1806
      %v1817 = vunpack.c.l.b16 %v1807
      %v1818 = vunpack.c.h.b16 %v1807
      %v1819 = vunpack.c.l.b16 %v1808
      %v1820 = vunpack.c.h.b16 %v1808
      %v1821 = vpack.c.b16 %v1813, %v1813
      %v1822 = vpack.c.b16 %v1814, %v1814
      %v1823 = vpack.c.b16 %v1815, %v1815
      %v1824 = vpack.c.b16 %v1816, %v1816
      %v1825 = vpack.c.b16 %v1817, %v1817
      %v1826 = vpack.c.b16 %v1818, %v1818
      %v1827 = vpack.c.b16 %v1819, %v1819
      %v1828 = vpack.c.b16 %v1820, %v1820
      %s1837 = scalar_lea.vmem %s224, 96
      %1838 = vst.msk [vmem:[%s1837] sm:$0xf] %vm1594, %v1821
      %1839 = vst.msk [vmem:[%s1837 + $0x4] sm:$0xf] %vm1594, %v1822
      %1840 = vst.msk [vmem:[%s1837 + $0x8] sm:$0xf] %vm1594, %v1823
      %1841 = vst.msk [vmem:[%s1837 + $0xc] sm:$0xf] %vm1594, %v1824
      %1842 = vst.msk [vmem:[%s1837 + $0x10] sm:$0xf] %vm1594, %v1825
      %1843 = vst.msk [vmem:[%s1837 + $0x14] sm:$0xf] %vm1594, %v1826
      %1844 = vst.msk [vmem:[%s1837 + $0x18] sm:$0xf] %vm1594, %v1827
      %1845 = vst.msk [vmem:[%s1837 + $0x1c] sm:$0xf] %vm1594, %v1828
      %p1846 = scmp.lt.s32.totalorder %s16, 1
      %s1847 = scalar_select %p1846, %s16, 1
      %s1848 = smul.addr %s1847, 32
      %s1849 = smul.addr %s1848, 4
      %s1850 = scalar_lea.vmem %s5, %s1849
      // Predicated region
      $region41: #{up_forward.3} parent=39 // pred_check
        %p1851 = pneg %p144
      $region42: #{up_forward.3} parent=39 // pred_check_branch
        %1853 = sbr.rel (%p1851) target = $region44
      $region43: #{up_forward.3} parent=39 // pred_region
        _
      $region44: #{up_forward.3} parent=39 // pred_fallthru
        _
    $region40: #{up_forward.3} parent=5 // pred_fallthru
      _
    %p1854 = scmp.le.s32.totalorder 2, %s11
    // Predicated region
    $region45: #{up_forward.3} parent=5 // pred_check
      %p1855 = pneg %p1854
    $region46: #{up_forward.3} parent=5 // pred_check_branch
      %1857 = sbr.rel (%p1855) target = $region48
    $region47: #{up_forward.3} parent=5 // pred_region
      %s1858 = ssub.s32 %s11, 2
      // Predicated region
      $region49: #{up_forward.3} parent=47 // pred_check
        %p1859 = pneg %p150
      $region50: #{up_forward.3} parent=47 // pred_check_branch
        %1861 = sbr.rel (%p1859) target = $region52
      $region51: #{up_forward.3} parent=47 // pred_region
        %p1862 = scmp.lt.s32.totalorder %s17, 1
        %s1863 = scalar_select %p1862, %s17, 1
        %s1864 = smul.addr %s1863, 32
        %s1865 = smul.addr %s1864, 4
        %s1866 = scalar_lea.vmem %s5, %s1865
      $region52: #{up_forward.3} parent=47 // pred_fallthru
        _
    $region48: #{up_forward.3} parent=5 // pred_fallthru
      _
  $region6: #{up_forward.3} parent=0 // loop_footer
    %s15 = sadd.s32 1, %s11
  $region7: #{up_forward.3} parent=0 // loop_footer_branch
    %10 = sbr.rel target = $region3
  $region8: #{up_forward.3} parent=0 // loop_exit
    _

</llo_original>
